<compile_context>
chip_gen: v7x
topology: tpu7x:2x2x1
jax: 0.10.0
libtpu: 0.0.40
codegen_flags: <defaults>
</compile_context>

<pallas_src>
import functools

import jax
import jax.numpy as jnp
from jax import lax
from jax.experimental import pallas as pl
from jax.experimental.pallas import tpu as pltpu

F_IN = 28 * 28          # 784


def _round_up(x, n):
    return (x + n - 1) // n * n


# ----------------------------------------------------------------------------
# Fused kernel: whole network for one batch tile
# ----------------------------------------------------------------------------
def _fused_autoencoder_kernel(x_ref, w_in_ref, b_in_ref, w_hid_ref, b_hid_ref,
                              w_out_ref, b_out_ref, gamma_ref, beta_ref, o_ref,
                              *, n_hidden, compute_dtype):
    # Hoist the shared LayerNorm params out of the per-layer loop (broadcasts
    # are not CSE'd by JAX).
    gamma = gamma_ref[...]                     # (1, m)
    beta = beta_ref[...]                       # (1, m)
    m = gamma.shape[-1]
    inv_m = 1.0 / m

    def elu_ln(h):
        # ELU (alpha = 1.0).
        # TODO(synk): switch to expm1 once Mosaic lowering support is confirmed
        # (precision nicety for h near 0-; matches the reference up to f32
        # rounding as written).
        h = jnp.where(h > 0.0, h, jnp.exp(h) - 1.0)
        # Two-pass LayerNorm statistics (matches PyTorch; avoids the
        # E[x^2] - E[x]^2 cancellation).  Still only two cross-lane reductions.
        mean = jnp.sum(h, axis=-1, keepdims=True) * inv_m
        d = h - mean
        var = jnp.sum(d * d, axis=-1, keepdims=True) * inv_m
        # Zero-padded batch rows give var = 0; the +1e-5 eps keeps them finite
        # (they are sliced away in the wrapper) -- do not remove the epsilon.
        return d * lax.rsqrt(var + 1e-5) * gamma + beta

    # Input layer: (tile_b, 784) @ (784, m), f32 accumulation on the MXU.
    x = x_ref[...].astype(compute_dtype)
    h = jnp.dot(x, w_in_ref[...], preferred_element_type=jnp.float32)
    h = elu_ln(h + b_in_ref[...])

    # Hidden layers of F followed by hidden layers of G (all (m, m), stacked).
    def hidden_layer(h, l):
        g = jnp.dot(h.astype(compute_dtype), w_hid_ref[l],
                    preferred_element_type=jnp.float32)
        return elu_ln(g + b_hid_ref[l])

    if n_hidden <= 8:
        # Small static trip count: unrolled Python loop (LLO scheduler visibility).
        for l in range(n_hidden):
            h = hidden_layer(h, l)
    else:
        # Large k: bounded live ranges, avoid spill-bound code bloat.
        h = lax.fori_loop(0, n_hidden, lambda l, hh: hidden_layer(hh, l), h)

    # Output layer: (tile_b, m) @ (m, 784).  784-wide store = 6 full vregs +
    # one masked partial per row; cheaper than an extra pad/slice HBM pass.
    o_ref[...] = (jnp.dot(h.astype(compute_dtype), w_out_ref[...],
                          preferred_element_type=jnp.float32)
                  + b_out_ref[...]).astype(o_ref.dtype)


# ----------------------------------------------------------------------------
# Parameter construction (deterministic, PyTorch-like uniform init)
# ----------------------------------------------------------------------------
def init_params(key, k, m, in_features=F_IN):
    def lin(key, fan_in, fan_out):
        k1, k2 = jax.random.split(key)
        bound = 1.0 / jnp.sqrt(jnp.float32(fan_in))
        # weight stored pre-transposed: (in, out)
        wt = jax.random.uniform(k1, (fan_in, fan_out), jnp.float32, -bound, bound)
        b = jax.random.uniform(k2, (1, fan_out), jnp.float32, -bound, bound)
        return wt, b

    keys = jax.random.split(key, 2 * (k - 1) + 2)
    params = {}
    params["inF"] = lin(keys[0], in_features, m)
    params["linF"] = [lin(keys[1 + i], m, m) for i in range(k - 1)]
    params["linG"] = [lin(keys[k + i], m, m) for i in range(k - 1)]
    params["outG"] = lin(keys[2 * k - 1], m, in_features)
    # shared nn.LayerNorm(m): gamma=1, beta=0
    params["ln_gamma"] = jnp.ones((1, m), jnp.float32)
    params["ln_beta"] = jnp.zeros((1, m), jnp.float32)
    return params


def pack_params(params, compute_dtype=jnp.bfloat16):
    """Stack / cast the PyTorch-layout params into the fused-kernel layout.

    * All (m, m) hidden layers (linF then linG) stacked into one (L, m, m) array.
    * Matmul-operand weights stored in `compute_dtype` (bf16 by default: native
      MXU dtype on v5e and the peak path on v6e/v7x); biases / LN params stay
      f32 (f32 accumulation + f32 VPU math).
    * No feature-dim padding: blocks use the full 784-wide dims directly.
    """
    hidden = list(params["linF"]) + list(params["linG"])
    if not hidden:
        # TODO(synk): k == 1 (no hidden blocks) is not wired through the fused kernel.
        raise NotImplementedError("pack_params requires k >= 2")

    w_in, b_in = params["inF"]                                   # (784, m), (1, m)
    w_hid = jnp.stack([w for w, _ in hidden])                    # (L, m, m)
    b_hid = jnp.stack([b for _, b in hidden])                    # (L, 1, m)
    w_out, b_out = params["outG"]                                # (m, 784), (1, 784)

    return dict(
        w_in=w_in.astype(compute_dtype), b_in=b_in,
        w_hid=w_hid.astype(compute_dtype), b_hid=b_hid,
        w_out=w_out.astype(compute_dtype), b_out=b_out,
        gamma=params["ln_gamma"], beta=params["ln_beta"],
    )


# ----------------------------------------------------------------------------
# Forward pass: one fused pallas_call, batch-tiled grid
# ----------------------------------------------------------------------------
def _whole(arr, weight_buffers):
    """Whole-array VMEM-resident block, constant index_map (loaded once).

    With weight_buffers == 1 the resident weights are single-buffered
    (pl.Buffered(1)); constant-index blocks never refetch, so the default
    2-deep buffering only doubles their VMEM footprint (matters on v7x).
    """
    nd = arr.ndim
    if weight_buffers == 1:
        return pl.BlockSpec(arr.shape, lambda i: (0,) * nd,
                            pipeline_mode=pl.Buffered(1))
    return pl.BlockSpec(arr.shape, lambda i: (0,) * nd)


def _choose_tile_b(B, tile_b):
    """Multiple of 8, amortizes per-grid-step overhead, and guarantees >= 2
    grid tiles whenever the batch allows it (v7x megacore sharding)."""
    tile_b = _round_up(max(tile_b, 8), 8)
    half = _round_up(-(-B // 2), 8)          # ceil(B/2) rounded to sublane
    return max(8, min(tile_b, half))


@functools.partial(jax.jit, static_argnames=("tile_b", "weight_buffers"))
def _forward(packed, x_nchw, *, tile_b, weight_buffers):
    B = x_nchw.shape[0]
    w_in, b_in = packed["w_in"], packed["b_in"]
    w_hid, b_hid = packed["w_hid"], packed["b_hid"]
    w_out, b_out = packed["w_out"], packed["b_out"]
    gamma, beta = packed["gamma"], packed["beta"]
    m = gamma.shape[-1]
    n_hidden = w_hid.shape[0]
    compute_dtype = w_in.dtype

    # nn.Flatten on NCHW; stream the activations in the matmul dtype (bf16
    # halves the dominant x-tile HBM traffic; LN/ELU math stays f32 in-kernel).
    x = x_nchw.reshape(B, -1).astype(compute_dtype)
    assert x.shape[1] == F_IN

    tile_b = _choose_tile_b(B, tile_b)
    b_pad = _round_up(B, tile_b)
    if b_pad != B:
        # Batch-only zero pad (no feature-dim pad / slice passes anymore).
        x = jnp.pad(x, ((0, b_pad - B), (0, 0)))
    n_tiles = b_pad // tile_b

    kernel = functools.partial(
        _fused_autoencoder_kernel,
        n_hidden=n_hidden,
        compute_dtype=compute_dtype,
    )

    weights = (w_in, b_in, w_hid, b_hid, w_out, b_out, gamma, beta)
    weight_bytes = sum(a.size * a.dtype.itemsize for a in weights)
    io_tile_bytes = tile_b * F_IN * (x.dtype.itemsize + 4)   # one in + one out tile
    # Explicit VMEM budget: resident weights (x weight_buffers) + double-buffered
    # I/O tiles, 2x headroom for in-kernel activation temporaries, floor 32 MiB,
    # capped at v7x's 64 MiB per-TC physical VMEM.
    vmem_limit = int(min(max(2 * (weight_buffers * weight_bytes
                                  + 2 * io_tile_bytes) + (8 << 20),
                             32 << 20),
                         64 << 20))

    flops = 2 * b_pad * (F_IN * m + n_hidden * m * m + m * F_IN)
    transcendentals = b_pad * m * (n_hidden + 1)          # exp/rsqrt per LN block
    bytes_accessed = (x.size * x.dtype.itemsize            # input stream
                      + b_pad * F_IN * 4                   # output stream
                      + weight_bytes)                      # weights loaded once

    out = pl.pallas_call(
        kernel,
        out_shape=jax.ShapeDtypeStruct((b_pad, F_IN), jnp.float32),
        grid=(n_tiles,),
        in_specs=[pl.BlockSpec((tile_b, F_IN), lambda i: (i, 0))]      # x tile
                 + [_whole(a, weight_buffers) for a in weights],
        out_specs=pl.BlockSpec((tile_b, F_IN), lambda i: (i, 0)),
        compiler_params=pltpu.CompilerParams(
            # Batch tiles are independent -> megacore sharding on v7x.
            dimension_semantics=("parallel",),
            vmem_limit_bytes=vmem_limit),
        cost_estimate=pl.CostEstimate(
            flops=flops, transcendentals=transcendentals,
            bytes_accessed=bytes_accessed),
    )(x, *weights)

    return out[:B] if b_pad != B else out


def auto_encoder_forward(packed, x_nchw, *, tile_b=512):
    """Fused autoencoder forward.

    Tries single-buffered resident weights (pl.Buffered(1)) first; falls back
    to default double-buffered BlockSpecs if this jax version rejects the
    pipeline_mode hint, so the script always runs.
    """
    try:
        return _forward(packed, x_nchw, tile_b=tile_b, weight_buffers=1)
    except Exception:
        return _forward(packed, x_nchw, tile_b=tile_b, weight_buffers=2)


# ----------------------------------------------------------------------------
# Pure-JAX reference (PyTorch semantics) for sanity checking
# ----------------------------------------------------------------------------
def _ref_forward(params, x_nchw):
    B = x_nchw.shape[0]
    h = x_nchw.reshape(B, -1).astype(jnp.float32)
    gamma, beta = params["ln_gamma"], params["ln_beta"]

    def block(h, wt, b):
        h = h @ wt + b
        h = jnp.where(h > 0, h, jnp.exp(h) - 1.0)
        mu = h.mean(-1, keepdims=True)
        var = ((h - mu) ** 2).mean(-1, keepdims=True)
        return (h - mu) / jnp.sqrt(var + 1e-5) * gamma + beta

    wt, b = params["inF"]
    h = block(h, wt, b)
    for wt, b in params["linF"]:
        h = block(h, wt, b)
    for wt, b in params["linG"]:
        h = block(h, wt, b)
    wt, b = params["outG"]
    return h @ wt + b


if __name__ == "__main__":
    k, m = 3, 128          # autoEncoder(k=3, m=128)
    B = 16                 # small batch
    key = jax.random.PRNGKey(0)
    pkey, xkey = jax.random.split(key)

    params = init_params(pkey, k, m)
    x = jax.random.normal(xkey, (B, 1, 28, 28), jnp.float32)   # NCHW input
    ref = _ref_forward(params, x)

    # --- f32 matmul path: tight correctness check (tile_b=8 -> grid=(2,)) ---
    packed_f32 = pack_params(params, jnp.float32)
    out = jax.block_until_ready(auto_encoder_forward(packed_f32, x, tile_b=8))
    assert out.shape == (B, F_IN), out.shape
    assert jnp.allclose(out, ref, atol=1e-4, rtol=1e-4), float(
        jnp.max(jnp.abs(out - ref)))

    # --- bf16 weights + bf16 activation streaming (default), f32 accum ------
    packed_bf16 = pack_params(params, jnp.bfloat16)
    out_bf16 = jax.block_until_ready(auto_encoder_forward(packed_bf16, x))
    assert out_bf16.shape == (B, F_IN), out_bf16.shape
    assert jnp.allclose(out_bf16, ref, atol=1e-1, rtol=1e-1), float(
        jnp.max(jnp.abs(out_bf16 - ref)))

    print("KERNEL_OK")
</pallas_src>

<mosaic_0001>
module attributes {stable_mosaic.version = 11 : i64} {
  func.func @_fused_autoencoder_kernel(%arg0: i32, %arg1: memref<8x784xf32, #tpu.memory_space<vmem>>, %arg2: memref<784x128xf32, #tpu.memory_space<vmem>>, %arg3: memref<1x128xf32, #tpu.memory_space<vmem>>, %arg4: memref<4x128x128xf32, #tpu.memory_space<vmem>>, %arg5: memref<4x1x128xf32, #tpu.memory_space<vmem>>, %arg6: memref<128x784xf32, #tpu.memory_space<vmem>>, %arg7: memref<1x784xf32, #tpu.memory_space<vmem>>, %arg8: memref<1x128xf32, #tpu.memory_space<vmem>>, %arg9: memref<1x128xf32, #tpu.memory_space<vmem>>, %arg10: memref<8x784xf32, #tpu.memory_space<vmem>>) attributes {dimension_semantics = [#tpu.dimension_semantics<parallel>], iteration_bounds = array<i64: 2>, scalar_prefetch = 0 : i64, scratch_operands = 0 : i64, tpu.core_type = #tpu.core_type<tc>, window_params = [{transform_indices = @transform_0, window_bounds = array<i64: 8, 784>}, {pipeline_mode = #tpu.pipeline_mode<synchronous>, transform_indices = @transform_1, window_bounds = array<i64: 784, 128>}, {pipeline_mode = #tpu.pipeline_mode<synchronous>, transform_indices = @transform_2, window_bounds = array<i64: 1, 128>}, {pipeline_mode = #tpu.pipeline_mode<synchronous>, transform_indices = @transform_3, window_bounds = array<i64: 4, 128, 128>}, {pipeline_mode = #tpu.pipeline_mode<synchronous>, transform_indices = @transform_4, window_bounds = array<i64: 4, 1, 128>}, {pipeline_mode = #tpu.pipeline_mode<synchronous>, transform_indices = @transform_5, window_bounds = array<i64: 128, 784>}, {pipeline_mode = #tpu.pipeline_mode<synchronous>, transform_indices = @transform_6, window_bounds = array<i64: 1, 784>}, {pipeline_mode = #tpu.pipeline_mode<synchronous>, transform_indices = @transform_7, window_bounds = array<i64: 1, 128>}, {pipeline_mode = #tpu.pipeline_mode<synchronous>, transform_indices = @transform_8, window_bounds = array<i64: 1, 128>}, {transform_indices = @transform_9, window_bounds = array<i64: 8, 784>}]} {
    %c0 = arith.constant 0 : index
    %c0_0 = arith.constant 0 : index
    %0 = vector.load %arg8[%c0, %c0_0] : memref<1x128xf32, #tpu.memory_space<vmem>>, vector<1x128xf32>
    %c0_1 = arith.constant 0 : index
    %c0_2 = arith.constant 0 : index
    %1 = vector.load %arg9[%c0_1, %c0_2] : memref<1x128xf32, #tpu.memory_space<vmem>>, vector<1x128xf32>
    %c0_3 = arith.constant 0 : index
    %c0_4 = arith.constant 0 : index
    %2 = vector.load %arg1[%c0_3, %c0_4] : memref<8x784xf32, #tpu.memory_space<vmem>>, vector<8x784xf32>
    %c0_5 = arith.constant 0 : index
    %c0_6 = arith.constant 0 : index
    %3 = vector.load %arg2[%c0_5, %c0_6] : memref<784x128xf32, #tpu.memory_space<vmem>>, vector<784x128xf32>
    %cst = arith.constant dense<0.000000e+00> : vector<8x128xf32>
    %4 = tpu.matmul %2, %3, %cst {dimension_numbers = #tpu.dot_dimension_numbers<[1], [0], [0], [1], [0, 0, 1, 1], [], []>} : vector<8x784xf32>, vector<784x128xf32>, vector<8x128xf32> -> vector<8x128xf32>
    %c0_7 = arith.constant 0 : index
    %c0_8 = arith.constant 0 : index
    %5 = vector.load %arg3[%c0_7, %c0_8] : memref<1x128xf32, #tpu.memory_space<vmem>>, vector<1x128xf32>
    %6 = vector.broadcast %5 : vector<1x128xf32> to vector<8x128xf32>
    %7 = arith.addf %4, %6 : vector<8x128xf32>
    %cst_9 = arith.constant 0.000000e+00 : f32
    %8 = vector.broadcast %cst_9 : f32 to vector<8x128xf32>
    %9 = arith.cmpf ogt, %7, %8 : vector<8x128xf32>
    %10 = math.exp %7 : vector<8x128xf32>
    %cst_10 = arith.constant 1.000000e+00 : f32
    %11 = vector.broadcast %cst_10 : f32 to vector<8x128xf32>
    %12 = arith.subf %10, %11 : vector<8x128xf32>
    %13 = arith.select %9, %7, %12 : vector<8x128xi1>, vector<8x128xf32>
    %cst_11 = arith.constant dense<0.000000e+00> : vector<8xf32>
    %14 = vector.multi_reduction <add>, %13, %cst_11 [1] : vector<8x128xf32> to vector<8xf32>
    %15 = vector.shape_cast %14 : vector<8xf32> to vector<8x1xf32>
    %cst_12 = arith.constant 7.812500e-03 : f32
    %16 = vector.broadcast %cst_12 : f32 to vector<8x1xf32>
    %17 = arith.mulf %15, %16 : vector<8x1xf32>
    %18 = vector.broadcast %17 : vector<8x1xf32> to vector<8x128xf32>
    %19 = arith.subf %13, %18 : vector<8x128xf32>
    %20 = arith.mulf %19, %19 : vector<8x128xf32>
    %cst_13 = arith.constant dense<0.000000e+00> : vector<8xf32>
    %21 = vector.multi_reduction <add>, %20, %cst_13 [1] : vector<8x128xf32> to vector<8xf32>
    %22 = vector.shape_cast %21 : vector<8xf32> to vector<8x1xf32>
    %cst_14 = arith.constant 7.812500e-03 : f32
    %23 = vector.broadcast %cst_14 : f32 to vector<8x1xf32>
    %24 = arith.mulf %22, %23 : vector<8x1xf32>
    %cst_15 = arith.constant 9.99999974E-6 : f32
    %25 = vector.broadcast %cst_15 : f32 to vector<8x1xf32>
    %26 = arith.addf %24, %25 : vector<8x1xf32>
    %27 = math.rsqrt %26 : vector<8x1xf32>
    %28 = vector.broadcast %27 : vector<8x1xf32> to vector<8x128xf32>
    %29 = arith.mulf %19, %28 : vector<8x128xf32>
    %30 = vector.broadcast %0 : vector<1x128xf32> to vector<8x128xf32>
    %31 = arith.mulf %29, %30 : vector<8x128xf32>
    %32 = vector.broadcast %1 : vector<1x128xf32> to vector<8x128xf32>
    %33 = arith.addf %31, %32 : vector<8x128xf32>
    %c0_16 = arith.constant 0 : index
    %c0_17 = arith.constant 0 : index
    %c0_18 = arith.constant 0 : index
    %34 = vector.load %arg4[%c0_16, %c0_17, %c0_18] : memref<4x128x128xf32, #tpu.memory_space<vmem>>, vector<1x128x128xf32>
    %35 = vector.shape_cast %34 : vector<1x128x128xf32> to vector<128x128xf32>
    %cst_19 = arith.constant dense<0.000000e+00> : vector<8x128xf32>
    %36 = tpu.matmul %33, %35, %cst_19 {dimension_numbers = #tpu.dot_dimension_numbers<[1], [0], [0], [1], [0, 0, 1, 1], [], []>} : vector<8x128xf32>, vector<128x128xf32>, vector<8x128xf32> -> vector<8x128xf32>
    %c0_20 = arith.constant 0 : index
    %c0_21 = arith.constant 0 : index
    %c0_22 = arith.constant 0 : index
    %37 = vector.load %arg5[%c0_20, %c0_21, %c0_22] : memref<4x1x128xf32, #tpu.memory_space<vmem>>, vector<1x1x128xf32>
    %38 = vector.shape_cast %37 : vector<1x1x128xf32> to vector<1x128xf32>
    %39 = vector.broadcast %38 : vector<1x128xf32> to vector<8x128xf32>
    %40 = arith.addf %36, %39 : vector<8x128xf32>
    %cst_23 = arith.constant 0.000000e+00 : f32
    %41 = vector.broadcast %cst_23 : f32 to vector<8x128xf32>
    %42 = arith.cmpf ogt, %40, %41 : vector<8x128xf32>
    %43 = math.exp %40 : vector<8x128xf32>
    %cst_24 = arith.constant 1.000000e+00 : f32
    %44 = vector.broadcast %cst_24 : f32 to vector<8x128xf32>
    %45 = arith.subf %43, %44 : vector<8x128xf32>
    %46 = arith.select %42, %40, %45 : vector<8x128xi1>, vector<8x128xf32>
    %cst_25 = arith.constant dense<0.000000e+00> : vector<8xf32>
    %47 = vector.multi_reduction <add>, %46, %cst_25 [1] : vector<8x128xf32> to vector<8xf32>
    %48 = vector.shape_cast %47 : vector<8xf32> to vector<8x1xf32>
    %cst_26 = arith.constant 7.812500e-03 : f32
    %49 = vector.broadcast %cst_26 : f32 to vector<8x1xf32>
    %50 = arith.mulf %48, %49 : vector<8x1xf32>
    %51 = vector.broadcast %50 : vector<8x1xf32> to vector<8x128xf32>
    %52 = arith.subf %46, %51 : vector<8x128xf32>
    %53 = arith.mulf %52, %52 : vector<8x128xf32>
    %cst_27 = arith.constant dense<0.000000e+00> : vector<8xf32>
    %54 = vector.multi_reduction <add>, %53, %cst_27 [1] : vector<8x128xf32> to vector<8xf32>
    %55 = vector.shape_cast %54 : vector<8xf32> to vector<8x1xf32>
    %cst_28 = arith.constant 7.812500e-03 : f32
    %56 = vector.broadcast %cst_28 : f32 to vector<8x1xf32>
    %57 = arith.mulf %55, %56 : vector<8x1xf32>
    %cst_29 = arith.constant 9.99999974E-6 : f32
    %58 = vector.broadcast %cst_29 : f32 to vector<8x1xf32>
    %59 = arith.addf %57, %58 : vector<8x1xf32>
    %60 = math.rsqrt %59 : vector<8x1xf32>
    %61 = vector.broadcast %60 : vector<8x1xf32> to vector<8x128xf32>
    %62 = arith.mulf %52, %61 : vector<8x128xf32>
    %63 = vector.broadcast %0 : vector<1x128xf32> to vector<8x128xf32>
    %64 = arith.mulf %62, %63 : vector<8x128xf32>
    %65 = vector.broadcast %1 : vector<1x128xf32> to vector<8x128xf32>
    %66 = arith.addf %64, %65 : vector<8x128xf32>
    %c1 = arith.constant 1 : index
    %c0_30 = arith.constant 0 : index
    %c0_31 = arith.constant 0 : index
    %67 = vector.load %arg4[%c1, %c0_30, %c0_31] : memref<4x128x128xf32, #tpu.memory_space<vmem>>, vector<1x128x128xf32>
    %68 = vector.shape_cast %67 : vector<1x128x128xf32> to vector<128x128xf32>
    %cst_32 = arith.constant dense<0.000000e+00> : vector<8x128xf32>
    %69 = tpu.matmul %66, %68, %cst_32 {dimension_numbers = #tpu.dot_dimension_numbers<[1], [0], [0], [1], [0, 0, 1, 1], [], []>} : vector<8x128xf32>, vector<128x128xf32>, vector<8x128xf32> -> vector<8x128xf32>
    %c1_33 = arith.constant 1 : index
    %c0_34 = arith.constant 0 : index
    %c0_35 = arith.constant 0 : index
    %70 = vector.load %arg5[%c1_33, %c0_34, %c0_35] : memref<4x1x128xf32, #tpu.memory_space<vmem>>, vector<1x1x128xf32>
    %71 = vector.shape_cast %70 : vector<1x1x128xf32> to vector<1x128xf32>
    %72 = vector.broadcast %71 : vector<1x128xf32> to vector<8x128xf32>
    %73 = arith.addf %69, %72 : vector<8x128xf32>
    %cst_36 = arith.constant 0.000000e+00 : f32
    %74 = vector.broadcast %cst_36 : f32 to vector<8x128xf32>
    %75 = arith.cmpf ogt, %73, %74 : vector<8x128xf32>
    %76 = math.exp %73 : vector<8x128xf32>
    %cst_37 = arith.constant 1.000000e+00 : f32
    %77 = vector.broadcast %cst_37 : f32 to vector<8x128xf32>
    %78 = arith.subf %76, %77 : vector<8x128xf32>
    %79 = arith.select %75, %73, %78 : vector<8x128xi1>, vector<8x128xf32>
    %cst_38 = arith.constant dense<0.000000e+00> : vector<8xf32>
    %80 = vector.multi_reduction <add>, %79, %cst_38 [1] : vector<8x128xf32> to vector<8xf32>
    %81 = vector.shape_cast %80 : vector<8xf32> to vector<8x1xf32>
    %cst_39 = arith.constant 7.812500e-03 : f32
    %82 = vector.broadcast %cst_39 : f32 to vector<8x1xf32>
    %83 = arith.mulf %81, %82 : vector<8x1xf32>
    %84 = vector.broadcast %83 : vector<8x1xf32> to vector<8x128xf32>
    %85 = arith.subf %79, %84 : vector<8x128xf32>
    %86 = arith.mulf %85, %85 : vector<8x128xf32>
    %cst_40 = arith.constant dense<0.000000e+00> : vector<8xf32>
    %87 = vector.multi_reduction <add>, %86, %cst_40 [1] : vector<8x128xf32> to vector<8xf32>
    %88 = vector.shape_cast %87 : vector<8xf32> to vector<8x1xf32>
    %cst_41 = arith.constant 7.812500e-03 : f32
    %89 = vector.broadcast %cst_41 : f32 to vector<8x1xf32>
    %90 = arith.mulf %88, %89 : vector<8x1xf32>
    %cst_42 = arith.constant 9.99999974E-6 : f32
    %91 = vector.broadcast %cst_42 : f32 to vector<8x1xf32>
    %92 = arith.addf %90, %91 : vector<8x1xf32>
    %93 = math.rsqrt %92 : vector<8x1xf32>
    %94 = vector.broadcast %93 : vector<8x1xf32> to vector<8x128xf32>
    %95 = arith.mulf %85, %94 : vector<8x128xf32>
    %96 = vector.broadcast %0 : vector<1x128xf32> to vector<8x128xf32>
    %97 = arith.mulf %95, %96 : vector<8x128xf32>
    %98 = vector.broadcast %1 : vector<1x128xf32> to vector<8x128xf32>
    %99 = arith.addf %97, %98 : vector<8x128xf32>
    %c2 = arith.constant 2 : index
    %c0_43 = arith.constant 0 : index
    %c0_44 = arith.constant 0 : index
    %100 = vector.load %arg4[%c2, %c0_43, %c0_44] : memref<4x128x128xf32, #tpu.memory_space<vmem>>, vector<1x128x128xf32>
    %101 = vector.shape_cast %100 : vector<1x128x128xf32> to vector<128x128xf32>
    %cst_45 = arith.constant dense<0.000000e+00> : vector<8x128xf32>
    %102 = tpu.matmul %99, %101, %cst_45 {dimension_numbers = #tpu.dot_dimension_numbers<[1], [0], [0], [1], [0, 0, 1, 1], [], []>} : vector<8x128xf32>, vector<128x128xf32>, vector<8x128xf32> -> vector<8x128xf32>
    %c2_46 = arith.constant 2 : index
    %c0_47 = arith.constant 0 : index
    %c0_48 = arith.constant 0 : index
    %103 = vector.load %arg5[%c2_46, %c0_47, %c0_48] : memref<4x1x128xf32, #tpu.memory_space<vmem>>, vector<1x1x128xf32>
    %104 = vector.shape_cast %103 : vector<1x1x128xf32> to vector<1x128xf32>
    %105 = vector.broadcast %104 : vector<1x128xf32> to vector<8x128xf32>
    %106 = arith.addf %102, %105 : vector<8x128xf32>
    %cst_49 = arith.constant 0.000000e+00 : f32
    %107 = vector.broadcast %cst_49 : f32 to vector<8x128xf32>
    %108 = arith.cmpf ogt, %106, %107 : vector<8x128xf32>
    %109 = math.exp %106 : vector<8x128xf32>
    %cst_50 = arith.constant 1.000000e+00 : f32
    %110 = vector.broadcast %cst_50 : f32 to vector<8x128xf32>
    %111 = arith.subf %109, %110 : vector<8x128xf32>
    %112 = arith.select %108, %106, %111 : vector<8x128xi1>, vector<8x128xf32>
    %cst_51 = arith.constant dense<0.000000e+00> : vector<8xf32>
    %113 = vector.multi_reduction <add>, %112, %cst_51 [1] : vector<8x128xf32> to vector<8xf32>
    %114 = vector.shape_cast %113 : vector<8xf32> to vector<8x1xf32>
    %cst_52 = arith.constant 7.812500e-03 : f32
    %115 = vector.broadcast %cst_52 : f32 to vector<8x1xf32>
    %116 = arith.mulf %114, %115 : vector<8x1xf32>
    %117 = vector.broadcast %116 : vector<8x1xf32> to vector<8x128xf32>
    %118 = arith.subf %112, %117 : vector<8x128xf32>
    %119 = arith.mulf %118, %118 : vector<8x128xf32>
    %cst_53 = arith.constant dense<0.000000e+00> : vector<8xf32>
    %120 = vector.multi_reduction <add>, %119, %cst_53 [1] : vector<8x128xf32> to vector<8xf32>
    %121 = vector.shape_cast %120 : vector<8xf32> to vector<8x1xf32>
    %cst_54 = arith.constant 7.812500e-03 : f32
    %122 = vector.broadcast %cst_54 : f32 to vector<8x1xf32>
    %123 = arith.mulf %121, %122 : vector<8x1xf32>
    %cst_55 = arith.constant 9.99999974E-6 : f32
    %124 = vector.broadcast %cst_55 : f32 to vector<8x1xf32>
    %125 = arith.addf %123, %124 : vector<8x1xf32>
    %126 = math.rsqrt %125 : vector<8x1xf32>
    %127 = vector.broadcast %126 : vector<8x1xf32> to vector<8x128xf32>
    %128 = arith.mulf %118, %127 : vector<8x128xf32>
    %129 = vector.broadcast %0 : vector<1x128xf32> to vector<8x128xf32>
    %130 = arith.mulf %128, %129 : vector<8x128xf32>
    %131 = vector.broadcast %1 : vector<1x128xf32> to vector<8x128xf32>
    %132 = arith.addf %130, %131 : vector<8x128xf32>
    %c3 = arith.constant 3 : index
    %c0_56 = arith.constant 0 : index
    %c0_57 = arith.constant 0 : index
    %133 = vector.load %arg4[%c3, %c0_56, %c0_57] : memref<4x128x128xf32, #tpu.memory_space<vmem>>, vector<1x128x128xf32>
    %134 = vector.shape_cast %133 : vector<1x128x128xf32> to vector<128x128xf32>
    %cst_58 = arith.constant dense<0.000000e+00> : vector<8x128xf32>
    %135 = tpu.matmul %132, %134, %cst_58 {dimension_numbers = #tpu.dot_dimension_numbers<[1], [0], [0], [1], [0, 0, 1, 1], [], []>} : vector<8x128xf32>, vector<128x128xf32>, vector<8x128xf32> -> vector<8x128xf32>
    %c3_59 = arith.constant 3 : index
    %c0_60 = arith.constant 0 : index
    %c0_61 = arith.constant 0 : index
    %136 = vector.load %arg5[%c3_59, %c0_60, %c0_61] : memref<4x1x128xf32, #tpu.memory_space<vmem>>, vector<1x1x128xf32>
    %137 = vector.shape_cast %136 : vector<1x1x128xf32> to vector<1x128xf32>
    %138 = vector.broadcast %137 : vector<1x128xf32> to vector<8x128xf32>
    %139 = arith.addf %135, %138 : vector<8x128xf32>
    %cst_62 = arith.constant 0.000000e+00 : f32
    %140 = vector.broadcast %cst_62 : f32 to vector<8x128xf32>
    %141 = arith.cmpf ogt, %139, %140 : vector<8x128xf32>
    %142 = math.exp %139 : vector<8x128xf32>
    %cst_63 = arith.constant 1.000000e+00 : f32
    %143 = vector.broadcast %cst_63 : f32 to vector<8x128xf32>
    %144 = arith.subf %142, %143 : vector<8x128xf32>
    %145 = arith.select %141, %139, %144 : vector<8x128xi1>, vector<8x128xf32>
    %cst_64 = arith.constant dense<0.000000e+00> : vector<8xf32>
    %146 = vector.multi_reduction <add>, %145, %cst_64 [1] : vector<8x128xf32> to vector<8xf32>
    %147 = vector.shape_cast %146 : vector<8xf32> to vector<8x1xf32>
    %cst_65 = arith.constant 7.812500e-03 : f32
    %148 = vector.broadcast %cst_65 : f32 to vector<8x1xf32>
    %149 = arith.mulf %147, %148 : vector<8x1xf32>
    %150 = vector.broadcast %149 : vector<8x1xf32> to vector<8x128xf32>
    %151 = arith.subf %145, %150 : vector<8x128xf32>
    %152 = arith.mulf %151, %151 : vector<8x128xf32>
    %cst_66 = arith.constant dense<0.000000e+00> : vector<8xf32>
    %153 = vector.multi_reduction <add>, %152, %cst_66 [1] : vector<8x128xf32> to vector<8xf32>
    %154 = vector.shape_cast %153 : vector<8xf32> to vector<8x1xf32>
    %cst_67 = arith.constant 7.812500e-03 : f32
    %155 = vector.broadcast %cst_67 : f32 to vector<8x1xf32>
    %156 = arith.mulf %154, %155 : vector<8x1xf32>
    %cst_68 = arith.constant 9.99999974E-6 : f32
    %157 = vector.broadcast %cst_68 : f32 to vector<8x1xf32>
    %158 = arith.addf %156, %157 : vector<8x1xf32>
    %159 = math.rsqrt %158 : vector<8x1xf32>
    %160 = vector.broadcast %159 : vector<8x1xf32> to vector<8x128xf32>
    %161 = arith.mulf %151, %160 : vector<8x128xf32>
    %162 = vector.broadcast %0 : vector<1x128xf32> to vector<8x128xf32>
    %163 = arith.mulf %161, %162 : vector<8x128xf32>
    %164 = vector.broadcast %1 : vector<1x128xf32> to vector<8x128xf32>
    %165 = arith.addf %163, %164 : vector<8x128xf32>
    %c0_69 = arith.constant 0 : index
    %c0_70 = arith.constant 0 : index
    %166 = vector.load %arg6[%c0_69, %c0_70] : memref<128x784xf32, #tpu.memory_space<vmem>>, vector<128x784xf32>
    %cst_71 = arith.constant dense<0.000000e+00> : vector<8x784xf32>
    %167 = tpu.matmul %165, %166, %cst_71 {dimension_numbers = #tpu.dot_dimension_numbers<[1], [0], [0], [1], [0, 0, 1, 1], [], []>} : vector<8x128xf32>, vector<128x784xf32>, vector<8x784xf32> -> vector<8x784xf32>
    %c0_72 = arith.constant 0 : index
    %c0_73 = arith.constant 0 : index
    %168 = vector.load %arg7[%c0_72, %c0_73] : memref<1x784xf32, #tpu.memory_space<vmem>>, vector<1x784xf32>
    %169 = vector.broadcast %168 : vector<1x784xf32> to vector<8x784xf32>
    %170 = arith.addf %167, %169 : vector<8x784xf32>
    %c0_74 = arith.constant 0 : index
    %c0_75 = arith.constant 0 : index
    %171 = vector.load %arg10[%c0_74, %c0_75] : memref<8x784xf32, #tpu.memory_space<vmem>>, vector<8x784xf32>
    tpu.vector_store %arg10[%c0_74, %c0_75], %170 {strides = array<i32>} : memref<8x784xf32, #tpu.memory_space<vmem>>, vector<8x784xf32>,
    return
  }
  func.func @transform_0(%arg0: i32) -> (i32, i32) {
    %c0_i32 = arith.constant 0 : i32
    %c0_i32_0 = arith.constant 0 : i32
    return %arg0, %c0_i32 : i32, i32
  }
  func.func @transform_1(%arg0: i32) -> (i32, i32) {
    %c0_i32 = arith.constant 0 : i32
    %c0_i32_0 = arith.constant 0 : i32
    %c0_i32_1 = arith.constant 0 : i32
    return %c0_i32, %c0_i32_0 : i32, i32
  }
  func.func @transform_2(%arg0: i32) -> (i32, i32) {
    %c0_i32 = arith.constant 0 : i32
    %c0_i32_0 = arith.constant 0 : i32
    %c0_i32_1 = arith.constant 0 : i32
    return %c0_i32, %c0_i32_0 : i32, i32
  }
  func.func @transform_3(%arg0: i32) -> (i32, i32, i32) {
    %c0_i32 = arith.constant 0 : i32
    %c0_i32_0 = arith.constant 0 : i32
    %c0_i32_1 = arith.constant 0 : i32
    %c0_i32_2 = arith.constant 0 : i32
    return %c0_i32, %c0_i32_0, %c0_i32_1 : i32, i32, i32
  }
  func.func @transform_4(%arg0: i32) -> (i32, i32, i32) {
    %c0_i32 = arith.constant 0 : i32
    %c0_i32_0 = arith.constant 0 : i32
    %c0_i32_1 = arith.constant 0 : i32
    %c0_i32_2 = arith.constant 0 : i32
    return %c0_i32, %c0_i32_0, %c0_i32_1 : i32, i32, i32
  }
  func.func @transform_5(%arg0: i32) -> (i32, i32) {
    %c0_i32 = arith.constant 0 : i32
    %c0_i32_0 = arith.constant 0 : i32
    %c0_i32_1 = arith.constant 0 : i32
    return %c0_i32, %c0_i32_0 : i32, i32
  }
  func.func @transform_6(%arg0: i32) -> (i32, i32) {
    %c0_i32 = arith.constant 0 : i32
    %c0_i32_0 = arith.constant 0 : i32
    %c0_i32_1 = arith.constant 0 : i32
    return %c0_i32, %c0_i32_0 : i32, i32
  }
  func.func @transform_7(%arg0: i32) -> (i32, i32) {
    %c0_i32 = arith.constant 0 : i32
    %c0_i32_0 = arith.constant 0 : i32
    %c0_i32_1 = arith.constant 0 : i32
    return %c0_i32, %c0_i32_0 : i32, i32
  }
  func.func @transform_8(%arg0: i32) -> (i32, i32) {
    %c0_i32 = arith.constant 0 : i32
    %c0_i32_0 = arith.constant 0 : i32
    %c0_i32_1 = arith.constant 0 : i32
    return %c0_i32, %c0_i32_0 : i32, i32
  }
  func.func @transform_9(%arg0: i32) -> (i32, i32) {
    %c0_i32 = arith.constant 0 : i32
    %c0_i32_0 = arith.constant 0 : i32
    return %arg0, %c0_i32 : i32, i32
  }
}

module attributes {stable_mosaic.version = 11 : i64} {
  func.func @_fused_autoencoder_kernel(%arg0: i32, %arg1: memref<8x784xf32, #tpu.memory_space<vmem>>, %arg2: memref<784x128xf32, #tpu.memory_space<vmem>>, %arg3: memref<1x128xf32, #tpu.memory_space<vmem>>, %arg4: memref<4x128x128xf32, #tpu.memory_space<vmem>>, %arg5: memref<4x1x128xf32, #tpu.memory_space<vmem>>, %arg6: memref<128x784xf32, #tpu.memory_space<vmem>>, %arg7: memref<1x784xf32, #tpu.memory_space<vmem>>, %arg8: memref<1x128xf32, #tpu.memory_space<vmem>>, %arg9: memref<1x128xf32, #tpu.memory_space<vmem>>, %arg10: memref<8x784xf32, #tpu.memory_space<vmem>>) attributes {dimension_semantics = [#tpu.dimension_semantics<parallel>], iteration_bounds = array<i64: 2>, scalar_prefetch = 0 : i64, scratch_operands = 0 : i64, tpu.core_type = #tpu.core_type<tc>, window_params = [{transform_indices = @transform_0, window_bounds = array<i64: 8, 784>}, {pipeline_mode = #tpu.pipeline_mode<synchronous>, transform_indices = @transform_1, window_bounds = array<i64: 784, 128>}, {pipeline_mode = #tpu.pipeline_mode<synchronous>, transform_indices = @transform_2, window_bounds = array<i64: 1, 128>}, {pipeline_mode = #tpu.pipeline_mode<synchronous>, transform_indices = @transform_3, window_bounds = array<i64: 4, 128, 128>}, {pipeline_mode = #tpu.pipeline_mode<synchronous>, transform_indices = @transform_4, window_bounds = array<i64: 4, 1, 128>}, {pipeline_mode = #tpu.pipeline_mode<synchronous>, transform_indices = @transform_5, window_bounds = array<i64: 128, 784>}, {pipeline_mode = #tpu.pipeline_mode<synchronous>, transform_indices = @transform_6, window_bounds = array<i64: 1, 784>}, {pipeline_mode = #tpu.pipeline_mode<synchronous>, transform_indices = @transform_7, window_bounds = array<i64: 1, 128>}, {pipeline_mode = #tpu.pipeline_mode<synchronous>, transform_indices = @transform_8, window_bounds = array<i64: 1, 128>}, {transform_indices = @transform_9, window_bounds = array<i64: 8, 784>}]} {
    %c0 = arith.constant 0 : index
    %c0_0 = arith.constant 0 : index
    %0 = vector.load %arg8[%c0, %c0_0] : memref<1x128xf32, #tpu.memory_space<vmem>>, vector<1x128xf32>
    %c0_1 = arith.constant 0 : index
    %c0_2 = arith.constant 0 : index
    %1 = vector.load %arg9[%c0_1, %c0_2] : memref<1x128xf32, #tpu.memory_space<vmem>>, vector<1x128xf32>
    %c0_3 = arith.constant 0 : index
    %c0_4 = arith.constant 0 : index
    %2 = vector.load %arg1[%c0_3, %c0_4] : memref<8x784xf32, #tpu.memory_space<vmem>>, vector<8x784xf32>
    %c0_5 = arith.constant 0 : index
    %c0_6 = arith.constant 0 : index
    %3 = vector.load %arg2[%c0_5, %c0_6] : memref<784x128xf32, #tpu.memory_space<vmem>>, vector<784x128xf32>
    %cst = arith.constant dense<0.000000e+00> : vector<8x128xf32>
    %4 = tpu.matmul %2, %3, %cst {dimension_numbers = #tpu.dot_dimension_numbers<[1], [0], [0], [1], [0, 0, 1, 1], [], []>} : vector<8x784xf32>, vector<784x128xf32>, vector<8x128xf32> -> vector<8x128xf32>
    %c0_7 = arith.constant 0 : index
    %c0_8 = arith.constant 0 : index
    %5 = vector.load %arg3[%c0_7, %c0_8] : memref<1x128xf32, #tpu.memory_space<vmem>>, vector<1x128xf32>
    %6 = vector.broadcast %5 : vector<1x128xf32> to vector<8x128xf32>
    %7 = arith.addf %4, %6 : vector<8x128xf32>
    %cst_9 = arith.constant 0.000000e+00 : f32
    %8 = vector.broadcast %cst_9 : f32 to vector<8x128xf32>
    %9 = arith.cmpf ogt, %7, %8 : vector<8x128xf32>
    %10 = math.exp %7 : vector<8x128xf32>
    %cst_10 = arith.constant 1.000000e+00 : f32
    %11 = vector.broadcast %cst_10 : f32 to vector<8x128xf32>
    %12 = arith.subf %10, %11 : vector<8x128xf32>
    %13 = arith.select %9, %7, %12 : vector<8x128xi1>, vector<8x128xf32>
    %cst_11 = arith.constant dense<0.000000e+00> : vector<8xf32>
    %14 = vector.multi_reduction <add>, %13, %cst_11 [1] : vector<8x128xf32> to vector<8xf32>
    %15 = vector.shape_cast %14 : vector<8xf32> to vector<8x1xf32>
    %cst_12 = arith.constant 7.812500e-03 : f32
    %16 = vector.broadcast %cst_12 : f32 to vector<8x1xf32>
    %17 = arith.mulf %15, %16 : vector<8x1xf32>
    %18 = vector.broadcast %17 : vector<8x1xf32> to vector<8x128xf32>
    %19 = arith.subf %13, %18 : vector<8x128xf32>
    %20 = arith.mulf %19, %19 : vector<8x128xf32>
    %cst_13 = arith.constant dense<0.000000e+00> : vector<8xf32>
    %21 = vector.multi_reduction <add>, %20, %cst_13 [1] : vector<8x128xf32> to vector<8xf32>
    %22 = vector.shape_cast %21 : vector<8xf32> to vector<8x1xf32>
    %cst_14 = arith.constant 7.812500e-03 : f32
    %23 = vector.broadcast %cst_14 : f32 to vector<8x1xf32>
    %24 = arith.mulf %22, %23 : vector<8x1xf32>
    %cst_15 = arith.constant 9.99999974E-6 : f32
    %25 = vector.broadcast %cst_15 : f32 to vector<8x1xf32>
    %26 = arith.addf %24, %25 : vector<8x1xf32>
    %27 = math.rsqrt %26 : vector<8x1xf32>
    %28 = vector.broadcast %27 : vector<8x1xf32> to vector<8x128xf32>
    %29 = arith.mulf %19, %28 : vector<8x128xf32>
    %30 = vector.broadcast %0 : vector<1x128xf32> to vector<8x128xf32>
    %31 = arith.mulf %29, %30 : vector<8x128xf32>
    %32 = vector.broadcast %1 : vector<1x128xf32> to vector<8x128xf32>
    %33 = arith.addf %31, %32 : vector<8x128xf32>
    %c0_16 = arith.constant 0 : index
    %c0_17 = arith.constant 0 : index
    %c0_18 = arith.constant 0 : index
    %34 = vector.load %arg4[%c0_16, %c0_17, %c0_18] : memref<4x128x128xf32, #tpu.memory_space<vmem>>, vector<1x128x128xf32>
    %35 = vector.shape_cast %34 : vector<1x128x128xf32> to vector<128x128xf32>
    %cst_19 = arith.constant dense<0.000000e+00> : vector<8x128xf32>
    %36 = tpu.matmul %33, %35, %cst_19 {dimension_numbers = #tpu.dot_dimension_numbers<[1], [0], [0], [1], [0, 0, 1, 1], [], []>} : vector<8x128xf32>, vector<128x128xf32>, vector<8x128xf32> -> vector<8x128xf32>
    %c0_20 = arith.constant 0 : index
    %c0_21 = arith.constant 0 : index
    %c0_22 = arith.constant 0 : index
    %37 = vector.load %arg5[%c0_20, %c0_21, %c0_22] : memref<4x1x128xf32, #tpu.memory_space<vmem>>, vector<1x1x128xf32>
    %38 = vector.shape_cast %37 : vector<1x1x128xf32> to vector<1x128xf32>
    %39 = vector.broadcast %38 : vector<1x128xf32> to vector<8x128xf32>
    %40 = arith.addf %36, %39 : vector<8x128xf32>
    %cst_23 = arith.constant 0.000000e+00 : f32
    %41 = vector.broadcast %cst_23 : f32 to vector<8x128xf32>
    %42 = arith.cmpf ogt, %40, %41 : vector<8x128xf32>
    %43 = math.exp %40 : vector<8x128xf32>
    %cst_24 = arith.constant 1.000000e+00 : f32
    %44 = vector.broadcast %cst_24 : f32 to vector<8x128xf32>
    %45 = arith.subf %43, %44 : vector<8x128xf32>
    %46 = arith.select %42, %40, %45 : vector<8x128xi1>, vector<8x128xf32>
    %cst_25 = arith.constant dense<0.000000e+00> : vector<8xf32>
    %47 = vector.multi_reduction <add>, %46, %cst_25 [1] : vector<8x128xf32> to vector<8xf32>
    %48 = vector.shape_cast %47 : vector<8xf32> to vector<8x1xf32>
    %cst_26 = arith.constant 7.812500e-03 : f32
    %49 = vector.broadcast %cst_26 : f32 to vector<8x1xf32>
    %50 = arith.mulf %48, %49 : vector<8x1xf32>
    %51 = vector.broadcast %50 : vector<8x1xf32> to vector<8x128xf32>
    %52 = arith.subf %46, %51 : vector<8x128xf32>
    %53 = arith.mulf %52, %52 : vector<8x128xf32>
    %cst_27 = arith.constant dense<0.000000e+00> : vector<8xf32>
    %54 = vector.multi_reduction <add>, %53, %cst_27 [1] : vector<8x128xf32> to vector<8xf32>
    %55 = vector.shape_cast %54 : vector<8xf32> to vector<8x1xf32>
    %cst_28 = arith.constant 7.812500e-03 : f32
    %56 = vector.broadcast %cst_28 : f32 to vector<8x1xf32>
    %57 = arith.mulf %55, %56 : vector<8x1xf32>
    %cst_29 = arith.constant 9.99999974E-6 : f32
    %58 = vector.broadcast %cst_29 : f32 to vector<8x1xf32>
    %59 = arith.addf %57, %58 : vector<8x1xf32>
    %60 = math.rsqrt %59 : vector<8x1xf32>
    %61 = vector.broadcast %60 : vector<8x1xf32> to vector<8x128xf32>
    %62 = arith.mulf %52, %61 : vector<8x128xf32>
    %63 = vector.broadcast %0 : vector<1x128xf32> to vector<8x128xf32>
    %64 = arith.mulf %62, %63 : vector<8x128xf32>
    %65 = vector.broadcast %1 : vector<1x128xf32> to vector<8x128xf32>
    %66 = arith.addf %64, %65 : vector<8x128xf32>
    %c1 = arith.constant 1 : index
    %c0_30 = arith.constant 0 : index
    %c0_31 = arith.constant 0 : index
    %67 = vector.load %arg4[%c1, %c0_30, %c0_31] : memref<4x128x128xf32, #tpu.memory_space<vmem>>, vector<1x128x128xf32>
    %68 = vector.shape_cast %67 : vector<1x128x128xf32> to vector<128x128xf32>
    %cst_32 = arith.constant dense<0.000000e+00> : vector<8x128xf32>
    %69 = tpu.matmul %66, %68, %cst_32 {dimension_numbers = #tpu.dot_dimension_numbers<[1], [0], [0], [1], [0, 0, 1, 1], [], []>} : vector<8x128xf32>, vector<128x128xf32>, vector<8x128xf32> -> vector<8x128xf32>
    %c1_33 = arith.constant 1 : index
    %c0_34 = arith.constant 0 : index
    %c0_35 = arith.constant 0 : index
    %70 = vector.load %arg5[%c1_33, %c0_34, %c0_35] : memref<4x1x128xf32, #tpu.memory_space<vmem>>, vector<1x1x128xf32>
    %71 = vector.shape_cast %70 : vector<1x1x128xf32> to vector<1x128xf32>
    %72 = vector.broadcast %71 : vector<1x128xf32> to vector<8x128xf32>
    %73 = arith.addf %69, %72 : vector<8x128xf32>
    %cst_36 = arith.constant 0.000000e+00 : f32
    %74 = vector.broadcast %cst_36 : f32 to vector<8x128xf32>
    %75 = arith.cmpf ogt, %73, %74 : vector<8x128xf32>
    %76 = math.exp %73 : vector<8x128xf32>
    %cst_37 = arith.constant 1.000000e+00 : f32
    %77 = vector.broadcast %cst_37 : f32 to vector<8x128xf32>
    %78 = arith.subf %76, %77 : vector<8x128xf32>
    %79 = arith.select %75, %73, %78 : vector<8x128xi1>, vector<8x128xf32>
    %cst_38 = arith.constant dense<0.000000e+00> : vector<8xf32>
    %80 = vector.multi_reduction <add>, %79, %cst_38 [1] : vector<8x128xf32> to vector<8xf32>
    %81 = vector.shape_cast %80 : vector<8xf32> to vector<8x1xf32>
    %cst_39 = arith.constant 7.812500e-03 : f32
    %82 = vector.broadcast %cst_39 : f32 to vector<8x1xf32>
    %83 = arith.mulf %81, %82 : vector<8x1xf32>
    %84 = vector.broadcast %83 : vector<8x1xf32> to vector<8x128xf32>
    %85 = arith.subf %79, %84 : vector<8x128xf32>
    %86 = arith.mulf %85, %85 : vector<8x128xf32>
    %cst_40 = arith.constant dense<0.000000e+00> : vector<8xf32>
    %87 = vector.multi_reduction <add>, %86, %cst_40 [1] : vector<8x128xf32> to vector<8xf32>
    %88 = vector.shape_cast %87 : vector<8xf32> to vector<8x1xf32>
    %cst_41 = arith.constant 7.812500e-03 : f32
    %89 = vector.broadcast %cst_41 : f32 to vector<8x1xf32>
    %90 = arith.mulf %88, %89 : vector<8x1xf32>
    %cst_42 = arith.constant 9.99999974E-6 : f32
    %91 = vector.broadcast %cst_42 : f32 to vector<8x1xf32>
    %92 = arith.addf %90, %91 : vector<8x1xf32>
    %93 = math.rsqrt %92 : vector<8x1xf32>
    %94 = vector.broadcast %93 : vector<8x1xf32> to vector<8x128xf32>
    %95 = arith.mulf %85, %94 : vector<8x128xf32>
    %96 = vector.broadcast %0 : vector<1x128xf32> to vector<8x128xf32>
    %97 = arith.mulf %95, %96 : vector<8x128xf32>
    %98 = vector.broadcast %1 : vector<1x128xf32> to vector<8x128xf32>
    %99 = arith.addf %97, %98 : vector<8x128xf32>
    %c2 = arith.constant 2 : index
    %c0_43 = arith.constant 0 : index
    %c0_44 = arith.constant 0 : index
    %100 = vector.load %arg4[%c2, %c0_43, %c0_44] : memref<4x128x128xf32, #tpu.memory_space<vmem>>, vector<1x128x128xf32>
    %101 = vector.shape_cast %100 : vector<1x128x128xf32> to vector<128x128xf32>
    %cst_45 = arith.constant dense<0.000000e+00> : vector<8x128xf32>
    %102 = tpu.matmul %99, %101, %cst_45 {dimension_numbers = #tpu.dot_dimension_numbers<[1], [0], [0], [1], [0, 0, 1, 1], [], []>} : vector<8x128xf32>, vector<128x128xf32>, vector<8x128xf32> -> vector<8x128xf32>
    %c2_46 = arith.constant 2 : index
    %c0_47 = arith.constant 0 : index
    %c0_48 = arith.constant 0 : index
    %103 = vector.load %arg5[%c2_46, %c0_47, %c0_48] : memref<4x1x128xf32, #tpu.memory_space<vmem>>, vector<1x1x128xf32>
    %104 = vector.shape_cast %103 : vector<1x1x128xf32> to vector<1x128xf32>
    %105 = vector.broadcast %104 : vector<1x128xf32> to vector<8x128xf32>
    %106 = arith.addf %102, %105 : vector<8x128xf32>
    %cst_49 = arith.constant 0.000000e+00 : f32
    %107 = vector.broadcast %cst_49 : f32 to vector<8x128xf32>
    %108 = arith.cmpf ogt, %106, %107 : vector<8x128xf32>
    %109 = math.exp %106 : vector<8x128xf32>
    %cst_50 = arith.constant 1.000000e+00 : f32
    %110 = vector.broadcast %cst_50 : f32 to vector<8x128xf32>
    %111 = arith.subf %109, %110 : vector<8x128xf32>
    %112 = arith.select %108, %106, %111 : vector<8x128xi1>, vector<8x128xf32>
    %cst_51 = arith.constant dense<0.000000e+00> : vector<8xf32>
    %113 = vector.multi_reduction <add>, %112, %cst_51 [1] : vector<8x128xf32> to vector<8xf32>
    %114 = vector.shape_cast %113 : vector<8xf32> to vector<8x1xf32>
    %cst_52 = arith.constant 7.812500e-03 : f32
    %115 = vector.broadcast %cst_52 : f32 to vector<8x1xf32>
    %116 = arith.mulf %114, %115 : vector<8x1xf32>
    %117 = vector.broadcast %116 : vector<8x1xf32> to vector<8x128xf32>
    %118 = arith.subf %112, %117 : vector<8x128xf32>
    %119 = arith.mulf %118, %118 : vector<8x128xf32>
    %cst_53 = arith.constant dense<0.000000e+00> : vector<8xf32>
    %120 = vector.multi_reduction <add>, %119, %cst_53 [1] : vector<8x128xf32> to vector<8xf32>
    %121 = vector.shape_cast %120 : vector<8xf32> to vector<8x1xf32>
    %cst_54 = arith.constant 7.812500e-03 : f32
    %122 = vector.broadcast %cst_54 : f32 to vector<8x1xf32>
    %123 = arith.mulf %121, %122 : vector<8x1xf32>
    %cst_55 = arith.constant 9.99999974E-6 : f32
    %124 = vector.broadcast %cst_55 : f32 to vector<8x1xf32>
    %125 = arith.addf %123, %124 : vector<8x1xf32>
    %126 = math.rsqrt %125 : vector<8x1xf32>
    %127 = vector.broadcast %126 : vector<8x1xf32> to vector<8x128xf32>
    %128 = arith.mulf %118, %127 : vector<8x128xf32>
    %129 = vector.broadcast %0 : vector<1x128xf32> to vector<8x128xf32>
    %130 = arith.mulf %128, %129 : vector<8x128xf32>
    %131 = vector.broadcast %1 : vector<1x128xf32> to vector<8x128xf32>
    %132 = arith.addf %130, %131 : vector<8x128xf32>
    %c3 = arith.constant 3 : index
    %c0_56 = arith.constant 0 : index
    %c0_57 = arith.constant 0 : index
    %133 = vector.load %arg4[%c3, %c0_56, %c0_57] : memref<4x128x128xf32, #tpu.memory_space<vmem>>, vector<1x128x128xf32>
    %134 = vector.shape_cast %133 : vector<1x128x128xf32> to vector<128x128xf32>
    %cst_58 = arith.constant dense<0.000000e+00> : vector<8x128xf32>
    %135 = tpu.matmul %132, %134, %cst_58 {dimension_numbers = #tpu.dot_dimension_numbers<[1], [0], [0], [1], [0, 0, 1, 1], [], []>} : vector<8x128xf32>, vector<128x128xf32>, vector<8x128xf32> -> vector<8x128xf32>
    %c3_59 = arith.constant 3 : index
    %c0_60 = arith.constant 0 : index
    %c0_61 = arith.constant 0 : index
    %136 = vector.load %arg5[%c3_59, %c0_60, %c0_61] : memref<4x1x128xf32, #tpu.memory_space<vmem>>, vector<1x1x128xf32>
    %137 = vector.shape_cast %136 : vector<1x1x128xf32> to vector<1x128xf32>
    %138 = vector.broadcast %137 : vector<1x128xf32> to vector<8x128xf32>
    %139 = arith.addf %135, %138 : vector<8x128xf32>
    %cst_62 = arith.constant 0.000000e+00 : f32
    %140 = vector.broadcast %cst_62 : f32 to vector<8x128xf32>
    %141 = arith.cmpf ogt, %139, %140 : vector<8x128xf32>
    %142 = math.exp %139 : vector<8x128xf32>
    %cst_63 = arith.constant 1.000000e+00 : f32
    %143 = vector.broadcast %cst_63 : f32 to vector<8x128xf32>
    %144 = arith.subf %142, %143 : vector<8x128xf32>
    %145 = arith.select %141, %139, %144 : vector<8x128xi1>, vector<8x128xf32>
    %cst_64 = arith.constant dense<0.000000e+00> : vector<8xf32>
    %146 = vector.multi_reduction <add>, %145, %cst_64 [1] : vector<8x128xf32> to vector<8xf32>
    %147 = vector.shape_cast %146 : vector<8xf32> to vector<8x1xf32>
    %cst_65 = arith.constant 7.812500e-03 : f32
    %148 = vector.broadcast %cst_65 : f32 to vector<8x1xf32>
    %149 = arith.mulf %147, %148 : vector<8x1xf32>
    %150 = vector.broadcast %149 : vector<8x1xf32> to vector<8x128xf32>
    %151 = arith.subf %145, %150 : vector<8x128xf32>
    %152 = arith.mulf %151, %151 : vector<8x128xf32>
    %cst_66 = arith.constant dense<0.000000e+00> : vector<8xf32>
    %153 = vector.multi_reduction <add>, %152, %cst_66 [1] : vector<8x128xf32> to vector<8xf32>
    %154 = vector.shape_cast %153 : vector<8xf32> to vector<8x1xf32>
    %cst_67 = arith.constant 7.812500e-03 : f32
    %155 = vector.broadcast %cst_67 : f32 to vector<8x1xf32>
    %156 = arith.mulf %154, %155 : vector<8x1xf32>
    %cst_68 = arith.constant 9.99999974E-6 : f32
    %157 = vector.broadcast %cst_68 : f32 to vector<8x1xf32>
    %158 = arith.addf %156, %157 : vector<8x1xf32>
    %159 = math.rsqrt %158 : vector<8x1xf32>
    %160 = vector.broadcast %159 : vector<8x1xf32> to vector<8x128xf32>
    %161 = arith.mulf %151, %160 : vector<8x128xf32>
    %162 = vector.broadcast %0 : vector<1x128xf32> to vector<8x128xf32>
    %163 = arith.mulf %161, %162 : vector<8x128xf32>
    %164 = vector.broadcast %1 : vector<1x128xf32> to vector<8x128xf32>
    %165 = arith.addf %163, %164 : vector<8x128xf32>
    %c0_69 = arith.constant 0 : index
    %c0_70 = arith.constant 0 : index
    %166 = vector.load %arg6[%c0_69, %c0_70] : memref<128x784xf32, #tpu.memory_space<vmem>>, vector<128x784xf32>
    %cst_71 = arith.constant dense<0.000000e+00> : vector<8x784xf32>
    %167 = tpu.matmul %165, %166, %cst_71 {dimension_numbers = #tpu.dot_dimension_numbers<[1], [0], [0], [1], [0, 0, 1, 1], [], []>} : vector<8x128xf32>, vector<128x784xf32>, vector<8x784xf32> -> vector<8x784xf32>
    %c0_72 = arith.constant 0 : index
    %c0_73 = arith.constant 0 : index
    %168 = vector.load %arg7[%c0_72, %c0_73] : memref<1x784xf32, #tpu.memory_space<vmem>>, vector<1x784xf32>
    %169 = vector.broadcast %168 : vector<1x784xf32> to vector<8x784xf32>
    %170 = arith.addf %167, %169 : vector<8x784xf32>
    %c0_74 = arith.constant 0 : index
    %c0_75 = arith.constant 0 : index
    %171 = vector.load %arg10[%c0_74, %c0_75] : memref<8x784xf32, #tpu.memory_space<vmem>>, vector<8x784xf32>
    tpu.vector_store %arg10[%c0_74, %c0_75], %170 {strides = array<i32>} : memref<8x784xf32, #tpu.memory_space<vmem>>, vector<8x784xf32>,
    return
  }
  func.func @transform_0(%arg0: i32) -> (i32, i32) {
    %c0_i32 = arith.constant 0 : i32
    %c0_i32_0 = arith.constant 0 : i32
    return %arg0, %c0_i32 : i32, i32
  }
  func.func @transform_1(%arg0: i32) -> (i32, i32) {
    %c0_i32 = arith.constant 0 : i32
    %c0_i32_0 = arith.constant 0 : i32
    %c0_i32_1 = arith.constant 0 : i32
    return %c0_i32, %c0_i32_0 : i32, i32
  }
  func.func @transform_2(%arg0: i32) -> (i32, i32) {
    %c0_i32 = arith.constant 0 : i32
    %c0_i32_0 = arith.constant 0 : i32
    %c0_i32_1 = arith.constant 0 : i32
    return %c0_i32, %c0_i32_0 : i32, i32
  }
  func.func @transform_3(%arg0: i32) -> (i32, i32, i32) {
    %c0_i32 = arith.constant 0 : i32
    %c0_i32_0 = arith.constant 0 : i32
    %c0_i32_1 = arith.constant 0 : i32
    %c0_i32_2 = arith.constant 0 : i32
    return %c0_i32, %c0_i32_0, %c0_i32_1 : i32, i32, i32
  }
  func.func @transform_4(%arg0: i32) -> (i32, i32, i32) {
    %c0_i32 = arith.constant 0 : i32
    %c0_i32_0 = arith.constant 0 : i32
    %c0_i32_1 = arith.constant 0 : i32
    %c0_i32_2 = arith.constant 0 : i32
    return %c0_i32, %c0_i32_0, %c0_i32_1 : i32, i32, i32
  }
  func.func @transform_5(%arg0: i32) -> (i32, i32) {
    %c0_i32 = arith.constant 0 : i32
    %c0_i32_0 = arith.constant 0 : i32
    %c0_i32_1 = arith.constant 0 : i32
    return %c0_i32, %c0_i32_0 : i32, i32
  }
  func.func @transform_6(%arg0: i32) -> (i32, i32) {
    %c0_i32 = arith.constant 0 : i32
    %c0_i32_0 = arith.constant 0 : i32
    %c0_i32_1 = arith.constant 0 : i32
    return %c0_i32, %c0_i32_0 : i32, i32
  }
  func.func @transform_7(%arg0: i32) -> (i32, i32) {
    %c0_i32 = arith.constant 0 : i32
    %c0_i32_0 = arith.constant 0 : i32
    %c0_i32_1 = arith.constant 0 : i32
    return %c0_i32, %c0_i32_0 : i32, i32
  }
  func.func @transform_8(%arg0: i32) -> (i32, i32) {
    %c0_i32 = arith.constant 0 : i32
    %c0_i32_0 = arith.constant 0 : i32
    %c0_i32_1 = arith.constant 0 : i32
    return %c0_i32, %c0_i32_0 : i32, i32
  }
  func.func @transform_9(%arg0: i32) -> (i32, i32) {
    %c0_i32 = arith.constant 0 : i32
    %c0_i32_0 = arith.constant 0 : i32
    return %arg0, %c0_i32 : i32, i32
  }
}

</mosaic_0001>

<llo_original>
// kernel: _forward.1
$region0: #{_forward.1}
  #allocation0 [shape = 'u32[]', space=smem, size = 0x4, offset = 0x4, fixed_abs, tag = 'smem constant byte address 0x4 - core index']
  #allocation1 [shape = 'u32[144,128]{1,0:T(1,128)}', space=vmem, size = 0x12000, scoped, tag = 'internal scratch']
  %s0 = inlined_call_operand.vmem [shape: f32[16,784], index: 0, kind: input, shape index: {}]
  %s1 = inlined_call_operand.vmem [shape: f32[784,128], index: 1, kind: input, shape index: {}]
  %s2 = inlined_call_operand.vmem [shape: f32[1,128], index: 2, kind: input, shape index: {}]
  %s3 = inlined_call_operand.vmem [shape: f32[4,128,128], index: 3, kind: input, shape index: {}]
  %s4 = inlined_call_operand.vmem [shape: f32[4,1,128], index: 4, kind: input, shape index: {}]
  %s5 = inlined_call_operand.vmem [shape: f32[128,784], index: 5, kind: input, shape index: {}]
  %s6 = inlined_call_operand.vmem [shape: f32[1,784], index: 6, kind: input, shape index: {}]
  %s7 = inlined_call_operand.vmem [shape: f32[1,128], index: 7, kind: input, shape index: {}]
  %s8 = inlined_call_operand.vmem [shape: f32[1,128], index: 8, kind: input, shape index: {}]
  %s9 = inlined_call_operand.hbm [shape: f32[16,784], index: 9, kind: output, shape index: {}]
  %s10 = sld [smem:[#allocation0]]
  $region69: #{_forward.1} parent=0
    _
  %s12 = ssub.s32 1, %s10
  %s13 = scalar_select 0, %s12, %s10
  $region1: #{_forward.1} parent=0
    #allocation2 [shape = 'u8[57344]{0}', space=vmem, size = 0xe000, scoped, tag = 'output window, operand 0']
    #allocation3 [shape = 's32[2]{0}', space=sflag, size = 0x8, scoped, tag = 'scoped memory for _forward.1']
    %14 = vsyncpa [#allocation3], 0
    %s15 = scalar_lea.sflag [#allocation3], 1
    %16 = vsyncpa %s15, 0
    loop: start=0, step=1, limit=4
    $region2: #{_forward.1} parent=1 // loop_pre_header
      _
    $region3: #{_forward.1} parent=1 // loop_header
      %s18 = sphi 0, %s22
      %p19 = scmp.ge.s32.totalorder %s18, 4
      %s28 = sphi 0, %s30
      %s31 = sphi 0, %s28
      %s32 = sphi 0, %s31
      %s48 = sphi 0, %s32
      %s52 = sphi 0, %s52
      %s54 = sphi 0, %s52
      %s55 = sphi 0, %s54
      %s69 = sphi 0, %s55
      %s73 = sphi 0, %s73
      %s75 = sphi 0, %s73
      %s76 = sphi 0, %s75
      %s90 = sphi 0, %s76
      %s94 = sphi 0, %s94
      %s96 = sphi 0, %s94
      %s97 = sphi 0, %s96
      %s111 = sphi 0, %s97
      %s115 = sphi 0, %s115
      %s117 = sphi 0, %s115
      %s118 = sphi 0, %s117
      %s132 = sphi 0, %s118
      %s136 = sphi 0, %s136
      %s138 = sphi 0, %s136
      %s139 = sphi 0, %s138
      %s153 = sphi 0, %s139
      %s157 = sphi 0, %s157
      %s159 = sphi 0, %s157
      %s160 = sphi 0, %s159
      %s174 = sphi 0, %s160
      %s178 = sphi 0, %s178
      %s180 = sphi 0, %s178
      %s181 = sphi 0, %s180
      %s195 = sphi 0, %s181
      %s199 = sphi 0, %s199
      %s201 = sphi 0, %s199
      %s202 = sphi 0, %s201
      %s216 = sphi 0, %s202
      %s222 = sphi 0, %s224
      %s225 = sphi 0, %s222
      %s226 = sphi 0, %s225
      %s242 = sphi 0, %s226
    $region4: #{_forward.1} parent=1 // loop_header_branch
      %21 = sbr.rel (%p19) target = $region8
    $region5: #{_forward.1} parent=1 // loop_body
      %s23 = ssub.s32 %s18, 1
      %s24 = ssub.s32 %s18, 2
      %s25 = sadd.s32 %s18, 1
      %s26 = ssub.s32 %s18, %s25
      %p27 = scmp.eq.s32.totalorder %s26, 0
      %s29 = sadd.s32 %s28, 1
      %s30 = scalar_select %p27, %s28, %s29
      %p33 = pneg %p27
      %p34 = scmp.eq.s32.totalorder %s18, 1
      %p35 = por %p33, %p34
      %p36 = scmp.ne.s32.totalorder %s28, %s31
      %p37 = scmp.eq.s32.totalorder %s18, 0
      %p38 = por %p36, %p37
      %p39 = scmp.ne.s32.totalorder %s28, %s31
      %p40 = scmp.eq.s32.totalorder %s23, 1
      %p41 = por %p39, %p40
      %p42 = scmp.ne.s32.totalorder %s31, %s32
      %p43 = scmp.eq.s32.totalorder %s23, 0
      %p44 = por %p42, %p43
      %p45 = scmp.ne.s32.totalorder %s31, %s32
      %p46 = scmp.eq.s32.totalorder %s24, 1
      %p47 = por %p45, %p46
      %p49 = scmp.ne.s32.totalorder %s32, %s48
      %p50 = scmp.eq.s32.totalorder %s24, 0
      %p51 = por %p49, %p50
      %s53 = sadd.s32 %s52, 1
      %p56 = scmp.eq.s32.totalorder %s18, 1
      %p57 = scmp.ne.s32.totalorder %s52, %s54
      %p58 = scmp.eq.s32.totalorder %s18, 0
      %p59 = por %p57, %p58
      %p60 = scmp.ne.s32.totalorder %s52, %s54
      %p61 = scmp.eq.s32.totalorder %s23, 1
      %p62 = por %p60, %p61
      %p63 = scmp.ne.s32.totalorder %s54, %s55
      %p64 = scmp.eq.s32.totalorder %s23, 0
      %p65 = por %p63, %p64
      %p66 = scmp.ne.s32.totalorder %s54, %s55
      %p67 = scmp.eq.s32.totalorder %s24, 1
      %p68 = por %p66, %p67
      %p70 = scmp.ne.s32.totalorder %s55, %s69
      %p71 = scmp.eq.s32.totalorder %s24, 0
      %p72 = por %p70, %p71
      %s74 = sadd.s32 %s73, 1
      %p77 = scmp.eq.s32.totalorder %s18, 1
      %p78 = scmp.ne.s32.totalorder %s73, %s75
      %p79 = scmp.eq.s32.totalorder %s18, 0
      %p80 = por %p78, %p79
      %p81 = scmp.ne.s32.totalorder %s73, %s75
      %p82 = scmp.eq.s32.totalorder %s23, 1
      %p83 = por %p81, %p82
      %p84 = scmp.ne.s32.totalorder %s75, %s76
      %p85 = scmp.eq.s32.totalorder %s23, 0
      %p86 = por %p84, %p85
      %p87 = scmp.ne.s32.totalorder %s75, %s76
      %p88 = scmp.eq.s32.totalorder %s24, 1
      %p89 = por %p87, %p88
      %p91 = scmp.ne.s32.totalorder %s76, %s90
      %p92 = scmp.eq.s32.totalorder %s24, 0
      %p93 = por %p91, %p92
      %s95 = sadd.s32 %s94, 1
      %p98 = scmp.eq.s32.totalorder %s18, 1
      %p99 = scmp.ne.s32.totalorder %s94, %s96
      %p100 = scmp.eq.s32.totalorder %s18, 0
      %p101 = por %p99, %p100
      %p102 = scmp.ne.s32.totalorder %s94, %s96
      %p103 = scmp.eq.s32.totalorder %s23, 1
      %p104 = por %p102, %p103
      %p105 = scmp.ne.s32.totalorder %s96, %s97
      %p106 = scmp.eq.s32.totalorder %s23, 0
      %p107 = por %p105, %p106
      %p108 = scmp.ne.s32.totalorder %s96, %s97
      %p109 = scmp.eq.s32.totalorder %s24, 1
      %p110 = por %p108, %p109
      %p112 = scmp.ne.s32.totalorder %s97, %s111
      %p113 = scmp.eq.s32.totalorder %s24, 0
      %p114 = por %p112, %p113
      %s116 = sadd.s32 %s115, 1
      %p119 = scmp.eq.s32.totalorder %s18, 1
      %p120 = scmp.ne.s32.totalorder %s115, %s117
      %p121 = scmp.eq.s32.totalorder %s18, 0
      %p122 = por %p120, %p121
      %p123 = scmp.ne.s32.totalorder %s115, %s117
      %p124 = scmp.eq.s32.totalorder %s23, 1
      %p125 = por %p123, %p124
      %p126 = scmp.ne.s32.totalorder %s117, %s118
      %p127 = scmp.eq.s32.totalorder %s23, 0
      %p128 = por %p126, %p127
      %p129 = scmp.ne.s32.totalorder %s117, %s118
      %p130 = scmp.eq.s32.totalorder %s24, 1
      %p131 = por %p129, %p130
      %p133 = scmp.ne.s32.totalorder %s118, %s132
      %p134 = scmp.eq.s32.totalorder %s24, 0
      %p135 = por %p133, %p134
      %s137 = sadd.s32 %s136, 1
      %p140 = scmp.eq.s32.totalorder %s18, 1
      %p141 = scmp.ne.s32.totalorder %s136, %s138
      %p142 = scmp.eq.s32.totalorder %s18, 0
      %p143 = por %p141, %p142
      %p144 = scmp.ne.s32.totalorder %s136, %s138
      %p145 = scmp.eq.s32.totalorder %s23, 1
      %p146 = por %p144, %p145
      %p147 = scmp.ne.s32.totalorder %s138, %s139
      %p148 = scmp.eq.s32.totalorder %s23, 0
      %p149 = por %p147, %p148
      %p150 = scmp.ne.s32.totalorder %s138, %s139
      %p151 = scmp.eq.s32.totalorder %s24, 1
      %p152 = por %p150, %p151
      %p154 = scmp.ne.s32.totalorder %s139, %s153
      %p155 = scmp.eq.s32.totalorder %s24, 0
      %p156 = por %p154, %p155
      %s158 = sadd.s32 %s157, 1
      %p161 = scmp.eq.s32.totalorder %s18, 1
      %p162 = scmp.ne.s32.totalorder %s157, %s159
      %p163 = scmp.eq.s32.totalorder %s18, 0
      %p164 = por %p162, %p163
      %p165 = scmp.ne.s32.totalorder %s157, %s159
      %p166 = scmp.eq.s32.totalorder %s23, 1
      %p167 = por %p165, %p166
      %p168 = scmp.ne.s32.totalorder %s159, %s160
      %p169 = scmp.eq.s32.totalorder %s23, 0
      %p170 = por %p168, %p169
      %p171 = scmp.ne.s32.totalorder %s159, %s160
      %p172 = scmp.eq.s32.totalorder %s24, 1
      %p173 = por %p171, %p172
      %p175 = scmp.ne.s32.totalorder %s160, %s174
      %p176 = scmp.eq.s32.totalorder %s24, 0
      %p177 = por %p175, %p176
      %s179 = sadd.s32 %s178, 1
      %p182 = scmp.eq.s32.totalorder %s18, 1
      %p183 = scmp.ne.s32.totalorder %s178, %s180
      %p184 = scmp.eq.s32.totalorder %s18, 0
      %p185 = por %p183, %p184
      %p186 = scmp.ne.s32.totalorder %s178, %s180
      %p187 = scmp.eq.s32.totalorder %s23, 1
      %p188 = por %p186, %p187
      %p189 = scmp.ne.s32.totalorder %s180, %s181
      %p190 = scmp.eq.s32.totalorder %s23, 0
      %p191 = por %p189, %p190
      %p192 = scmp.ne.s32.totalorder %s180, %s181
      %p193 = scmp.eq.s32.totalorder %s24, 1
      %p194 = por %p192, %p193
      %p196 = scmp.ne.s32.totalorder %s181, %s195
      %p197 = scmp.eq.s32.totalorder %s24, 0
      %p198 = por %p196, %p197
      %s200 = sadd.s32 %s199, 1
      %p203 = scmp.eq.s32.totalorder %s18, 1
      %p204 = scmp.ne.s32.totalorder %s199, %s201
      %p205 = scmp.eq.s32.totalorder %s18, 0
      %p206 = por %p204, %p205
      %p207 = scmp.ne.s32.totalorder %s199, %s201
      %p208 = scmp.eq.s32.totalorder %s23, 1
      %p209 = por %p207, %p208
      %p210 = scmp.ne.s32.totalorder %s201, %s202
      %p211 = scmp.eq.s32.totalorder %s23, 0
      %p212 = por %p210, %p211
      %p213 = scmp.ne.s32.totalorder %s201, %s202
      %p214 = scmp.eq.s32.totalorder %s24, 1
      %p215 = por %p213, %p214
      %p217 = scmp.ne.s32.totalorder %s202, %s216
      %p218 = scmp.eq.s32.totalorder %s24, 0
      %p219 = por %p217, %p218
      %s220 = ssub.s32 %s18, %s25
      %p221 = scmp.eq.s32.totalorder %s220, 0
      %s223 = sadd.s32 %s222, 1
      %s224 = scalar_select %p221, %s222, %s223
      %p227 = pneg %p221
      %p228 = scmp.eq.s32.totalorder %s18, 1
      %p229 = por %p227, %p228
      %p230 = scmp.ne.s32.totalorder %s222, %s225
      %p231 = scmp.eq.s32.totalorder %s18, 0
      %p232 = por %p230, %p231
      %p233 = scmp.ne.s32.totalorder %s222, %s225
      %p234 = scmp.eq.s32.totalorder %s23, 1
      %p235 = por %p233, %p234
      %p236 = scmp.ne.s32.totalorder %s225, %s226
      %p237 = scmp.eq.s32.totalorder %s23, 0
      %p238 = por %p236, %p237
      %p239 = scmp.ne.s32.totalorder %s225, %s226
      %p240 = scmp.eq.s32.totalorder %s24, 1
      %p241 = por %p239, %p240
      %p243 = scmp.ne.s32.totalorder %s226, %s242
      %p244 = scmp.eq.s32.totalorder %s24, 0
      %p245 = por %p243, %p244
      %p246 = scmp.le.s32.totalorder 1, %s18
      %p247 = scmp.lt.s32.totalorder %s18, 3
      %p248 = pnand %p246, %p247
      %p249 = pneg %p248
      // Predicated region
      $region9: #{_forward.1} parent=5 // pred_check
        _
      $region10: #{_forward.1} parent=5 // pred_check_branch
        %251 = sbr.rel (%p248) target = $region12
      $region11: #{_forward.1} parent=5 // pred_region
        %s252 = ssub.s32 %s18, 1
        // Predicated region
        $region13: #{_forward.1} parent=11 // pred_check
          %p253 = pneg %p65
        $region14: #{_forward.1} parent=11 // pred_check_branch
          %255 = sbr.rel (%p253) target = $region16
        $region15: #{_forward.1} parent=11 // pred_region
          _
        $region16: #{_forward.1} parent=11 // pred_fallthru
          _
        // Predicated region
        $region17: #{_forward.1} parent=11 // pred_check
          %p256 = pneg %p86
        $region18: #{_forward.1} parent=11 // pred_check_branch
          %258 = sbr.rel (%p256) target = $region20
        $region19: #{_forward.1} parent=11 // pred_region
          _
        $region20: #{_forward.1} parent=11 // pred_fallthru
          _
        // Predicated region
        $region21: #{_forward.1} parent=11 // pred_check
          %p259 = pneg %p107
        $region22: #{_forward.1} parent=11 // pred_check_branch
          %261 = sbr.rel (%p259) target = $region24
        $region23: #{_forward.1} parent=11 // pred_region
          _
        $region24: #{_forward.1} parent=11 // pred_fallthru
          _
        // Predicated region
        $region25: #{_forward.1} parent=11 // pred_check
          %p262 = pneg %p128
        $region26: #{_forward.1} parent=11 // pred_check_branch
          %264 = sbr.rel (%p262) target = $region28
        $region27: #{_forward.1} parent=11 // pred_region
          _
        $region28: #{_forward.1} parent=11 // pred_fallthru
          _
        // Predicated region
        $region29: #{_forward.1} parent=11 // pred_check
          %p265 = pneg %p149
        $region30: #{_forward.1} parent=11 // pred_check_branch
          %267 = sbr.rel (%p265) target = $region32
        $region31: #{_forward.1} parent=11 // pred_region
          _
        $region32: #{_forward.1} parent=11 // pred_fallthru
          _
        // Predicated region
        $region33: #{_forward.1} parent=11 // pred_check
          %p268 = pneg %p170
        $region34: #{_forward.1} parent=11 // pred_check_branch
          %270 = sbr.rel (%p268) target = $region36
        $region35: #{_forward.1} parent=11 // pred_region
          _
        $region36: #{_forward.1} parent=11 // pred_fallthru
          _
        // Predicated region
        $region37: #{_forward.1} parent=11 // pred_check
          %p271 = pneg %p191
        $region38: #{_forward.1} parent=11 // pred_check_branch
          %273 = sbr.rel (%p271) target = $region40
        $region39: #{_forward.1} parent=11 // pred_region
          _
        $region40: #{_forward.1} parent=11 // pred_fallthru
          _
        // Predicated region
        $region41: #{_forward.1} parent=11 // pred_check
          %p274 = pneg %p212
        $region42: #{_forward.1} parent=11 // pred_check_branch
          %276 = sbr.rel (%p274) target = $region44
        $region43: #{_forward.1} parent=11 // pred_region
          _
        $region44: #{_forward.1} parent=11 // pred_fallthru
          _
      $region12: #{_forward.1} parent=5 // pred_fallthru
        _
      %p277 = scmp.lt.s32.totalorder %s18, 2
      // Predicated region
      $region45: #{_forward.1} parent=5 // pred_check
        %p278 = pneg %p277
      $region46: #{_forward.1} parent=5 // pred_check_branch
        %280 = sbr.rel (%p278) target = $region48
      $region47: #{_forward.1} parent=5 // pred_region
        // Predicated region
        $region49: #{_forward.1} parent=47 // pred_check
          %p281 = pneg %p38
        $region50: #{_forward.1} parent=47 // pred_check_branch
          %283 = sbr.rel (%p281) target = $region52
        $region51: #{_forward.1} parent=47 // pred_region
          %p284 = scmp.lt.s32.totalorder %s18, 1
          %s285 = scalar_select %p284, %s18, 1
          %s286 = smul.addr %s285, 7
          %s287 = smul.addr %s286, 8
          %s288 = scalar_lea.vmem %s0, %s287
        $region52: #{_forward.1} parent=47 // pred_fallthru
          _
      $region48: #{_forward.1} parent=5 // pred_fallthru
        _
      %p289 = scmp.le.s32.totalorder 1, %s18
      %p290 = scmp.lt.s32.totalorder %s18, 3
      %p291 = pnand %p289, %p290
      %p292 = pneg %p291
      // Predicated region
      $region53: #{_forward.1} parent=5 // pred_check
        _
      $region54: #{_forward.1} parent=5 // pred_check_branch
        %294 = sbr.rel (%p291) target = $region56
      $region55: #{_forward.1} parent=5 // pred_region
        %s295 = ssub.s32 %s18, 1
        %p296 = scmp.lt.s32.totalorder %s23, 1
        %s297 = scalar_select %p296, %s23, 1
        %s298 = smul.addr %s297, 7
        %s299 = smul.addr %s298, 8
        %s300 = scalar_lea.vmem %s0, %s299
        %p301 = pneg %p44
        %p302 = pneg %p41
        %p303 = pneg %p65
        %p304 = pneg %p62
        %p305 = pneg %p86
        %p306 = pneg %p83
        %p307 = pneg %p107
        %p308 = pneg %p104
        %p309 = pneg %p128
        %p310 = pneg %p125
        %p311 = pneg %p149
        %p312 = pneg %p146
        %p313 = pneg %p170
        %p314 = pneg %p167
        %p315 = pneg %p191
        %p316 = pneg %p188
        %p317 = pneg %p212
        %p318 = pneg %p209
        %p319 = pneg %p238
        %p320 = pneg %p235
        %s321 = sand.u32 %s225, 1
        %s322 = scalar_lea.sflag [#allocation3], %s321
        %s323 = sand.u32 %s225, 1
        %s324 = smul.addr %s323, 56
        %s325 = scalar_lea.vmem [#allocation2], %s324
        %p326 = scmp.lt.s32.totalorder %s23, 1
        %s327 = scalar_select %p326, %s23, 1
        %s328 = smul.addr %s327, 7
        %s329 = smul.addr %s328, 8
        %s330 = scalar_lea.vmem %s0, %s329
        %v331 = vld [vmem:[%s7] sm:$0x1]
        %v332 = vld [vmem:[%s8] sm:$0x1]
        %v333 = vld [vmem:[%s330] sm:$0xff]
        %v334 = vld [vmem:[%s330 + $0x8] sm:$0xff]
        %v335 = vld [vmem:[%s330 + $0x10] sm:$0xff]
        %v336 = vld [vmem:[%s330 + $0x18] sm:$0xff]
        %v337 = vld [vmem:[%s330 + $0x20] sm:$0xff]
        %v338 = vld [vmem:[%s330 + $0x28] sm:$0xff]
        %v339 = vld [vmem:[%s330 + $0x30] sm:$0xff]
        %v340 = vld [vmem:[%s1] sm:$0xff]
        %v341 = vld [vmem:[%s1 + $0x8] sm:$0xff]
        %v342 = vld [vmem:[%s1 + $0x10] sm:$0xff]
        %v343 = vld [vmem:[%s1 + $0x18] sm:$0xff]
        %v344 = vld [vmem:[%s1 + $0x20] sm:$0xff]
        %v345 = vld [vmem:[%s1 + $0x28] sm:$0xff]
        %v346 = vld [vmem:[%s1 + $0x30] sm:$0xff]
        %v347 = vld [vmem:[%s1 + $0x38] sm:$0xff]
        %v348 = vld [vmem:[%s1 + $0x40] sm:$0xff]
        %v349 = vld [vmem:[%s1 + $0x48] sm:$0xff]
        %v350 = vld [vmem:[%s1 + $0x50] sm:$0xff]
        %v351 = vld [vmem:[%s1 + $0x58] sm:$0xff]
        %v352 = vld [vmem:[%s1 + $0x60] sm:$0xff]
        %v353 = vld [vmem:[%s1 + $0x68] sm:$0xff]
        %v354 = vld [vmem:[%s1 + $0x70] sm:$0xff]
        %v355 = vld [vmem:[%s1 + $0x78] sm:$0xff]
        %v356 = vld [vmem:[%s1 + $0x80] sm:$0xff]
        %v357 = vld [vmem:[%s1 + $0x88] sm:$0xff]
        %v358 = vld [vmem:[%s1 + $0x90] sm:$0xff]
        %v359 = vld [vmem:[%s1 + $0x98] sm:$0xff]
        %v360 = vld [vmem:[%s1 + $0xa0] sm:$0xff]
        %v361 = vld [vmem:[%s1 + $0xa8] sm:$0xff]
        %v362 = vld [vmem:[%s1 + $0xb0] sm:$0xff]
        %v363 = vld [vmem:[%s1 + $0xb8] sm:$0xff]
        %v364 = vld [vmem:[%s1 + $0xc0] sm:$0xff]
        %v365 = vld [vmem:[%s1 + $0xc8] sm:$0xff]
        %v366 = vld [vmem:[%s1 + $0xd0] sm:$0xff]
        %v367 = vld [vmem:[%s1 + $0xd8] sm:$0xff]
        %v368 = vld [vmem:[%s1 + $0xe0] sm:$0xff]
        %v369 = vld [vmem:[%s1 + $0xe8] sm:$0xff]
        %v370 = vld [vmem:[%s1 + $0xf0] sm:$0xff]
        %v371 = vld [vmem:[%s1 + $0xf8] sm:$0xff]
        %v372 = vld [vmem:[%s1 + $0x100] sm:$0xff]
        %v373 = vld [vmem:[%s1 + $0x108] sm:$0xff]
        %v374 = vld [vmem:[%s1 + $0x110] sm:$0xff]
        %v375 = vld [vmem:[%s1 + $0x118] sm:$0xff]
        %v376 = vld [vmem:[%s1 + $0x120] sm:$0xff]
        %v377 = vld [vmem:[%s1 + $0x128] sm:$0xff]
        %v378 = vld [vmem:[%s1 + $0x130] sm:$0xff]
        %v379 = vld [vmem:[%s1 + $0x138] sm:$0xff]
        %v380 = vld [vmem:[%s1 + $0x140] sm:$0xff]
        %v381 = vld [vmem:[%s1 + $0x148] sm:$0xff]
        %v382 = vld [vmem:[%s1 + $0x150] sm:$0xff]
        %v383 = vld [vmem:[%s1 + $0x158] sm:$0xff]
        %v384 = vld [vmem:[%s1 + $0x160] sm:$0xff]
        %v385 = vld [vmem:[%s1 + $0x168] sm:$0xff]
        %v386 = vld [vmem:[%s1 + $0x170] sm:$0xff]
        %v387 = vld [vmem:[%s1 + $0x178] sm:$0xff]
        %v388 = vld [vmem:[%s1 + $0x180] sm:$0xff]
        %v389 = vld [vmem:[%s1 + $0x188] sm:$0xff]
        %v390 = vld [vmem:[%s1 + $0x190] sm:$0xff]
        %v391 = vld [vmem:[%s1 + $0x198] sm:$0xff]
        %v392 = vld [vmem:[%s1 + $0x1a0] sm:$0xff]
        %v393 = vld [vmem:[%s1 + $0x1a8] sm:$0xff]
        %v394 = vld [vmem:[%s1 + $0x1b0] sm:$0xff]
        %v395 = vld [vmem:[%s1 + $0x1b8] sm:$0xff]
        %v396 = vld [vmem:[%s1 + $0x1c0] sm:$0xff]
        %v397 = vld [vmem:[%s1 + $0x1c8] sm:$0xff]
        %v398 = vld [vmem:[%s1 + $0x1d0] sm:$0xff]
        %v399 = vld [vmem:[%s1 + $0x1d8] sm:$0xff]
        %v400 = vld [vmem:[%s1 + $0x1e0] sm:$0xff]
        %v401 = vld [vmem:[%s1 + $0x1e8] sm:$0xff]
        %v402 = vld [vmem:[%s1 + $0x1f0] sm:$0xff]
        %v403 = vld [vmem:[%s1 + $0x1f8] sm:$0xff]
        %v404 = vld [vmem:[%s1 + $0x200] sm:$0xff]
        %v405 = vld [vmem:[%s1 + $0x208] sm:$0xff]
        %v406 = vld [vmem:[%s1 + $0x210] sm:$0xff]
        %v407 = vld [vmem:[%s1 + $0x218] sm:$0xff]
        %v408 = vld [vmem:[%s1 + $0x220] sm:$0xff]
        %v409 = vld [vmem:[%s1 + $0x228] sm:$0xff]
        %v410 = vld [vmem:[%s1 + $0x230] sm:$0xff]
        %v411 = vld [vmem:[%s1 + $0x238] sm:$0xff]
        %v412 = vld [vmem:[%s1 + $0x240] sm:$0xff]
        %v413 = vld [vmem:[%s1 + $0x248] sm:$0xff]
        %v414 = vld [vmem:[%s1 + $0x250] sm:$0xff]
        %v415 = vld [vmem:[%s1 + $0x258] sm:$0xff]
        %v416 = vld [vmem:[%s1 + $0x260] sm:$0xff]
        %v417 = vld [vmem:[%s1 + $0x268] sm:$0xff]
        %v418 = vld [vmem:[%s1 + $0x270] sm:$0xff]
        %v419 = vld [vmem:[%s1 + $0x278] sm:$0xff]
        %v420 = vld [vmem:[%s1 + $0x280] sm:$0xff]
        %v421 = vld [vmem:[%s1 + $0x288] sm:$0xff]
        %v422 = vld [vmem:[%s1 + $0x290] sm:$0xff]
        %v423 = vld [vmem:[%s1 + $0x298] sm:$0xff]
        %v424 = vld [vmem:[%s1 + $0x2a0] sm:$0xff]
        %v425 = vld [vmem:[%s1 + $0x2a8] sm:$0xff]
        %v426 = vld [vmem:[%s1 + $0x2b0] sm:$0xff]
        %v427 = vld [vmem:[%s1 + $0x2b8] sm:$0xff]
        %v428 = vld [vmem:[%s1 + $0x2c0] sm:$0xff]
        %v429 = vld [vmem:[%s1 + $0x2c8] sm:$0xff]
        %v430 = vld [vmem:[%s1 + $0x2d0] sm:$0xff]
        %v431 = vld [vmem:[%s1 + $0x2d8] sm:$0xff]
        %v432 = vld [vmem:[%s1 + $0x2e0] sm:$0xff]
        %v433 = vld [vmem:[%s1 + $0x2e8] sm:$0xff]
        %v434 = vld [vmem:[%s1 + $0x2f0] sm:$0xff]
        %v435 = vld [vmem:[%s1 + $0x2f8] sm:$0xff]
        %v436 = vld [vmem:[%s1 + $0x300] sm:$0xff]
        %v437 = vld [vmem:[%s1 + $0x308] sm:$0xff]
        %v438 = vld [vmem:[%s2] sm:$0x1]
        %v440 = vlaneseq
        %v441 = vshrl.u32 %v440, 7
        %v442 = vsub.s32 0, %v441
        %v443 = vrot.slane %v438, %v442
        %vm445 = vcmask 130048
        %v447 = vsel %vm445, %v339, 0
        %449 = vmatprep.subr.mxu0 0.0
        %450 = vmatpush1.msra.mxu0 %v340
        %451 = vmatprep.subr.mxu0 0.0
        %452 = vmatpush1.msra.mxu0 %v341
        %453 = vmatprep.subr.mxu0 0.0
        %454 = vmatpush1.msra.mxu0 %v342
        %455 = vmatprep.subr.mxu0 0.0
        %456 = vmatpush1.msra.mxu0 %v343
        %457 = vmatprep.subr.mxu0 0.0
        %458 = vmatpush1.msra.mxu0 %v344
        %459 = vmatprep.subr.mxu0 0.0
        %460 = vmatpush1.msra.mxu0 %v345
        %461 = vmatprep.subr.mxu0 0.0
        %462 = vmatpush1.msra.mxu0 %v346
        %463 = vmatprep.subr.mxu0 0.0
        %464 = vmatpush1.msra.mxu0 %v347
        %465 = vmatprep.subr.mxu0 0.0
        %466 = vmatpush1.msra.mxu0 %v348
        %467 = vmatprep.subr.mxu0 0.0
        %468 = vmatpush1.msra.mxu0 %v349
        %469 = vmatprep.subr.mxu0 0.0
        %470 = vmatpush1.msra.mxu0 %v350
        %471 = vmatprep.subr.mxu0 0.0
        %472 = vmatpush1.msra.mxu0 %v351
        %473 = vmatprep.subr.mxu0 0.0
        %474 = vmatpush1.msra.mxu0 %v352
        %475 = vmatprep.subr.mxu0 0.0
        %476 = vmatpush1.msra.mxu0 %v353
        %477 = vmatprep.subr.mxu0 0.0
        %478 = vmatpush1.msra.mxu0 %v354
        %479 = vmatprep.subr.mxu0 0.0
        %480 = vmatpush1.msra.mxu0 %v355
        %481 = vmatprep.subr.mxu0 0.0
        %482 = vmatpush1.msra.mxu0 %v356
        %483 = vmatprep.subr.mxu0 0.0
        %484 = vmatpush1.msra.mxu0 %v357
        %485 = vmatprep.subr.mxu0 0.0
        %486 = vmatpush1.msra.mxu0 %v358
        %487 = vmatprep.subr.mxu0 0.0
        %488 = vmatpush1.msra.mxu0 %v359
        %489 = vmatprep.subr.mxu0 0.0
        %490 = vmatpush1.msra.mxu0 %v360
        %491 = vmatprep.subr.mxu0 0.0
        %492 = vmatpush1.msra.mxu0 %v361
        %493 = vmatprep.subr.mxu0 0.0
        %494 = vmatpush1.msra.mxu0 %v362
        %495 = vmatprep.subr.mxu0 0.0
        %496 = vmatpush1.msra.mxu0 %v363
        %497 = vmatprep.subr.mxu0 0.0
        %498 = vmatpush1.msra.mxu0 %v364
        %499 = vmatprep.subr.mxu0 0.0
        %500 = vmatpush1.msra.mxu0 %v365
        %501 = vmatprep.subr.mxu0 0.0
        %502 = vmatpush1.msra.mxu0 %v366
        %503 = vmatprep.subr.mxu0 0.0
        %504 = vmatpush1.msra.mxu0 %v367
        %505 = vmatprep.subr.mxu0 0.0
        %506 = vmatpush1.msra.mxu0 %v368
        %507 = vmatprep.subr.mxu0 0.0
        %508 = vmatpush1.msra.mxu0 %v369
        %509 = vmatprep.subr.mxu0 0.0
        %510 = vmatpush1.msra.mxu0 %v370
        %511 = vmatprep.subr.mxu0 0.0
        %512 = vmatpush1.msra.mxu0 %v371
        %513 = vmatprep.mubr.f32.mxu0 %v334
        %514 = vmatmul.mubr.f32.gmra.mrb[0].mxu0 %v333
        %v515 = vpop.f32.mrb[0].mxu0
        %v516 = vadd.f32 %v443, %v515
        %v517 = vpop.f32.mrb[0].mxu0
        %518 = vdwg.mxu0
        %519 = vmatprep.subr.mxu0 0.0
        %520 = vmatpush1.msra.mxu0 %v372
        %521 = vmatprep.subr.mxu0 0.0
        %522 = vmatpush1.msra.mxu0 %v373
        %523 = vmatprep.subr.mxu0 0.0
        %524 = vmatpush1.msra.mxu0 %v374
        %525 = vmatprep.subr.mxu0 0.0
        %526 = vmatpush1.msra.mxu0 %v375
        %527 = vmatprep.subr.mxu0 0.0
        %528 = vmatpush1.msra.mxu0 %v376
        %529 = vmatprep.subr.mxu0 0.0
        %530 = vmatpush1.msra.mxu0 %v377
        %531 = vmatprep.subr.mxu0 0.0
        %532 = vmatpush1.msra.mxu0 %v378
        %533 = vmatprep.subr.mxu0 0.0
        %534 = vmatpush1.msra.mxu0 %v379
        %535 = vmatprep.subr.mxu0 0.0
        %536 = vmatpush1.msra.mxu0 %v380
        %537 = vmatprep.subr.mxu0 0.0
        %538 = vmatpush1.msra.mxu0 %v381
        %539 = vmatprep.subr.mxu0 0.0
        %540 = vmatpush1.msra.mxu0 %v382
        %541 = vmatprep.subr.mxu0 0.0
        %542 = vmatpush1.msra.mxu0 %v383
        %543 = vmatprep.subr.mxu0 0.0
        %544 = vmatpush1.msra.mxu0 %v384
        %545 = vmatprep.subr.mxu0 0.0
        %546 = vmatpush1.msra.mxu0 %v385
        %547 = vmatprep.subr.mxu0 0.0
        %548 = vmatpush1.msra.mxu0 %v386
        %549 = vmatprep.subr.mxu0 0.0
        %550 = vmatpush1.msra.mxu0 %v387
        %551 = vmatprep.subr.mxu0 0.0
        %552 = vmatpush1.msra.mxu0 %v388
        %553 = vmatprep.subr.mxu0 0.0
        %554 = vmatpush1.msra.mxu0 %v389
        %555 = vmatprep.subr.mxu0 0.0
        %556 = vmatpush1.msra.mxu0 %v390
        %557 = vmatprep.subr.mxu0 0.0
        %558 = vmatpush1.msra.mxu0 %v391
        %559 = vmatprep.subr.mxu0 0.0
        %560 = vmatpush1.msra.mxu0 %v392
        %561 = vmatprep.subr.mxu0 0.0
        %562 = vmatpush1.msra.mxu0 %v393
        %563 = vmatprep.subr.mxu0 0.0
        %564 = vmatpush1.msra.mxu0 %v394
        %565 = vmatprep.subr.mxu0 0.0
        %566 = vmatpush1.msra.mxu0 %v395
        %567 = vmatprep.subr.mxu0 0.0
        %568 = vmatpush1.msra.mxu0 %v396
        %569 = vmatprep.subr.mxu0 0.0
        %570 = vmatpush1.msra.mxu0 %v397
        %571 = vmatprep.subr.mxu0 0.0
        %572 = vmatpush1.msra.mxu0 %v398
        %573 = vmatprep.subr.mxu0 0.0
        %574 = vmatpush1.msra.mxu0 %v399
        %575 = vmatprep.subr.mxu0 0.0
        %576 = vmatpush1.msra.mxu0 %v400
        %577 = vmatprep.subr.mxu0 0.0
        %578 = vmatpush1.msra.mxu0 %v401
        %579 = vmatprep.subr.mxu0 0.0
        %580 = vmatpush1.msra.mxu0 %v402
        %581 = vmatprep.subr.mxu0 0.0
        %582 = vmatpush1.msra.mxu0 %v403
        %583 = vmatprep.mubr.f32.mxu0 %v336
        %584 = vmatmul.mubr.f32.gmra.mrb[0].mxu0 %v335
        %v585 = vpop.f32.mrb[0].mxu0
        %v586 = vadd.f32 %v516, %v585
        %v587 = vpop.f32.mrb[0].mxu0
        %588 = vdwg.mxu0
        %589 = vmatprep.subr.mxu0 0.0
        %590 = vmatpush1.msra.mxu0 %v404
        %591 = vmatprep.subr.mxu0 0.0
        %592 = vmatpush1.msra.mxu0 %v405
        %593 = vmatprep.subr.mxu0 0.0
        %594 = vmatpush1.msra.mxu0 %v406
        %595 = vmatprep.subr.mxu0 0.0
        %596 = vmatpush1.msra.mxu0 %v407
        %597 = vmatprep.subr.mxu0 0.0
        %598 = vmatpush1.msra.mxu0 %v408
        %599 = vmatprep.subr.mxu0 0.0
        %600 = vmatpush1.msra.mxu0 %v409
        %601 = vmatprep.subr.mxu0 0.0
        %602 = vmatpush1.msra.mxu0 %v410
        %603 = vmatprep.subr.mxu0 0.0
        %604 = vmatpush1.msra.mxu0 %v411
        %605 = vmatprep.subr.mxu0 0.0
        %606 = vmatpush1.msra.mxu0 %v412
        %607 = vmatprep.subr.mxu0 0.0
        %608 = vmatpush1.msra.mxu0 %v413
        %609 = vmatprep.subr.mxu0 0.0
        %610 = vmatpush1.msra.mxu0 %v414
        %611 = vmatprep.subr.mxu0 0.0
        %612 = vmatpush1.msra.mxu0 %v415
        %613 = vmatprep.subr.mxu0 0.0
        %614 = vmatpush1.msra.mxu0 %v416
        %615 = vmatprep.subr.mxu0 0.0
        %616 = vmatpush1.msra.mxu0 %v417
        %617 = vmatprep.subr.mxu0 0.0
        %618 = vmatpush1.msra.mxu0 %v418
        %619 = vmatprep.subr.mxu0 0.0
        %620 = vmatpush1.msra.mxu0 %v419
        %621 = vmatprep.subr.mxu0 0.0
        %622 = vmatpush1.msra.mxu0 %v420
        %623 = vmatprep.subr.mxu0 0.0
        %624 = vmatpush1.msra.mxu0 %v421
        %625 = vmatprep.subr.mxu0 0.0
        %626 = vmatpush1.msra.mxu0 %v422
        %627 = vmatprep.subr.mxu0 0.0
        %628 = vmatpush1.msra.mxu0 %v423
        %629 = vmatprep.subr.mxu0 0.0
        %630 = vmatpush1.msra.mxu0 %v424
        %631 = vmatprep.subr.mxu0 0.0
        %632 = vmatpush1.msra.mxu0 %v425
        %633 = vmatprep.subr.mxu0 0.0
        %634 = vmatpush1.msra.mxu0 %v426
        %635 = vmatprep.subr.mxu0 0.0
        %636 = vmatpush1.msra.mxu0 %v427
        %637 = vmatprep.subr.mxu0 0.0
        %638 = vmatpush1.msra.mxu0 %v428
        %639 = vmatprep.subr.mxu0 0.0
        %640 = vmatpush1.msra.mxu0 %v429
        %641 = vmatprep.subr.mxu0 0.0
        %642 = vmatpush1.msra.mxu0 %v430
        %643 = vmatprep.subr.mxu0 0.0
        %644 = vmatpush1.msra.mxu0 %v431
        %645 = vmatprep.subr.mxu0 0.0
        %646 = vmatpush1.msra.mxu0 %v432
        %647 = vmatprep.subr.mxu0 0.0
        %648 = vmatpush1.msra.mxu0 %v433
        %649 = vmatprep.subr.mxu0 0.0
        %650 = vmatpush1.msra.mxu0 %v434
        %651 = vmatprep.subr.mxu0 0.0
        %652 = vmatpush1.msra.mxu0 %v435
        %653 = vmatprep.mubr.f32.mxu0 %v338
        %654 = vmatmul.mubr.f32.gmra.mrb[0].mxu0 %v337
        %v655 = vpop.f32.mrb[0].mxu0
        %v656 = vadd.f32 %v586, %v655
        %v657 = vpop.f32.mrb[0].mxu0
        %658 = vdwg.mxu0
        %659 = vmatprep.subr.mxu0 0.0
        %660 = vmatpush1.msra.mxu0 %v436
        %661 = vmatprep.subr.mxu0 0.0
        %662 = vmatpush1.msra.mxu0 %v437
        %663 = vmatprep.subr.mxu0 0.0
        %664 = vmatpush1.msra.mxu0 0.0
        %665 = vmatprep.subr.mxu0 0.0
        %666 = vmatpush1.msra.mxu0 0.0
        %667 = vmatprep.subr.mxu0 0.0
        %668 = vmatpush1.msra.mxu0 0.0
        %669 = vmatprep.subr.mxu0 0.0
        %670 = vmatpush1.msra.mxu0 0.0
        %671 = vmatprep.subr.mxu0 0.0
        %672 = vmatpush1.msra.mxu0 0.0
        %673 = vmatprep.subr.mxu0 0.0
        %674 = vmatpush1.msra.mxu0 0.0
        %675 = vmatprep.subr.mxu0 0.0
        %676 = vmatpush1.msra.mxu0 0.0
        %677 = vmatprep.subr.mxu0 0.0
        %678 = vmatpush1.msra.mxu0 0.0
        %679 = vmatprep.subr.mxu0 0.0
        %680 = vmatpush1.msra.mxu0 0.0
        %681 = vmatprep.subr.mxu0 0.0
        %682 = vmatpush1.msra.mxu0 0.0
        %683 = vmatprep.subr.mxu0 0.0
        %684 = vmatpush1.msra.mxu0 0.0
        %685 = vmatprep.subr.mxu0 0.0
        %686 = vmatpush1.msra.mxu0 0.0
        %687 = vmatprep.subr.mxu0 0.0
        %688 = vmatpush1.msra.mxu0 0.0
        %689 = vmatprep.subr.mxu0 0.0
        %690 = vmatpush1.msra.mxu0 0.0
        %691 = vmatprep.subr.mxu0 0.0
        %692 = vmatpush1.msra.mxu0 0.0
        %693 = vmatprep.subr.mxu0 0.0
        %694 = vmatpush1.msra.mxu0 0.0
        %695 = vmatprep.subr.mxu0 0.0
        %696 = vmatpush1.msra.mxu0 0.0
        %697 = vmatprep.subr.mxu0 0.0
        %698 = vmatpush1.msra.mxu0 0.0
        %699 = vmatprep.subr.mxu0 0.0
        %700 = vmatpush1.msra.mxu0 0.0
        %701 = vmatprep.subr.mxu0 0.0
        %702 = vmatpush1.msra.mxu0 0.0
        %703 = vmatprep.subr.mxu0 0.0
        %704 = vmatpush1.msra.mxu0 0.0
        %705 = vmatprep.subr.mxu0 0.0
        %706 = vmatpush1.msra.mxu0 0.0
        %707 = vmatprep.subr.mxu0 0.0
        %708 = vmatpush1.msra.mxu0 0.0
        %709 = vmatprep.subr.mxu0 0.0
        %710 = vmatpush1.msra.mxu0 0.0
        %711 = vmatprep.subr.mxu0 0.0
        %712 = vmatpush1.msra.mxu0 0.0
        %713 = vmatprep.subr.mxu0 0.0
        %714 = vmatpush1.msra.mxu0 0.0
        %715 = vmatprep.subr.mxu0 0.0
        %716 = vmatpush1.msra.mxu0 0.0
        %717 = vmatprep.subr.mxu0 0.0
        %718 = vmatpush1.msra.mxu0 0.0
        %719 = vmatprep.subr.mxu0 0.0
        %720 = vmatpush1.msra.mxu0 0.0
        %721 = vmatprep.subr.mxu0 0.0
        %722 = vmatpush1.msra.mxu0 0.0
        %723 = vmatprep.mubr.f32.mxu0 0.0
        %724 = vmatmul.mubr.f32.gmra.mrb[0].mxu0 %v447
        %v725 = vpop.f32.mrb[0].mxu0
        %v726 = vadd.f32 %v656, %v725
        %v727 = vpop.f32.mrb[0].mxu0
        %728 = vdwg.mxu0
        %vm729 = vcmp.gt.f32.partialorder %v726, 0.0
        %v730 = vmul.f32 %v726, 1.442695
        %v731 = vpow.pop %v730
        %v732 = vsub.f32 %v731, 1.0
        %v733 = vsel %vm729, %v726, %v732
        %734 = vadd.xlane.f32.xlu0 %v733
        %v735 = vpop.xlane.xlu0 %734
        %v736 = vmul.f32 %v735, 0.0078125
        %v737 = vsub.f32 %v733, %v736
        %v738 = vmul.f32 %v737, %v737
        %739 = vadd.xlane.f32.xlu0 %v738
        %v740 = vpop.xlane.xlu0 %739
        %v741 = vmul.f32 %v740, 0.0078125
        %v742 = vadd.f32 %v741, 1e-05
        %v743 = vrsqrt.pop %v742
        %v744 = vmul.f32 %v737, %v743
        %v746 = vlaneseq
        %v747 = vshrl.u32 %v746, 7
        %v748 = vsub.s32 0, %v747
        %v749 = vrot.slane %v331, %v748
        %v751 = vmul.f32 %v744, %v749
        %v753 = vlaneseq
        %v754 = vshrl.u32 %v753, 7
        %v755 = vsub.s32 0, %v754
        %v756 = vrot.slane %v332, %v755
        %v758 = vadd.f32 %v751, %v756
        %v759 = vld [vmem:[%s3] sm:$0xff]
        %v760 = vld [vmem:[%s3 + $0x8] sm:$0xff]
        %v761 = vld [vmem:[%s3 + $0x10] sm:$0xff]
        %v762 = vld [vmem:[%s3 + $0x18] sm:$0xff]
        %v763 = vld [vmem:[%s3 + $0x20] sm:$0xff]
        %v764 = vld [vmem:[%s3 + $0x28] sm:$0xff]
        %v765 = vld [vmem:[%s3 + $0x30] sm:$0xff]
        %v766 = vld [vmem:[%s3 + $0x38] sm:$0xff]
        %v767 = vld [vmem:[%s3 + $0x40] sm:$0xff]
        %v768 = vld [vmem:[%s3 + $0x48] sm:$0xff]
        %v769 = vld [vmem:[%s3 + $0x50] sm:$0xff]
        %v770 = vld [vmem:[%s3 + $0x58] sm:$0xff]
        %v771 = vld [vmem:[%s3 + $0x60] sm:$0xff]
        %v772 = vld [vmem:[%s3 + $0x68] sm:$0xff]
        %v773 = vld [vmem:[%s3 + $0x70] sm:$0xff]
        %v774 = vld [vmem:[%s3 + $0x78] sm:$0xff]
        %v775 = vld [vmem:[%s4] sm:$0x1]
        %v777 = vlaneseq
        %v778 = vshrl.u32 %v777, 7
        %v779 = vsub.s32 0, %v778
        %v780 = vrot.slane %v775, %v779
        %782 = vmatprep.subr.mxu0 0.0
        %783 = vmatpush1.msra.mxu0 %v759
        %784 = vmatprep.subr.mxu0 0.0
        %785 = vmatpush1.msra.mxu0 %v760
        %786 = vmatprep.subr.mxu0 0.0
        %787 = vmatpush1.msra.mxu0 %v761
        %788 = vmatprep.subr.mxu0 0.0
        %789 = vmatpush1.msra.mxu0 %v762
        %790 = vmatprep.subr.mxu0 0.0
        %791 = vmatpush1.msra.mxu0 %v763
        %792 = vmatprep.subr.mxu0 0.0
        %793 = vmatpush1.msra.mxu0 %v764
        %794 = vmatprep.subr.mxu0 0.0
        %795 = vmatpush1.msra.mxu0 %v765
        %796 = vmatprep.subr.mxu0 0.0
        %797 = vmatpush1.msra.mxu0 %v766
        %798 = vmatprep.subr.mxu0 0.0
        %799 = vmatpush1.msra.mxu0 %v767
        %800 = vmatprep.subr.mxu0 0.0
        %801 = vmatpush1.msra.mxu0 %v768
        %802 = vmatprep.subr.mxu0 0.0
        %803 = vmatpush1.msra.mxu0 %v769
        %804 = vmatprep.subr.mxu0 0.0
        %805 = vmatpush1.msra.mxu0 %v770
        %806 = vmatprep.subr.mxu0 0.0
        %807 = vmatpush1.msra.mxu0 %v771
        %808 = vmatprep.subr.mxu0 0.0
        %809 = vmatpush1.msra.mxu0 %v772
        %810 = vmatprep.subr.mxu0 0.0
        %811 = vmatpush1.msra.mxu0 %v773
        %812 = vmatprep.subr.mxu0 0.0
        %813 = vmatpush1.msra.mxu0 %v774
        %814 = vmatprep.subr.mxu0 0.0
        %815 = vmatpush1.msra.mxu0 0.0
        %816 = vmatprep.subr.mxu0 0.0
        %817 = vmatpush1.msra.mxu0 0.0
        %818 = vmatprep.subr.mxu0 0.0
        %819 = vmatpush1.msra.mxu0 0.0
        %820 = vmatprep.subr.mxu0 0.0
        %821 = vmatpush1.msra.mxu0 0.0
        %822 = vmatprep.subr.mxu0 0.0
        %823 = vmatpush1.msra.mxu0 0.0
        %824 = vmatprep.subr.mxu0 0.0
        %825 = vmatpush1.msra.mxu0 0.0
        %826 = vmatprep.subr.mxu0 0.0
        %827 = vmatpush1.msra.mxu0 0.0
        %828 = vmatprep.subr.mxu0 0.0
        %829 = vmatpush1.msra.mxu0 0.0
        %830 = vmatprep.subr.mxu0 0.0
        %831 = vmatpush1.msra.mxu0 0.0
        %832 = vmatprep.subr.mxu0 0.0
        %833 = vmatpush1.msra.mxu0 0.0
        %834 = vmatprep.subr.mxu0 0.0
        %835 = vmatpush1.msra.mxu0 0.0
        %836 = vmatprep.subr.mxu0 0.0
        %837 = vmatpush1.msra.mxu0 0.0
        %838 = vmatprep.subr.mxu0 0.0
        %839 = vmatpush1.msra.mxu0 0.0
        %840 = vmatprep.subr.mxu0 0.0
        %841 = vmatpush1.msra.mxu0 0.0
        %842 = vmatprep.subr.mxu0 0.0
        %843 = vmatpush1.msra.mxu0 0.0
        %844 = vmatprep.subr.mxu0 0.0
        %845 = vmatpush1.msra.mxu0 0.0
        %846 = vmatprep.mubr.f32.mxu0 0.0
        %847 = vmatmul.mubr.f32.gmra.mrb[0].mxu0 %v758
        %v848 = vpop.f32.mrb[0].mxu0
        %v849 = vadd.f32 %v780, %v848
        %v850 = vpop.f32.mrb[0].mxu0
        %851 = vdwg.mxu0
        %vm852 = vcmp.gt.f32.partialorder %v849, 0.0
        %v853 = vmul.f32 %v849, 1.442695
        %v854 = vpow.pop %v853
        %v855 = vsub.f32 %v854, 1.0
        %v856 = vsel %vm852, %v849, %v855
        %857 = vadd.xlane.f32.xlu0 %v856
        %v858 = vpop.xlane.xlu0 %857
        %v859 = vmul.f32 %v858, 0.0078125
        %v860 = vsub.f32 %v856, %v859
        %v861 = vmul.f32 %v860, %v860
        %862 = vadd.xlane.f32.xlu0 %v861
        %v863 = vpop.xlane.xlu0 %862
        %v864 = vmul.f32 %v863, 0.0078125
        %v865 = vadd.f32 %v864, 1e-05
        %v866 = vrsqrt.pop %v865
        %v867 = vmul.f32 %v860, %v866
        %v868 = vmul.f32 %v867, %v749
        %v869 = vadd.f32 %v868, %v756
        %s870 = scalar_lea.vmem %s3, 128
        %v871 = vld [vmem:[%s870] sm:$0xff]
        %v872 = vld [vmem:[%s870 + $0x8] sm:$0xff]
        %v873 = vld [vmem:[%s870 + $0x10] sm:$0xff]
        %v874 = vld [vmem:[%s870 + $0x18] sm:$0xff]
        %v875 = vld [vmem:[%s870 + $0x20] sm:$0xff]
        %v876 = vld [vmem:[%s870 + $0x28] sm:$0xff]
        %v877 = vld [vmem:[%s870 + $0x30] sm:$0xff]
        %v878 = vld [vmem:[%s870 + $0x38] sm:$0xff]
        %v879 = vld [vmem:[%s870 + $0x40] sm:$0xff]
        %v880 = vld [vmem:[%s870 + $0x48] sm:$0xff]
        %v881 = vld [vmem:[%s870 + $0x50] sm:$0xff]
        %v882 = vld [vmem:[%s870 + $0x58] sm:$0xff]
        %v883 = vld [vmem:[%s870 + $0x60] sm:$0xff]
        %v884 = vld [vmem:[%s870 + $0x68] sm:$0xff]
        %v885 = vld [vmem:[%s870 + $0x70] sm:$0xff]
        %v886 = vld [vmem:[%s870 + $0x78] sm:$0xff]
        %s887 = scalar_lea.vmem %s4, 1
        %v888 = vld [vmem:[%s887] sm:$0x1]
        %v890 = vlaneseq
        %v891 = vshrl.u32 %v890, 7
        %v892 = vsub.s32 0, %v891
        %v893 = vrot.slane %v888, %v892
        %895 = vmatprep.subr.mxu0 0.0
        %896 = vmatpush1.msra.mxu0 %v871
        %897 = vmatprep.subr.mxu0 0.0
        %898 = vmatpush1.msra.mxu0 %v872
        %899 = vmatprep.subr.mxu0 0.0
        %900 = vmatpush1.msra.mxu0 %v873
        %901 = vmatprep.subr.mxu0 0.0
        %902 = vmatpush1.msra.mxu0 %v874
        %903 = vmatprep.subr.mxu0 0.0
        %904 = vmatpush1.msra.mxu0 %v875
        %905 = vmatprep.subr.mxu0 0.0
        %906 = vmatpush1.msra.mxu0 %v876
        %907 = vmatprep.subr.mxu0 0.0
        %908 = vmatpush1.msra.mxu0 %v877
        %909 = vmatprep.subr.mxu0 0.0
        %910 = vmatpush1.msra.mxu0 %v878
        %911 = vmatprep.subr.mxu0 0.0
        %912 = vmatpush1.msra.mxu0 %v879
        %913 = vmatprep.subr.mxu0 0.0
        %914 = vmatpush1.msra.mxu0 %v880
        %915 = vmatprep.subr.mxu0 0.0
        %916 = vmatpush1.msra.mxu0 %v881
        %917 = vmatprep.subr.mxu0 0.0
        %918 = vmatpush1.msra.mxu0 %v882
        %919 = vmatprep.subr.mxu0 0.0
        %920 = vmatpush1.msra.mxu0 %v883
        %921 = vmatprep.subr.mxu0 0.0
        %922 = vmatpush1.msra.mxu0 %v884
        %923 = vmatprep.subr.mxu0 0.0
        %924 = vmatpush1.msra.mxu0 %v885
        %925 = vmatprep.subr.mxu0 0.0
        %926 = vmatpush1.msra.mxu0 %v886
        %927 = vmatprep.subr.mxu0 0.0
        %928 = vmatpush1.msra.mxu0 0.0
        %929 = vmatprep.subr.mxu0 0.0
        %930 = vmatpush1.msra.mxu0 0.0
        %931 = vmatprep.subr.mxu0 0.0
        %932 = vmatpush1.msra.mxu0 0.0
        %933 = vmatprep.subr.mxu0 0.0
        %934 = vmatpush1.msra.mxu0 0.0
        %935 = vmatprep.subr.mxu0 0.0
        %936 = vmatpush1.msra.mxu0 0.0
        %937 = vmatprep.subr.mxu0 0.0
        %938 = vmatpush1.msra.mxu0 0.0
        %939 = vmatprep.subr.mxu0 0.0
        %940 = vmatpush1.msra.mxu0 0.0
        %941 = vmatprep.subr.mxu0 0.0
        %942 = vmatpush1.msra.mxu0 0.0
        %943 = vmatprep.subr.mxu0 0.0
        %944 = vmatpush1.msra.mxu0 0.0
        %945 = vmatprep.subr.mxu0 0.0
        %946 = vmatpush1.msra.mxu0 0.0
        %947 = vmatprep.subr.mxu0 0.0
        %948 = vmatpush1.msra.mxu0 0.0
        %949 = vmatprep.subr.mxu0 0.0
        %950 = vmatpush1.msra.mxu0 0.0
        %951 = vmatprep.subr.mxu0 0.0
        %952 = vmatpush1.msra.mxu0 0.0
        %953 = vmatprep.subr.mxu0 0.0
        %954 = vmatpush1.msra.mxu0 0.0
        %955 = vmatprep.subr.mxu0 0.0
        %956 = vmatpush1.msra.mxu0 0.0
        %957 = vmatprep.subr.mxu0 0.0
        %958 = vmatpush1.msra.mxu0 0.0
        %959 = vmatprep.mubr.f32.mxu0 0.0
        %960 = vmatmul.mubr.f32.gmra.mrb[0].mxu0 %v869
        %v961 = vpop.f32.mrb[0].mxu0
        %v962 = vadd.f32 %v893, %v961
        %v963 = vpop.f32.mrb[0].mxu0
        %964 = vdwg.mxu0
        %vm965 = vcmp.gt.f32.partialorder %v962, 0.0
        %v966 = vmul.f32 %v962, 1.442695
        %v967 = vpow.pop %v966
        %v968 = vsub.f32 %v967, 1.0
        %v969 = vsel %vm965, %v962, %v968
        %970 = vadd.xlane.f32.xlu0 %v969
        %v971 = vpop.xlane.xlu0 %970
        %v972 = vmul.f32 %v971, 0.0078125
        %v973 = vsub.f32 %v969, %v972
        %v974 = vmul.f32 %v973, %v973
        %975 = vadd.xlane.f32.xlu0 %v974
        %v976 = vpop.xlane.xlu0 %975
        %v977 = vmul.f32 %v976, 0.0078125
        %v978 = vadd.f32 %v977, 1e-05
        %v979 = vrsqrt.pop %v978
        %v980 = vmul.f32 %v973, %v979
        %v981 = vmul.f32 %v980, %v749
        %v982 = vadd.f32 %v981, %v756
        %s983 = scalar_lea.vmem %s3, 256
        %v984 = vld [vmem:[%s983] sm:$0xff]
        %v985 = vld [vmem:[%s983 + $0x8] sm:$0xff]
        %v986 = vld [vmem:[%s983 + $0x10] sm:$0xff]
        %v987 = vld [vmem:[%s983 + $0x18] sm:$0xff]
        %v988 = vld [vmem:[%s983 + $0x20] sm:$0xff]
        %v989 = vld [vmem:[%s983 + $0x28] sm:$0xff]
        %v990 = vld [vmem:[%s983 + $0x30] sm:$0xff]
        %v991 = vld [vmem:[%s983 + $0x38] sm:$0xff]
        %v992 = vld [vmem:[%s983 + $0x40] sm:$0xff]
        %v993 = vld [vmem:[%s983 + $0x48] sm:$0xff]
        %v994 = vld [vmem:[%s983 + $0x50] sm:$0xff]
        %v995 = vld [vmem:[%s983 + $0x58] sm:$0xff]
        %v996 = vld [vmem:[%s983 + $0x60] sm:$0xff]
        %v997 = vld [vmem:[%s983 + $0x68] sm:$0xff]
        %v998 = vld [vmem:[%s983 + $0x70] sm:$0xff]
        %v999 = vld [vmem:[%s983 + $0x78] sm:$0xff]
        %s1000 = scalar_lea.vmem %s4, 2
        %v1001 = vld [vmem:[%s1000] sm:$0x1]
        %v1003 = vlaneseq
        %v1004 = vshrl.u32 %v1003, 7
        %v1005 = vsub.s32 0, %v1004
        %v1006 = vrot.slane %v1001, %v1005
        %1008 = vmatprep.subr.mxu0 0.0
        %1009 = vmatpush1.msra.mxu0 %v984
        %1010 = vmatprep.subr.mxu0 0.0
        %1011 = vmatpush1.msra.mxu0 %v985
        %1012 = vmatprep.subr.mxu0 0.0
        %1013 = vmatpush1.msra.mxu0 %v986
        %1014 = vmatprep.subr.mxu0 0.0
        %1015 = vmatpush1.msra.mxu0 %v987
        %1016 = vmatprep.subr.mxu0 0.0
        %1017 = vmatpush1.msra.mxu0 %v988
        %1018 = vmatprep.subr.mxu0 0.0
        %1019 = vmatpush1.msra.mxu0 %v989
        %1020 = vmatprep.subr.mxu0 0.0
        %1021 = vmatpush1.msra.mxu0 %v990
        %1022 = vmatprep.subr.mxu0 0.0
        %1023 = vmatpush1.msra.mxu0 %v991
        %1024 = vmatprep.subr.mxu0 0.0
        %1025 = vmatpush1.msra.mxu0 %v992
        %1026 = vmatprep.subr.mxu0 0.0
        %1027 = vmatpush1.msra.mxu0 %v993
        %1028 = vmatprep.subr.mxu0 0.0
        %1029 = vmatpush1.msra.mxu0 %v994
        %1030 = vmatprep.subr.mxu0 0.0
        %1031 = vmatpush1.msra.mxu0 %v995
        %1032 = vmatprep.subr.mxu0 0.0
        %1033 = vmatpush1.msra.mxu0 %v996
        %1034 = vmatprep.subr.mxu0 0.0
        %1035 = vmatpush1.msra.mxu0 %v997
        %1036 = vmatprep.subr.mxu0 0.0
        %1037 = vmatpush1.msra.mxu0 %v998
        %1038 = vmatprep.subr.mxu0 0.0
        %1039 = vmatpush1.msra.mxu0 %v999
        %1040 = vmatprep.subr.mxu0 0.0
        %1041 = vmatpush1.msra.mxu0 0.0
        %1042 = vmatprep.subr.mxu0 0.0
        %1043 = vmatpush1.msra.mxu0 0.0
        %1044 = vmatprep.subr.mxu0 0.0
        %1045 = vmatpush1.msra.mxu0 0.0
        %1046 = vmatprep.subr.mxu0 0.0
        %1047 = vmatpush1.msra.mxu0 0.0
        %1048 = vmatprep.subr.mxu0 0.0
        %1049 = vmatpush1.msra.mxu0 0.0
        %1050 = vmatprep.subr.mxu0 0.0
        %1051 = vmatpush1.msra.mxu0 0.0
        %1052 = vmatprep.subr.mxu0 0.0
        %1053 = vmatpush1.msra.mxu0 0.0
        %1054 = vmatprep.subr.mxu0 0.0
        %1055 = vmatpush1.msra.mxu0 0.0
        %1056 = vmatprep.subr.mxu0 0.0
        %1057 = vmatpush1.msra.mxu0 0.0
        %1058 = vmatprep.subr.mxu0 0.0
        %1059 = vmatpush1.msra.mxu0 0.0
        %1060 = vmatprep.subr.mxu0 0.0
        %1061 = vmatpush1.msra.mxu0 0.0
        %1062 = vmatprep.subr.mxu0 0.0
        %1063 = vmatpush1.msra.mxu0 0.0
        %1064 = vmatprep.subr.mxu0 0.0
        %1065 = vmatpush1.msra.mxu0 0.0
        %1066 = vmatprep.subr.mxu0 0.0
        %1067 = vmatpush1.msra.mxu0 0.0
        %1068 = vmatprep.subr.mxu0 0.0
        %1069 = vmatpush1.msra.mxu0 0.0
        %1070 = vmatprep.subr.mxu0 0.0
        %1071 = vmatpush1.msra.mxu0 0.0
        %1072 = vmatprep.mubr.f32.mxu0 0.0
        %1073 = vmatmul.mubr.f32.gmra.mrb[0].mxu0 %v982
        %v1074 = vpop.f32.mrb[0].mxu0
        %v1075 = vadd.f32 %v1006, %v1074
        %v1076 = vpop.f32.mrb[0].mxu0
        %1077 = vdwg.mxu0
        %vm1078 = vcmp.gt.f32.partialorder %v1075, 0.0
        %v1079 = vmul.f32 %v1075, 1.442695
        %v1080 = vpow.pop %v1079
        %v1081 = vsub.f32 %v1080, 1.0
        %v1082 = vsel %vm1078, %v1075, %v1081
        %1083 = vadd.xlane.f32.xlu0 %v1082
        %v1084 = vpop.xlane.xlu0 %1083
        %v1085 = vmul.f32 %v1084, 0.0078125
        %v1086 = vsub.f32 %v1082, %v1085
        %v1087 = vmul.f32 %v1086, %v1086
        %1088 = vadd.xlane.f32.xlu0 %v1087
        %v1089 = vpop.xlane.xlu0 %1088
        %v1090 = vmul.f32 %v1089, 0.0078125
        %v1091 = vadd.f32 %v1090, 1e-05
        %v1092 = vrsqrt.pop %v1091
        %v1093 = vmul.f32 %v1086, %v1092
        %v1094 = vmul.f32 %v1093, %v749
        %v1095 = vadd.f32 %v1094, %v756
        %s1096 = scalar_lea.vmem %s3, 384
        %v1097 = vld [vmem:[%s1096] sm:$0xff]
        %v1098 = vld [vmem:[%s1096 + $0x8] sm:$0xff]
        %v1099 = vld [vmem:[%s1096 + $0x10] sm:$0xff]
        %v1100 = vld [vmem:[%s1096 + $0x18] sm:$0xff]
        %v1101 = vld [vmem:[%s1096 + $0x20] sm:$0xff]
        %v1102 = vld [vmem:[%s1096 + $0x28] sm:$0xff]
        %v1103 = vld [vmem:[%s1096 + $0x30] sm:$0xff]
        %v1104 = vld [vmem:[%s1096 + $0x38] sm:$0xff]
        %v1105 = vld [vmem:[%s1096 + $0x40] sm:$0xff]
        %v1106 = vld [vmem:[%s1096 + $0x48] sm:$0xff]
        %v1107 = vld [vmem:[%s1096 + $0x50] sm:$0xff]
        %v1108 = vld [vmem:[%s1096 + $0x58] sm:$0xff]
        %v1109 = vld [vmem:[%s1096 + $0x60] sm:$0xff]
        %v1110 = vld [vmem:[%s1096 + $0x68] sm:$0xff]
        %v1111 = vld [vmem:[%s1096 + $0x70] sm:$0xff]
        %v1112 = vld [vmem:[%s1096 + $0x78] sm:$0xff]
        %s1113 = scalar_lea.vmem %s4, 3
        %v1114 = vld [vmem:[%s1113] sm:$0x1]
        %v1116 = vlaneseq
        %v1117 = vshrl.u32 %v1116, 7
        %v1118 = vsub.s32 0, %v1117
        %v1119 = vrot.slane %v1114, %v1118
        %1121 = vmatprep.subr.mxu0 0.0
        %1122 = vmatpush1.msra.mxu0 %v1097
        %1123 = vmatprep.subr.mxu0 0.0
        %1124 = vmatpush1.msra.mxu0 %v1098
        %1125 = vmatprep.subr.mxu0 0.0
        %1126 = vmatpush1.msra.mxu0 %v1099
        %1127 = vmatprep.subr.mxu0 0.0
        %1128 = vmatpush1.msra.mxu0 %v1100
        %1129 = vmatprep.subr.mxu0 0.0
        %1130 = vmatpush1.msra.mxu0 %v1101
        %1131 = vmatprep.subr.mxu0 0.0
        %1132 = vmatpush1.msra.mxu0 %v1102
        %1133 = vmatprep.subr.mxu0 0.0
        %1134 = vmatpush1.msra.mxu0 %v1103
        %1135 = vmatprep.subr.mxu0 0.0
        %1136 = vmatpush1.msra.mxu0 %v1104
        %1137 = vmatprep.subr.mxu0 0.0
        %1138 = vmatpush1.msra.mxu0 %v1105
        %1139 = vmatprep.subr.mxu0 0.0
        %1140 = vmatpush1.msra.mxu0 %v1106
        %1141 = vmatprep.subr.mxu0 0.0
        %1142 = vmatpush1.msra.mxu0 %v1107
        %1143 = vmatprep.subr.mxu0 0.0
        %1144 = vmatpush1.msra.mxu0 %v1108
        %1145 = vmatprep.subr.mxu0 0.0
        %1146 = vmatpush1.msra.mxu0 %v1109
        %1147 = vmatprep.subr.mxu0 0.0
        %1148 = vmatpush1.msra.mxu0 %v1110
        %1149 = vmatprep.subr.mxu0 0.0
        %1150 = vmatpush1.msra.mxu0 %v1111
        %1151 = vmatprep.subr.mxu0 0.0
        %1152 = vmatpush1.msra.mxu0 %v1112
        %1153 = vmatprep.subr.mxu0 0.0
        %1154 = vmatpush1.msra.mxu0 0.0
        %1155 = vmatprep.subr.mxu0 0.0
        %1156 = vmatpush1.msra.mxu0 0.0
        %1157 = vmatprep.subr.mxu0 0.0
        %1158 = vmatpush1.msra.mxu0 0.0
        %1159 = vmatprep.subr.mxu0 0.0
        %1160 = vmatpush1.msra.mxu0 0.0
        %1161 = vmatprep.subr.mxu0 0.0
        %1162 = vmatpush1.msra.mxu0 0.0
        %1163 = vmatprep.subr.mxu0 0.0
        %1164 = vmatpush1.msra.mxu0 0.0
        %1165 = vmatprep.subr.mxu0 0.0
        %1166 = vmatpush1.msra.mxu0 0.0
        %1167 = vmatprep.subr.mxu0 0.0
        %1168 = vmatpush1.msra.mxu0 0.0
        %1169 = vmatprep.subr.mxu0 0.0
        %1170 = vmatpush1.msra.mxu0 0.0
        %1171 = vmatprep.subr.mxu0 0.0
        %1172 = vmatpush1.msra.mxu0 0.0
        %1173 = vmatprep.subr.mxu0 0.0
        %1174 = vmatpush1.msra.mxu0 0.0
        %1175 = vmatprep.subr.mxu0 0.0
        %1176 = vmatpush1.msra.mxu0 0.0
        %1177 = vmatprep.subr.mxu0 0.0
        %1178 = vmatpush1.msra.mxu0 0.0
        %1179 = vmatprep.subr.mxu0 0.0
        %1180 = vmatpush1.msra.mxu0 0.0
        %1181 = vmatprep.subr.mxu0 0.0
        %1182 = vmatpush1.msra.mxu0 0.0
        %1183 = vmatprep.subr.mxu0 0.0
        %1184 = vmatpush1.msra.mxu0 0.0
        %1185 = vmatprep.mubr.f32.mxu0 0.0
        %1186 = vmatmul.mubr.f32.gmra.mrb[0].mxu0 %v1095
        %v1187 = vpop.f32.mrb[0].mxu0
        %v1188 = vadd.f32 %v1119, %v1187
        %v1189 = vpop.f32.mrb[0].mxu0
        %1190 = vdwg.mxu0
        %vm1191 = vcmp.gt.f32.partialorder %v1188, 0.0
        %v1192 = vmul.f32 %v1188, 1.442695
        %v1193 = vpow.pop %v1192
        %v1194 = vsub.f32 %v1193, 1.0
        %v1195 = vsel %vm1191, %v1188, %v1194
        %1196 = vadd.xlane.f32.xlu0 %v1195
        %v1197 = vpop.xlane.xlu0 %1196
        %v1198 = vmul.f32 %v1197, 0.0078125
        %v1199 = vsub.f32 %v1195, %v1198
        %v1200 = vmul.f32 %v1199, %v1199
        %1201 = vadd.xlane.f32.xlu0 %v1200
        %v1202 = vpop.xlane.xlu0 %1201
        %v1203 = vmul.f32 %v1202, 0.0078125
        %v1204 = vadd.f32 %v1203, 1e-05
        %v1205 = vrsqrt.pop %v1204
        %v1206 = vmul.f32 %v1199, %v1205
        %v1207 = vmul.f32 %v1206, %v749
        %v1208 = vadd.f32 %v1207, %v756
        %v1209 = vld [vmem:[%s5] sm:$0xff]
        %v1210 = vld [vmem:[%s5 + $0x8] sm:$0xff]
        %v1211 = vld [vmem:[%s5 + $0x10] sm:$0xff]
        %v1212 = vld [vmem:[%s5 + $0x18] sm:$0xff]
        %v1213 = vld [vmem:[%s5 + $0x20] sm:$0xff]
        %v1214 = vld [vmem:[%s5 + $0x28] sm:$0xff]
        %v1215 = vld [vmem:[%s5 + $0x30] sm:$0xff]
        %v1216 = vld [vmem:[%s5 + $0x38] sm:$0xff]
        %v1217 = vld [vmem:[%s5 + $0x40] sm:$0xff]
        %v1218 = vld [vmem:[%s5 + $0x48] sm:$0xff]
        %v1219 = vld [vmem:[%s5 + $0x50] sm:$0xff]
        %v1220 = vld [vmem:[%s5 + $0x58] sm:$0xff]
        %v1221 = vld [vmem:[%s5 + $0x60] sm:$0xff]
        %v1222 = vld [vmem:[%s5 + $0x68] sm:$0xff]
        %v1223 = vld [vmem:[%s5 + $0x70] sm:$0xff]
        %v1224 = vld [vmem:[%s5 + $0x78] sm:$0xff]
        %v1225 = vld [vmem:[%s5 + $0x80] sm:$0xff]
        %v1226 = vld [vmem:[%s5 + $0x88] sm:$0xff]
        %v1227 = vld [vmem:[%s5 + $0x90] sm:$0xff]
        %v1228 = vld [vmem:[%s5 + $0x98] sm:$0xff]
        %v1229 = vld [vmem:[%s5 + $0xa0] sm:$0xff]
        %v1230 = vld [vmem:[%s5 + $0xa8] sm:$0xff]
        %v1231 = vld [vmem:[%s5 + $0xb0] sm:$0xff]
        %v1232 = vld [vmem:[%s5 + $0xb8] sm:$0xff]
        %v1233 = vld [vmem:[%s5 + $0xc0] sm:$0xff]
        %v1234 = vld [vmem:[%s5 + $0xc8] sm:$0xff]
        %v1235 = vld [vmem:[%s5 + $0xd0] sm:$0xff]
        %v1236 = vld [vmem:[%s5 + $0xd8] sm:$0xff]
        %v1237 = vld [vmem:[%s5 + $0xe0] sm:$0xff]
        %v1238 = vld [vmem:[%s5 + $0xe8] sm:$0xff]
        %v1239 = vld [vmem:[%s5 + $0xf0] sm:$0xff]
        %v1240 = vld [vmem:[%s5 + $0xf8] sm:$0xff]
        %v1241 = vld [vmem:[%s5 + $0x100] sm:$0xff]
        %v1242 = vld [vmem:[%s5 + $0x108] sm:$0xff]
        %v1243 = vld [vmem:[%s5 + $0x110] sm:$0xff]
        %v1244 = vld [vmem:[%s5 + $0x118] sm:$0xff]
        %v1245 = vld [vmem:[%s5 + $0x120] sm:$0xff]
        %v1246 = vld [vmem:[%s5 + $0x128] sm:$0xff]
        %v1247 = vld [vmem:[%s5 + $0x130] sm:$0xff]
        %v1248 = vld [vmem:[%s5 + $0x138] sm:$0xff]
        %v1249 = vld [vmem:[%s5 + $0x140] sm:$0xff]
        %v1250 = vld [vmem:[%s5 + $0x148] sm:$0xff]
        %v1251 = vld [vmem:[%s5 + $0x150] sm:$0xff]
        %v1252 = vld [vmem:[%s5 + $0x158] sm:$0xff]
        %v1253 = vld [vmem:[%s5 + $0x160] sm:$0xff]
        %v1254 = vld [vmem:[%s5 + $0x168] sm:$0xff]
        %v1255 = vld [vmem:[%s5 + $0x170] sm:$0xff]
        %v1256 = vld [vmem:[%s5 + $0x178] sm:$0xff]
        %v1257 = vld [vmem:[%s5 + $0x180] sm:$0xff]
        %v1258 = vld [vmem:[%s5 + $0x188] sm:$0xff]
        %v1259 = vld [vmem:[%s5 + $0x190] sm:$0xff]
        %v1260 = vld [vmem:[%s5 + $0x198] sm:$0xff]
        %v1261 = vld [vmem:[%s5 + $0x1a0] sm:$0xff]
        %v1262 = vld [vmem:[%s5 + $0x1a8] sm:$0xff]
        %v1263 = vld [vmem:[%s5 + $0x1b0] sm:$0xff]
        %v1264 = vld [vmem:[%s5 + $0x1b8] sm:$0xff]
        %v1265 = vld [vmem:[%s5 + $0x1c0] sm:$0xff]
        %v1266 = vld [vmem:[%s5 + $0x1c8] sm:$0xff]
        %v1267 = vld [vmem:[%s5 + $0x1d0] sm:$0xff]
        %v1268 = vld [vmem:[%s5 + $0x1d8] sm:$0xff]
        %v1269 = vld [vmem:[%s5 + $0x1e0] sm:$0xff]
        %v1270 = vld [vmem:[%s5 + $0x1e8] sm:$0xff]
        %v1271 = vld [vmem:[%s5 + $0x1f0] sm:$0xff]
        %v1272 = vld [vmem:[%s5 + $0x1f8] sm:$0xff]
        %v1273 = vld [vmem:[%s5 + $0x200] sm:$0xff]
        %v1274 = vld [vmem:[%s5 + $0x208] sm:$0xff]
        %v1275 = vld [vmem:[%s5 + $0x210] sm:$0xff]
        %v1276 = vld [vmem:[%s5 + $0x218] sm:$0xff]
        %v1277 = vld [vmem:[%s5 + $0x220] sm:$0xff]
        %v1278 = vld [vmem:[%s5 + $0x228] sm:$0xff]
        %v1279 = vld [vmem:[%s5 + $0x230] sm:$0xff]
        %v1280 = vld [vmem:[%s5 + $0x238] sm:$0xff]
        %v1281 = vld [vmem:[%s5 + $0x240] sm:$0xff]
        %v1282 = vld [vmem:[%s5 + $0x248] sm:$0xff]
        %v1283 = vld [vmem:[%s5 + $0x250] sm:$0xff]
        %v1284 = vld [vmem:[%s5 + $0x258] sm:$0xff]
        %v1285 = vld [vmem:[%s5 + $0x260] sm:$0xff]
        %v1286 = vld [vmem:[%s5 + $0x268] sm:$0xff]
        %v1287 = vld [vmem:[%s5 + $0x270] sm:$0xff]
        %v1288 = vld [vmem:[%s5 + $0x278] sm:$0xff]
        %v1289 = vld [vmem:[%s5 + $0x280] sm:$0xff]
        %v1290 = vld [vmem:[%s5 + $0x288] sm:$0xff]
        %v1291 = vld [vmem:[%s5 + $0x290] sm:$0xff]
        %v1292 = vld [vmem:[%s5 + $0x298] sm:$0xff]
        %v1293 = vld [vmem:[%s5 + $0x2a0] sm:$0xff]
        %v1294 = vld [vmem:[%s5 + $0x2a8] sm:$0xff]
        %v1295 = vld [vmem:[%s5 + $0x2b0] sm:$0xff]
        %v1296 = vld [vmem:[%s5 + $0x2b8] sm:$0xff]
        %v1297 = vld [vmem:[%s5 + $0x2c0] sm:$0xff]
        %v1298 = vld [vmem:[%s5 + $0x2c8] sm:$0xff]
        %v1299 = vld [vmem:[%s5 + $0x2d0] sm:$0xff]
        %v1300 = vld [vmem:[%s5 + $0x2d8] sm:$0xff]
        %v1301 = vld [vmem:[%s5 + $0x2e0] sm:$0xff]
        %v1302 = vld [vmem:[%s5 + $0x2e8] sm:$0xff]
        %v1303 = vld [vmem:[%s5 + $0x2f0] sm:$0xff]
        %v1304 = vld [vmem:[%s5 + $0x2f8] sm:$0xff]
        %v1305 = vld [vmem:[%s5 + $0x300] sm:$0xff]
        %v1306 = vld [vmem:[%s5 + $0x308] sm:$0xff]
        %v1307 = vld [vmem:[%s5 + $0x310] sm:$0xff]
        %v1308 = vld [vmem:[%s5 + $0x318] sm:$0xff]
        %v1309 = vld [vmem:[%s5 + $0x320] sm:$0xff]
        %v1310 = vld [vmem:[%s5 + $0x328] sm:$0xff]
        %v1311 = vld [vmem:[%s5 + $0x330] sm:$0xff]
        %v1312 = vld [vmem:[%s5 + $0x338] sm:$0xff]
        %v1313 = vld [vmem:[%s5 + $0x340] sm:$0xff]
        %v1314 = vld [vmem:[%s5 + $0x348] sm:$0xff]
        %v1315 = vld [vmem:[%s5 + $0x350] sm:$0xff]
        %v1316 = vld [vmem:[%s5 + $0x358] sm:$0xff]
        %v1317 = vld [vmem:[%s5 + $0x360] sm:$0xff]
        %v1318 = vld [vmem:[%s5 + $0x368] sm:$0xff]
        %v1319 = vld [vmem:[%s5 + $0x370] sm:$0xff]
        %v1320 = vld [vmem:[%s5 + $0x378] sm:$0xff]
        %v1321 = vld [vmem:[%s6] sm:$0x7f]
        %v1323 = vlaneseq
        %v1324 = vshrl.u32 %v1323, 7
        %v1325 = vsub.s32 0, %v1324
        %v1326 = vrot.slane %v1321, %v1325
        %v1327 = vlaneseq
        %v1328 = vshrl.u32 %v1327, 7
        %v1329 = vsub.s32 1, %v1328
        %v1330 = vrot.slane %v1321, %v1329
        %v1331 = vlaneseq
        %v1332 = vshrl.u32 %v1331, 7
        %v1333 = vsub.s32 2, %v1332
        %v1334 = vrot.slane %v1321, %v1333
        %v1335 = vlaneseq
        %v1336 = vshrl.u32 %v1335, 7
        %v1337 = vsub.s32 3, %v1336
        %v1338 = vrot.slane %v1321, %v1337
        %v1339 = vlaneseq
        %v1340 = vshrl.u32 %v1339, 7
        %v1341 = vsub.s32 4, %v1340
        %v1342 = vrot.slane %v1321, %v1341
        %v1343 = vlaneseq
        %v1344 = vshrl.u32 %v1343, 7
        %v1345 = vsub.s32 5, %v1344
        %v1346 = vrot.slane %v1321, %v1345
        %v1347 = vlaneseq
        %v1348 = vshrl.u32 %v1347, 7
        %v1349 = vsub.s32 6, %v1348
        %v1350 = vrot.slane %v1321, %v1349
        %1358 = vmatprep.subr.mxu0 %v1210
        %1359 = vmatpush1.msra.mxu0 %v1209
        %1360 = vmatprep.subr.mxu0 %v1217
        %1361 = vmatpush1.msra.mxu0 %v1216
        %1362 = vmatprep.subr.mxu0 %v1224
        %1363 = vmatpush1.msra.mxu0 %v1223
        %1364 = vmatprep.subr.mxu0 %v1231
        %1365 = vmatpush1.msra.mxu0 %v1230
        %1366 = vmatprep.subr.mxu0 %v1238
        %1367 = vmatpush1.msra.mxu0 %v1237
        %1368 = vmatprep.subr.mxu0 %v1245
        %1369 = vmatpush1.msra.mxu0 %v1244
        %1370 = vmatprep.subr.mxu0 %v1252
        %1371 = vmatpush1.msra.mxu0 %v1251
        %1372 = vmatprep.subr.mxu0 %v1259
        %1373 = vmatpush1.msra.mxu0 %v1258
        %1374 = vmatprep.subr.mxu0 %v1266
        %1375 = vmatpush1.msra.mxu0 %v1265
        %1376 = vmatprep.subr.mxu0 %v1273
        %1377 = vmatpush1.msra.mxu0 %v1272
        %1378 = vmatprep.subr.mxu0 %v1280
        %1379 = vmatpush1.msra.mxu0 %v1279
        %1380 = vmatprep.subr.mxu0 %v1287
        %1381 = vmatpush1.msra.mxu0 %v1286
        %1382 = vmatprep.subr.mxu0 %v1294
        %1383 = vmatpush1.msra.mxu0 %v1293
        %1384 = vmatprep.subr.mxu0 %v1301
        %1385 = vmatpush1.msra.mxu0 %v1300
        %1386 = vmatprep.subr.mxu0 %v1308
        %1387 = vmatpush1.msra.mxu0 %v1307
        %1388 = vmatprep.subr.mxu0 %v1315
        %1389 = vmatpush1.msra.mxu0 %v1314
        %1390 = vmatprep.subr.mxu0 0.0
        %1391 = vmatpush1.msra.mxu0 0.0
        %1392 = vmatprep.subr.mxu0 0.0
        %1393 = vmatpush1.msra.mxu0 0.0
        %1394 = vmatprep.subr.mxu0 0.0
        %1395 = vmatpush1.msra.mxu0 0.0
        %1396 = vmatprep.subr.mxu0 0.0
        %1397 = vmatpush1.msra.mxu0 0.0
        %1398 = vmatprep.subr.mxu0 0.0
        %1399 = vmatpush1.msra.mxu0 0.0
        %1400 = vmatprep.subr.mxu0 0.0
        %1401 = vmatpush1.msra.mxu0 0.0
        %1402 = vmatprep.subr.mxu0 0.0
        %1403 = vmatpush1.msra.mxu0 0.0
        %1404 = vmatprep.subr.mxu0 0.0
        %1405 = vmatpush1.msra.mxu0 0.0
        %1406 = vmatprep.subr.mxu0 0.0
        %1407 = vmatpush1.msra.mxu0 0.0
        %1408 = vmatprep.subr.mxu0 0.0
        %1409 = vmatpush1.msra.mxu0 0.0
        %1410 = vmatprep.subr.mxu0 0.0
        %1411 = vmatpush1.msra.mxu0 0.0
        %1412 = vmatprep.subr.mxu0 0.0
        %1413 = vmatpush1.msra.mxu0 0.0
        %1414 = vmatprep.subr.mxu0 0.0
        %1415 = vmatpush1.msra.mxu0 0.0
        %1416 = vmatprep.subr.mxu0 0.0
        %1417 = vmatpush1.msra.mxu0 0.0
        %1418 = vmatprep.subr.mxu0 0.0
        %1419 = vmatpush1.msra.mxu0 0.0
        %1420 = vmatprep.subr.mxu0 0.0
        %1421 = vmatpush1.msra.mxu0 0.0
        %1422 = vmatprep.mubr.f32.mxu0 0.0
        %1423 = vmatmul.mubr.f32.gmra.mrb[0].mxu0 %v1208
        %v1424 = vpop.f32.mrb[0].mxu0
        %v1425 = vadd.f32 %v1326, %v1424
        %v1426 = vpop.f32.mrb[0].mxu0
        %v1427 = vadd.f32 %v1330, %v1426
        %1428 = vdwg.mxu0
        %1429 = vmatprep.subr.mxu0 %v1212
        %1430 = vmatpush1.msra.mxu0 %v1211
        %1431 = vmatprep.subr.mxu0 %v1219
        %1432 = vmatpush1.msra.mxu0 %v1218
        %1433 = vmatprep.subr.mxu0 %v1226
        %1434 = vmatpush1.msra.mxu0 %v1225
        %1435 = vmatprep.subr.mxu0 %v1233
        %1436 = vmatpush1.msra.mxu0 %v1232
        %1437 = vmatprep.subr.mxu0 %v1240
        %1438 = vmatpush1.msra.mxu0 %v1239
        %1439 = vmatprep.subr.mxu0 %v1247
        %1440 = vmatpush1.msra.mxu0 %v1246
        %1441 = vmatprep.subr.mxu0 %v1254
        %1442 = vmatpush1.msra.mxu0 %v1253
        %1443 = vmatprep.subr.mxu0 %v1261
        %1444 = vmatpush1.msra.mxu0 %v1260
        %1445 = vmatprep.subr.mxu0 %v1268
        %1446 = vmatpush1.msra.mxu0 %v1267
        %1447 = vmatprep.subr.mxu0 %v1275
        %1448 = vmatpush1.msra.mxu0 %v1274
        %1449 = vmatprep.subr.mxu0 %v1282
        %1450 = vmatpush1.msra.mxu0 %v1281
        %1451 = vmatprep.subr.mxu0 %v1289
        %1452 = vmatpush1.msra.mxu0 %v1288
        %1453 = vmatprep.subr.mxu0 %v1296
        %1454 = vmatpush1.msra.mxu0 %v1295
        %1455 = vmatprep.subr.mxu0 %v1303
        %1456 = vmatpush1.msra.mxu0 %v1302
        %1457 = vmatprep.subr.mxu0 %v1310
        %1458 = vmatpush1.msra.mxu0 %v1309
        %1459 = vmatprep.subr.mxu0 %v1317
        %1460 = vmatpush1.msra.mxu0 %v1316
        %1461 = vmatprep.subr.mxu0 0.0
        %1462 = vmatpush1.msra.mxu0 0.0
        %1463 = vmatprep.subr.mxu0 0.0
        %1464 = vmatpush1.msra.mxu0 0.0
        %1465 = vmatprep.subr.mxu0 0.0
        %1466 = vmatpush1.msra.mxu0 0.0
        %1467 = vmatprep.subr.mxu0 0.0
        %1468 = vmatpush1.msra.mxu0 0.0
        %1469 = vmatprep.subr.mxu0 0.0
        %1470 = vmatpush1.msra.mxu0 0.0
        %1471 = vmatprep.subr.mxu0 0.0
        %1472 = vmatpush1.msra.mxu0 0.0
        %1473 = vmatprep.subr.mxu0 0.0
        %1474 = vmatpush1.msra.mxu0 0.0
        %1475 = vmatprep.subr.mxu0 0.0
        %1476 = vmatpush1.msra.mxu0 0.0
        %1477 = vmatprep.subr.mxu0 0.0
        %1478 = vmatpush1.msra.mxu0 0.0
        %1479 = vmatprep.subr.mxu0 0.0
        %1480 = vmatpush1.msra.mxu0 0.0
        %1481 = vmatprep.subr.mxu0 0.0
        %1482 = vmatpush1.msra.mxu0 0.0
        %1483 = vmatprep.subr.mxu0 0.0
        %1484 = vmatpush1.msra.mxu0 0.0
        %1485 = vmatprep.subr.mxu0 0.0
        %1486 = vmatpush1.msra.mxu0 0.0
        %1487 = vmatprep.subr.mxu0 0.0
        %1488 = vmatpush1.msra.mxu0 0.0
        %1489 = vmatprep.subr.mxu0 0.0
        %1490 = vmatpush1.msra.mxu0 0.0
        %1491 = vmatprep.subr.mxu0 0.0
        %1492 = vmatpush1.msra.mxu0 0.0
        %1493 = vmatprep.mubr.f32.mxu0 0.0
        %1494 = vmatmul.mubr.f32.gmra.mrb[0].mxu0 %v1208
        %v1495 = vpop.f32.mrb[0].mxu0
        %v1496 = vadd.f32 %v1334, %v1495
        %v1497 = vpop.f32.mrb[0].mxu0
        %v1498 = vadd.f32 %v1338, %v1497
        %1499 = vdwg.mxu0
        %1500 = vmatprep.subr.mxu0 %v1214
        %1501 = vmatpush1.msra.mxu0 %v1213
        %1502 = vmatprep.subr.mxu0 %v1221
        %1503 = vmatpush1.msra.mxu0 %v1220
        %1504 = vmatprep.subr.mxu0 %v1228
        %1505 = vmatpush1.msra.mxu0 %v1227
        %1506 = vmatprep.subr.mxu0 %v1235
        %1507 = vmatpush1.msra.mxu0 %v1234
        %1508 = vmatprep.subr.mxu0 %v1242
        %1509 = vmatpush1.msra.mxu0 %v1241
        %1510 = vmatprep.subr.mxu0 %v1249
        %1511 = vmatpush1.msra.mxu0 %v1248
        %1512 = vmatprep.subr.mxu0 %v1256
        %1513 = vmatpush1.msra.mxu0 %v1255
        %1514 = vmatprep.subr.mxu0 %v1263
        %1515 = vmatpush1.msra.mxu0 %v1262
        %1516 = vmatprep.subr.mxu0 %v1270
        %1517 = vmatpush1.msra.mxu0 %v1269
        %1518 = vmatprep.subr.mxu0 %v1277
        %1519 = vmatpush1.msra.mxu0 %v1276
        %1520 = vmatprep.subr.mxu0 %v1284
        %1521 = vmatpush1.msra.mxu0 %v1283
        %1522 = vmatprep.subr.mxu0 %v1291
        %1523 = vmatpush1.msra.mxu0 %v1290
        %1524 = vmatprep.subr.mxu0 %v1298
        %1525 = vmatpush1.msra.mxu0 %v1297
        %1526 = vmatprep.subr.mxu0 %v1305
        %1527 = vmatpush1.msra.mxu0 %v1304
        %1528 = vmatprep.subr.mxu0 %v1312
        %1529 = vmatpush1.msra.mxu0 %v1311
        %1530 = vmatprep.subr.mxu0 %v1319
        %1531 = vmatpush1.msra.mxu0 %v1318
        %1532 = vmatprep.subr.mxu0 0.0
        %1533 = vmatpush1.msra.mxu0 0.0
        %1534 = vmatprep.subr.mxu0 0.0
        %1535 = vmatpush1.msra.mxu0 0.0
        %1536 = vmatprep.subr.mxu0 0.0
        %1537 = vmatpush1.msra.mxu0 0.0
        %1538 = vmatprep.subr.mxu0 0.0
        %1539 = vmatpush1.msra.mxu0 0.0
        %1540 = vmatprep.subr.mxu0 0.0
        %1541 = vmatpush1.msra.mxu0 0.0
        %1542 = vmatprep.subr.mxu0 0.0
        %1543 = vmatpush1.msra.mxu0 0.0
        %1544 = vmatprep.subr.mxu0 0.0
        %1545 = vmatpush1.msra.mxu0 0.0
        %1546 = vmatprep.subr.mxu0 0.0
        %1547 = vmatpush1.msra.mxu0 0.0
        %1548 = vmatprep.subr.mxu0 0.0
        %1549 = vmatpush1.msra.mxu0 0.0
        %1550 = vmatprep.subr.mxu0 0.0
        %1551 = vmatpush1.msra.mxu0 0.0
        %1552 = vmatprep.subr.mxu0 0.0
        %1553 = vmatpush1.msra.mxu0 0.0
        %1554 = vmatprep.subr.mxu0 0.0
        %1555 = vmatpush1.msra.mxu0 0.0
        %1556 = vmatprep.subr.mxu0 0.0
        %1557 = vmatpush1.msra.mxu0 0.0
        %1558 = vmatprep.subr.mxu0 0.0
        %1559 = vmatpush1.msra.mxu0 0.0
        %1560 = vmatprep.subr.mxu0 0.0
        %1561 = vmatpush1.msra.mxu0 0.0
        %1562 = vmatprep.subr.mxu0 0.0
        %1563 = vmatpush1.msra.mxu0 0.0
        %1564 = vmatprep.mubr.f32.mxu0 0.0
        %1565 = vmatmul.mubr.f32.gmra.mrb[0].mxu0 %v1208
        %v1566 = vpop.f32.mrb[0].mxu0
        %v1567 = vadd.f32 %v1342, %v1566
        %v1568 = vpop.f32.mrb[0].mxu0
        %v1569 = vadd.f32 %v1346, %v1568
        %1570 = vdwg.mxu0
        %1571 = vmatprep.subr.mxu0 0.0
        %1572 = vmatpush1.msra.mxu0 %v1215
        %1573 = vmatprep.subr.mxu0 0.0
        %1574 = vmatpush1.msra.mxu0 %v1222
        %1575 = vmatprep.subr.mxu0 0.0
        %1576 = vmatpush1.msra.mxu0 %v1229
        %1577 = vmatprep.subr.mxu0 0.0
        %1578 = vmatpush1.msra.mxu0 %v1236
        %1579 = vmatprep.subr.mxu0 0.0
        %1580 = vmatpush1.msra.mxu0 %v1243
        %1581 = vmatprep.subr.mxu0 0.0
        %1582 = vmatpush1.msra.mxu0 %v1250
        %1583 = vmatprep.subr.mxu0 0.0
        %1584 = vmatpush1.msra.mxu0 %v1257
        %1585 = vmatprep.subr.mxu0 0.0
        %1586 = vmatpush1.msra.mxu0 %v1264
        %1587 = vmatprep.subr.mxu0 0.0
        %1588 = vmatpush1.msra.mxu0 %v1271
        %1589 = vmatprep.subr.mxu0 0.0
        %1590 = vmatpush1.msra.mxu0 %v1278
        %1591 = vmatprep.subr.mxu0 0.0
        %1592 = vmatpush1.msra.mxu0 %v1285
        %1593 = vmatprep.subr.mxu0 0.0
        %1594 = vmatpush1.msra.mxu0 %v1292
        %1595 = vmatprep.subr.mxu0 0.0
        %1596 = vmatpush1.msra.mxu0 %v1299
        %1597 = vmatprep.subr.mxu0 0.0
        %1598 = vmatpush1.msra.mxu0 %v1306
        %1599 = vmatprep.subr.mxu0 0.0
        %1600 = vmatpush1.msra.mxu0 %v1313
        %1601 = vmatprep.subr.mxu0 0.0
        %1602 = vmatpush1.msra.mxu0 %v1320
        %1603 = vmatprep.subr.mxu0 0.0
        %1604 = vmatpush1.msra.mxu0 0.0
        %1605 = vmatprep.subr.mxu0 0.0
        %1606 = vmatpush1.msra.mxu0 0.0
        %1607 = vmatprep.subr.mxu0 0.0
        %1608 = vmatpush1.msra.mxu0 0.0
        %1609 = vmatprep.subr.mxu0 0.0
        %1610 = vmatpush1.msra.mxu0 0.0
        %1611 = vmatprep.subr.mxu0 0.0
        %1612 = vmatpush1.msra.mxu0 0.0
        %1613 = vmatprep.subr.mxu0 0.0
        %1614 = vmatpush1.msra.mxu0 0.0
        %1615 = vmatprep.subr.mxu0 0.0
        %1616 = vmatpush1.msra.mxu0 0.0
        %1617 = vmatprep.subr.mxu0 0.0
        %1618 = vmatpush1.msra.mxu0 0.0
        %1619 = vmatprep.subr.mxu0 0.0
        %1620 = vmatpush1.msra.mxu0 0.0
        %1621 = vmatprep.subr.mxu0 0.0
        %1622 = vmatpush1.msra.mxu0 0.0
        %1623 = vmatprep.subr.mxu0 0.0
        %1624 = vmatpush1.msra.mxu0 0.0
        %1625 = vmatprep.subr.mxu0 0.0
        %1626 = vmatpush1.msra.mxu0 0.0
        %1627 = vmatprep.subr.mxu0 0.0
        %1628 = vmatpush1.msra.mxu0 0.0
        %1629 = vmatprep.subr.mxu0 0.0
        %1630 = vmatpush1.msra.mxu0 0.0
        %1631 = vmatprep.subr.mxu0 0.0
        %1632 = vmatpush1.msra.mxu0 0.0
        %1633 = vmatprep.subr.mxu0 0.0
        %1634 = vmatpush1.msra.mxu0 0.0
        %1635 = vmatprep.mubr.f32.mxu0 0.0
        %1636 = vmatmul.mubr.f32.gmra.mrb[0].mxu0 %v1208
        %v1637 = vpop.f32.mrb[0].mxu0
        %v1638 = vadd.f32 %v1350, %v1637
        %v1639 = vpop.f32.mrb[0].mxu0
        %1640 = vdwg.mxu0
        %1641 = vst [vmem:[%s325] sm:$0xff] %v1425
        %1642 = vst [vmem:[%s325 + $0x8] sm:$0xff] %v1427
        %1643 = vst [vmem:[%s325 + $0x10] sm:$0xff] %v1496
        %1644 = vst [vmem:[%s325 + $0x18] sm:$0xff] %v1498
        %1645 = vst [vmem:[%s325 + $0x20] sm:$0xff] %v1567
        %1646 = vst [vmem:[%s325 + $0x28] sm:$0xff] %v1569
        %1647 = vst.msk [vmem:[%s325 + $0x30] sm:$0xff] %vm445, %v1638
        %s1648 = sand.u32 %s225, 1
        %s1649 = scalar_lea.sflag [#allocation3], %s1648
        %s1650 = sand.u32 %s225, 1
        %s1651 = smul.addr %s1650, 56
        %s1652 = scalar_lea.vmem [#allocation2], %s1651
        // Predicated region
        $region57: #{_forward.1} parent=55 // pred_check
          %p1653 = pneg %p235
        $region58: #{_forward.1} parent=55 // pred_check_branch
          %1655 = sbr.rel (%p1653) target = $region60
        $region59: #{_forward.1} parent=55 // pred_region
          %s1657 = ssub.s32 896, 896
          %1658 = vsyncadd %s1649, %s1657
          %s1659 = smul.addr %s23, 7
          %s1660 = smul.addr %s1659, 128
          %s1661 = scalar_lea.hbm %s9, %s1660
          %s1663 = sshll.u32 %s1652, 4
          %s1664 = int_to_ptr.vmem [resolvable:$true] %s1663
          %1666 = dma.vmem_to_hbm [thread:$0]  %s1664, 896, %s1661, %s1649
        $region60: #{_forward.1} parent=55 // pred_fallthru
          _
      $region56: #{_forward.1} parent=5 // pred_fallthru
        _
      %p1667 = scmp.le.s32.totalorder 2, %s18
      // Predicated region
      $region61: #{_forward.1} parent=5 // pred_check
        %p1668 = pneg %p1667
      $region62: #{_forward.1} parent=5 // pred_check_branch
        %1670 = sbr.rel (%p1668) target = $region64
      $region63: #{_forward.1} parent=5 // pred_region
        %s1671 = ssub.s32 %s18, 2
        // Predicated region
        $region65: #{_forward.1} parent=63 // pred_check
          %p1672 = pneg %p241
        $region66: #{_forward.1} parent=63 // pred_check_branch
          %1674 = sbr.rel (%p1672) target = $region68
        $region67: #{_forward.1} parent=63 // pred_region
          %s1675 = sand.u32 %s226, 1
          %s1676 = scalar_lea.sflag [#allocation3], %s1675
          %s1677 = sand.u32 %s226, 1
          %s1678 = smul.addr %s1677, 56
          %s1679 = scalar_lea.vmem [#allocation2], %s1678
          %1680 = dma.done %s1676, 896
        $region68: #{_forward.1} parent=63 // pred_fallthru
          _
      $region64: #{_forward.1} parent=5 // pred_fallthru
        _
    $region6: #{_forward.1} parent=1 // loop_footer
      %s22 = sadd.s32 1, %s18
    $region7: #{_forward.1} parent=1 // loop_footer_branch
      %17 = sbr.rel target = $region3
    $region8: #{_forward.1} parent=1 // loop_exit
      _
    %1681 = vsyncpa [#allocation3], 1
    %s1682 = scalar_lea.sflag [#allocation3], 1
    %1683 = vsyncpa %s1682, 1

// kernel: _forward.1
$region0: #{_forward.1}
  #allocation0 [shape = 'u32[]', space=smem, size = 0x4, offset = 0x4, fixed_abs, tag = 'smem constant byte address 0x4 - core index']
  #allocation1 [shape = 'u32[144,128]{1,0:T(1,128)}', space=vmem, size = 0x12000, scoped, tag = 'internal scratch']
  %s0 = inlined_call_operand.vmem [shape: f32[16,784], index: 0, kind: input, shape index: {}]
  %s1 = inlined_call_operand.vmem [shape: f32[784,128], index: 1, kind: input, shape index: {}]
  %s2 = inlined_call_operand.vmem [shape: f32[1,128], index: 2, kind: input, shape index: {}]
  %s3 = inlined_call_operand.vmem [shape: f32[4,128,128], index: 3, kind: input, shape index: {}]
  %s4 = inlined_call_operand.vmem [shape: f32[4,1,128], index: 4, kind: input, shape index: {}]
  %s5 = inlined_call_operand.vmem [shape: f32[128,784], index: 5, kind: input, shape index: {}]
  %s6 = inlined_call_operand.vmem [shape: f32[1,784], index: 6, kind: input, shape index: {}]
  %s7 = inlined_call_operand.vmem [shape: f32[1,128], index: 7, kind: input, shape index: {}]
  %s8 = inlined_call_operand.vmem [shape: f32[1,128], index: 8, kind: input, shape index: {}]
  %s9 = inlined_call_operand.hbm [shape: f32[16,784], index: 9, kind: output, shape index: {}]
  %s10 = sld [smem:[#allocation0]]
  $region69: #{_forward.1} parent=0
    _
  %s12 = ssub.s32 1, %s10
  %s13 = scalar_select 0, %s12, %s10
  $region1: #{_forward.1} parent=0
    #allocation2 [shape = 'u8[57344]{0}', space=vmem, size = 0xe000, scoped, tag = 'output window, operand 0']
    #allocation3 [shape = 's32[2]{0}', space=sflag, size = 0x8, scoped, tag = 'scoped memory for _forward.1']
    %14 = vsyncpa [#allocation3], 0
    %s15 = scalar_lea.sflag [#allocation3], 1
    %16 = vsyncpa %s15, 0
    loop: start=0, step=1, limit=4
    $region2: #{_forward.1} parent=1 // loop_pre_header
      _
    $region3: #{_forward.1} parent=1 // loop_header
      %s18 = sphi 0, %s22
      %p19 = scmp.ge.s32.totalorder %s18, 4
      %s28 = sphi 0, %s30
      %s31 = sphi 0, %s28
      %s32 = sphi 0, %s31
      %s48 = sphi 0, %s32
      %s52 = sphi 0, %s52
      %s54 = sphi 0, %s52
      %s55 = sphi 0, %s54
      %s69 = sphi 0, %s55
      %s73 = sphi 0, %s73
      %s75 = sphi 0, %s73
      %s76 = sphi 0, %s75
      %s90 = sphi 0, %s76
      %s94 = sphi 0, %s94
      %s96 = sphi 0, %s94
      %s97 = sphi 0, %s96
      %s111 = sphi 0, %s97
      %s115 = sphi 0, %s115
      %s117 = sphi 0, %s115
      %s118 = sphi 0, %s117
      %s132 = sphi 0, %s118
      %s136 = sphi 0, %s136
      %s138 = sphi 0, %s136
      %s139 = sphi 0, %s138
      %s153 = sphi 0, %s139
      %s157 = sphi 0, %s157
      %s159 = sphi 0, %s157
      %s160 = sphi 0, %s159
      %s174 = sphi 0, %s160
      %s178 = sphi 0, %s178
      %s180 = sphi 0, %s178
      %s181 = sphi 0, %s180
      %s195 = sphi 0, %s181
      %s199 = sphi 0, %s199
      %s201 = sphi 0, %s199
      %s202 = sphi 0, %s201
      %s216 = sphi 0, %s202
      %s222 = sphi 0, %s224
      %s225 = sphi 0, %s222
      %s226 = sphi 0, %s225
      %s242 = sphi 0, %s226
    $region4: #{_forward.1} parent=1 // loop_header_branch
      %21 = sbr.rel (%p19) target = $region8
    $region5: #{_forward.1} parent=1 // loop_body
      %s23 = ssub.s32 %s18, 1
      %s24 = ssub.s32 %s18, 2
      %s25 = sadd.s32 %s18, 1
      %s26 = ssub.s32 %s18, %s25
      %p27 = scmp.eq.s32.totalorder %s26, 0
      %s29 = sadd.s32 %s28, 1
      %s30 = scalar_select %p27, %s28, %s29
      %p33 = pneg %p27
      %p34 = scmp.eq.s32.totalorder %s18, 1
      %p35 = por %p33, %p34
      %p36 = scmp.ne.s32.totalorder %s28, %s31
      %p37 = scmp.eq.s32.totalorder %s18, 0
      %p38 = por %p36, %p37
      %p39 = scmp.ne.s32.totalorder %s28, %s31
      %p40 = scmp.eq.s32.totalorder %s23, 1
      %p41 = por %p39, %p40
      %p42 = scmp.ne.s32.totalorder %s31, %s32
      %p43 = scmp.eq.s32.totalorder %s23, 0
      %p44 = por %p42, %p43
      %p45 = scmp.ne.s32.totalorder %s31, %s32
      %p46 = scmp.eq.s32.totalorder %s24, 1
      %p47 = por %p45, %p46
      %p49 = scmp.ne.s32.totalorder %s32, %s48
      %p50 = scmp.eq.s32.totalorder %s24, 0
      %p51 = por %p49, %p50
      %s53 = sadd.s32 %s52, 1
      %p56 = scmp.eq.s32.totalorder %s18, 1
      %p57 = scmp.ne.s32.totalorder %s52, %s54
      %p58 = scmp.eq.s32.totalorder %s18, 0
      %p59 = por %p57, %p58
      %p60 = scmp.ne.s32.totalorder %s52, %s54
      %p61 = scmp.eq.s32.totalorder %s23, 1
      %p62 = por %p60, %p61
      %p63 = scmp.ne.s32.totalorder %s54, %s55
      %p64 = scmp.eq.s32.totalorder %s23, 0
      %p65 = por %p63, %p64
      %p66 = scmp.ne.s32.totalorder %s54, %s55
      %p67 = scmp.eq.s32.totalorder %s24, 1
      %p68 = por %p66, %p67
      %p70 = scmp.ne.s32.totalorder %s55, %s69
      %p71 = scmp.eq.s32.totalorder %s24, 0
      %p72 = por %p70, %p71
      %s74 = sadd.s32 %s73, 1
      %p77 = scmp.eq.s32.totalorder %s18, 1
      %p78 = scmp.ne.s32.totalorder %s73, %s75
      %p79 = scmp.eq.s32.totalorder %s18, 0
      %p80 = por %p78, %p79
      %p81 = scmp.ne.s32.totalorder %s73, %s75
      %p82 = scmp.eq.s32.totalorder %s23, 1
      %p83 = por %p81, %p82
      %p84 = scmp.ne.s32.totalorder %s75, %s76
      %p85 = scmp.eq.s32.totalorder %s23, 0
      %p86 = por %p84, %p85
      %p87 = scmp.ne.s32.totalorder %s75, %s76
      %p88 = scmp.eq.s32.totalorder %s24, 1
      %p89 = por %p87, %p88
      %p91 = scmp.ne.s32.totalorder %s76, %s90
      %p92 = scmp.eq.s32.totalorder %s24, 0
      %p93 = por %p91, %p92
      %s95 = sadd.s32 %s94, 1
      %p98 = scmp.eq.s32.totalorder %s18, 1
      %p99 = scmp.ne.s32.totalorder %s94, %s96
      %p100 = scmp.eq.s32.totalorder %s18, 0
      %p101 = por %p99, %p100
      %p102 = scmp.ne.s32.totalorder %s94, %s96
      %p103 = scmp.eq.s32.totalorder %s23, 1
      %p104 = por %p102, %p103
      %p105 = scmp.ne.s32.totalorder %s96, %s97
      %p106 = scmp.eq.s32.totalorder %s23, 0
      %p107 = por %p105, %p106
      %p108 = scmp.ne.s32.totalorder %s96, %s97
      %p109 = scmp.eq.s32.totalorder %s24, 1
      %p110 = por %p108, %p109
      %p112 = scmp.ne.s32.totalorder %s97, %s111
      %p113 = scmp.eq.s32.totalorder %s24, 0
      %p114 = por %p112, %p113
      %s116 = sadd.s32 %s115, 1
      %p119 = scmp.eq.s32.totalorder %s18, 1
      %p120 = scmp.ne.s32.totalorder %s115, %s117
      %p121 = scmp.eq.s32.totalorder %s18, 0
      %p122 = por %p120, %p121
      %p123 = scmp.ne.s32.totalorder %s115, %s117
      %p124 = scmp.eq.s32.totalorder %s23, 1
      %p125 = por %p123, %p124
      %p126 = scmp.ne.s32.totalorder %s117, %s118
      %p127 = scmp.eq.s32.totalorder %s23, 0
      %p128 = por %p126, %p127
      %p129 = scmp.ne.s32.totalorder %s117, %s118
      %p130 = scmp.eq.s32.totalorder %s24, 1
      %p131 = por %p129, %p130
      %p133 = scmp.ne.s32.totalorder %s118, %s132
      %p134 = scmp.eq.s32.totalorder %s24, 0
      %p135 = por %p133, %p134
      %s137 = sadd.s32 %s136, 1
      %p140 = scmp.eq.s32.totalorder %s18, 1
      %p141 = scmp.ne.s32.totalorder %s136, %s138
      %p142 = scmp.eq.s32.totalorder %s18, 0
      %p143 = por %p141, %p142
      %p144 = scmp.ne.s32.totalorder %s136, %s138
      %p145 = scmp.eq.s32.totalorder %s23, 1
      %p146 = por %p144, %p145
      %p147 = scmp.ne.s32.totalorder %s138, %s139
      %p148 = scmp.eq.s32.totalorder %s23, 0
      %p149 = por %p147, %p148
      %p150 = scmp.ne.s32.totalorder %s138, %s139
      %p151 = scmp.eq.s32.totalorder %s24, 1
      %p152 = por %p150, %p151
      %p154 = scmp.ne.s32.totalorder %s139, %s153
      %p155 = scmp.eq.s32.totalorder %s24, 0
      %p156 = por %p154, %p155
      %s158 = sadd.s32 %s157, 1
      %p161 = scmp.eq.s32.totalorder %s18, 1
      %p162 = scmp.ne.s32.totalorder %s157, %s159
      %p163 = scmp.eq.s32.totalorder %s18, 0
      %p164 = por %p162, %p163
      %p165 = scmp.ne.s32.totalorder %s157, %s159
      %p166 = scmp.eq.s32.totalorder %s23, 1
      %p167 = por %p165, %p166
      %p168 = scmp.ne.s32.totalorder %s159, %s160
      %p169 = scmp.eq.s32.totalorder %s23, 0
      %p170 = por %p168, %p169
      %p171 = scmp.ne.s32.totalorder %s159, %s160
      %p172 = scmp.eq.s32.totalorder %s24, 1
      %p173 = por %p171, %p172
      %p175 = scmp.ne.s32.totalorder %s160, %s174
      %p176 = scmp.eq.s32.totalorder %s24, 0
      %p177 = por %p175, %p176
      %s179 = sadd.s32 %s178, 1
      %p182 = scmp.eq.s32.totalorder %s18, 1
      %p183 = scmp.ne.s32.totalorder %s178, %s180
      %p184 = scmp.eq.s32.totalorder %s18, 0
      %p185 = por %p183, %p184
      %p186 = scmp.ne.s32.totalorder %s178, %s180
      %p187 = scmp.eq.s32.totalorder %s23, 1
      %p188 = por %p186, %p187
      %p189 = scmp.ne.s32.totalorder %s180, %s181
      %p190 = scmp.eq.s32.totalorder %s23, 0
      %p191 = por %p189, %p190
      %p192 = scmp.ne.s32.totalorder %s180, %s181
      %p193 = scmp.eq.s32.totalorder %s24, 1
      %p194 = por %p192, %p193
      %p196 = scmp.ne.s32.totalorder %s181, %s195
      %p197 = scmp.eq.s32.totalorder %s24, 0
      %p198 = por %p196, %p197
      %s200 = sadd.s32 %s199, 1
      %p203 = scmp.eq.s32.totalorder %s18, 1
      %p204 = scmp.ne.s32.totalorder %s199, %s201
      %p205 = scmp.eq.s32.totalorder %s18, 0
      %p206 = por %p204, %p205
      %p207 = scmp.ne.s32.totalorder %s199, %s201
      %p208 = scmp.eq.s32.totalorder %s23, 1
      %p209 = por %p207, %p208
      %p210 = scmp.ne.s32.totalorder %s201, %s202
      %p211 = scmp.eq.s32.totalorder %s23, 0
      %p212 = por %p210, %p211
      %p213 = scmp.ne.s32.totalorder %s201, %s202
      %p214 = scmp.eq.s32.totalorder %s24, 1
      %p215 = por %p213, %p214
      %p217 = scmp.ne.s32.totalorder %s202, %s216
      %p218 = scmp.eq.s32.totalorder %s24, 0
      %p219 = por %p217, %p218
      %s220 = ssub.s32 %s18, %s25
      %p221 = scmp.eq.s32.totalorder %s220, 0
      %s223 = sadd.s32 %s222, 1
      %s224 = scalar_select %p221, %s222, %s223
      %p227 = pneg %p221
      %p228 = scmp.eq.s32.totalorder %s18, 1
      %p229 = por %p227, %p228
      %p230 = scmp.ne.s32.totalorder %s222, %s225
      %p231 = scmp.eq.s32.totalorder %s18, 0
      %p232 = por %p230, %p231
      %p233 = scmp.ne.s32.totalorder %s222, %s225
      %p234 = scmp.eq.s32.totalorder %s23, 1
      %p235 = por %p233, %p234
      %p236 = scmp.ne.s32.totalorder %s225, %s226
      %p237 = scmp.eq.s32.totalorder %s23, 0
      %p238 = por %p236, %p237
      %p239 = scmp.ne.s32.totalorder %s225, %s226
      %p240 = scmp.eq.s32.totalorder %s24, 1
      %p241 = por %p239, %p240
      %p243 = scmp.ne.s32.totalorder %s226, %s242
      %p244 = scmp.eq.s32.totalorder %s24, 0
      %p245 = por %p243, %p244
      %p246 = scmp.le.s32.totalorder 1, %s18
      %p247 = scmp.lt.s32.totalorder %s18, 3
      %p248 = pnand %p246, %p247
      %p249 = pneg %p248
      // Predicated region
      $region9: #{_forward.1} parent=5 // pred_check
        _
      $region10: #{_forward.1} parent=5 // pred_check_branch
        %251 = sbr.rel (%p248) target = $region12
      $region11: #{_forward.1} parent=5 // pred_region
        %s252 = ssub.s32 %s18, 1
        // Predicated region
        $region13: #{_forward.1} parent=11 // pred_check
          %p253 = pneg %p65
        $region14: #{_forward.1} parent=11 // pred_check_branch
          %255 = sbr.rel (%p253) target = $region16
        $region15: #{_forward.1} parent=11 // pred_region
          _
        $region16: #{_forward.1} parent=11 // pred_fallthru
          _
        // Predicated region
        $region17: #{_forward.1} parent=11 // pred_check
          %p256 = pneg %p86
        $region18: #{_forward.1} parent=11 // pred_check_branch
          %258 = sbr.rel (%p256) target = $region20
        $region19: #{_forward.1} parent=11 // pred_region
          _
        $region20: #{_forward.1} parent=11 // pred_fallthru
          _
        // Predicated region
        $region21: #{_forward.1} parent=11 // pred_check
          %p259 = pneg %p107
        $region22: #{_forward.1} parent=11 // pred_check_branch
          %261 = sbr.rel (%p259) target = $region24
        $region23: #{_forward.1} parent=11 // pred_region
          _
        $region24: #{_forward.1} parent=11 // pred_fallthru
          _
        // Predicated region
        $region25: #{_forward.1} parent=11 // pred_check
          %p262 = pneg %p128
        $region26: #{_forward.1} parent=11 // pred_check_branch
          %264 = sbr.rel (%p262) target = $region28
        $region27: #{_forward.1} parent=11 // pred_region
          _
        $region28: #{_forward.1} parent=11 // pred_fallthru
          _
        // Predicated region
        $region29: #{_forward.1} parent=11 // pred_check
          %p265 = pneg %p149
        $region30: #{_forward.1} parent=11 // pred_check_branch
          %267 = sbr.rel (%p265) target = $region32
        $region31: #{_forward.1} parent=11 // pred_region
          _
        $region32: #{_forward.1} parent=11 // pred_fallthru
          _
        // Predicated region
        $region33: #{_forward.1} parent=11 // pred_check
          %p268 = pneg %p170
        $region34: #{_forward.1} parent=11 // pred_check_branch
          %270 = sbr.rel (%p268) target = $region36
        $region35: #{_forward.1} parent=11 // pred_region
          _
        $region36: #{_forward.1} parent=11 // pred_fallthru
          _
        // Predicated region
        $region37: #{_forward.1} parent=11 // pred_check
          %p271 = pneg %p191
        $region38: #{_forward.1} parent=11 // pred_check_branch
          %273 = sbr.rel (%p271) target = $region40
        $region39: #{_forward.1} parent=11 // pred_region
          _
        $region40: #{_forward.1} parent=11 // pred_fallthru
          _
        // Predicated region
        $region41: #{_forward.1} parent=11 // pred_check
          %p274 = pneg %p212
        $region42: #{_forward.1} parent=11 // pred_check_branch
          %276 = sbr.rel (%p274) target = $region44
        $region43: #{_forward.1} parent=11 // pred_region
          _
        $region44: #{_forward.1} parent=11 // pred_fallthru
          _
      $region12: #{_forward.1} parent=5 // pred_fallthru
        _
      %p277 = scmp.lt.s32.totalorder %s18, 2
      // Predicated region
      $region45: #{_forward.1} parent=5 // pred_check
        %p278 = pneg %p277
      $region46: #{_forward.1} parent=5 // pred_check_branch
        %280 = sbr.rel (%p278) target = $region48
      $region47: #{_forward.1} parent=5 // pred_region
        // Predicated region
        $region49: #{_forward.1} parent=47 // pred_check
          %p281 = pneg %p38
        $region50: #{_forward.1} parent=47 // pred_check_branch
          %283 = sbr.rel (%p281) target = $region52
        $region51: #{_forward.1} parent=47 // pred_region
          %p284 = scmp.lt.s32.totalorder %s18, 1
          %s285 = scalar_select %p284, %s18, 1
          %s286 = smul.addr %s285, 7
          %s287 = smul.addr %s286, 8
          %s288 = scalar_lea.vmem %s0, %s287
        $region52: #{_forward.1} parent=47 // pred_fallthru
          _
      $region48: #{_forward.1} parent=5 // pred_fallthru
        _
      %p289 = scmp.le.s32.totalorder 1, %s18
      %p290 = scmp.lt.s32.totalorder %s18, 3
      %p291 = pnand %p289, %p290
      %p292 = pneg %p291
      // Predicated region
      $region53: #{_forward.1} parent=5 // pred_check
        _
      $region54: #{_forward.1} parent=5 // pred_check_branch
        %294 = sbr.rel (%p291) target = $region56
      $region55: #{_forward.1} parent=5 // pred_region
        %s295 = ssub.s32 %s18, 1
        %p296 = scmp.lt.s32.totalorder %s23, 1
        %s297 = scalar_select %p296, %s23, 1
        %s298 = smul.addr %s297, 7
        %s299 = smul.addr %s298, 8
        %s300 = scalar_lea.vmem %s0, %s299
        %p301 = pneg %p44
        %p302 = pneg %p41
        %p303 = pneg %p65
        %p304 = pneg %p62
        %p305 = pneg %p86
        %p306 = pneg %p83
        %p307 = pneg %p107
        %p308 = pneg %p104
        %p309 = pneg %p128
        %p310 = pneg %p125
        %p311 = pneg %p149
        %p312 = pneg %p146
        %p313 = pneg %p170
        %p314 = pneg %p167
        %p315 = pneg %p191
        %p316 = pneg %p188
        %p317 = pneg %p212
        %p318 = pneg %p209
        %p319 = pneg %p238
        %p320 = pneg %p235
        %s321 = sand.u32 %s225, 1
        %s322 = scalar_lea.sflag [#allocation3], %s321
        %s323 = sand.u32 %s225, 1
        %s324 = smul.addr %s323, 56
        %s325 = scalar_lea.vmem [#allocation2], %s324
        %p326 = scmp.lt.s32.totalorder %s23, 1
        %s327 = scalar_select %p326, %s23, 1
        %s328 = smul.addr %s327, 7
        %s329 = smul.addr %s328, 8
        %s330 = scalar_lea.vmem %s0, %s329
        %v331 = vld [vmem:[%s7] sm:$0x1]
        %v332 = vld [vmem:[%s8] sm:$0x1]
        %v333 = vld [vmem:[%s330] sm:$0xff]
        %v334 = vld [vmem:[%s330 + $0x8] sm:$0xff]
        %v335 = vld [vmem:[%s330 + $0x10] sm:$0xff]
        %v336 = vld [vmem:[%s330 + $0x18] sm:$0xff]
        %v337 = vld [vmem:[%s330 + $0x20] sm:$0xff]
        %v338 = vld [vmem:[%s330 + $0x28] sm:$0xff]
        %v339 = vld [vmem:[%s330 + $0x30] sm:$0xff]
        %v340 = vld [vmem:[%s1] sm:$0xff]
        %v341 = vld [vmem:[%s1 + $0x8] sm:$0xff]
        %v342 = vld [vmem:[%s1 + $0x10] sm:$0xff]
        %v343 = vld [vmem:[%s1 + $0x18] sm:$0xff]
        %v344 = vld [vmem:[%s1 + $0x20] sm:$0xff]
        %v345 = vld [vmem:[%s1 + $0x28] sm:$0xff]
        %v346 = vld [vmem:[%s1 + $0x30] sm:$0xff]
        %v347 = vld [vmem:[%s1 + $0x38] sm:$0xff]
        %v348 = vld [vmem:[%s1 + $0x40] sm:$0xff]
        %v349 = vld [vmem:[%s1 + $0x48] sm:$0xff]
        %v350 = vld [vmem:[%s1 + $0x50] sm:$0xff]
        %v351 = vld [vmem:[%s1 + $0x58] sm:$0xff]
        %v352 = vld [vmem:[%s1 + $0x60] sm:$0xff]
        %v353 = vld [vmem:[%s1 + $0x68] sm:$0xff]
        %v354 = vld [vmem:[%s1 + $0x70] sm:$0xff]
        %v355 = vld [vmem:[%s1 + $0x78] sm:$0xff]
        %v356 = vld [vmem:[%s1 + $0x80] sm:$0xff]
        %v357 = vld [vmem:[%s1 + $0x88] sm:$0xff]
        %v358 = vld [vmem:[%s1 + $0x90] sm:$0xff]
        %v359 = vld [vmem:[%s1 + $0x98] sm:$0xff]
        %v360 = vld [vmem:[%s1 + $0xa0] sm:$0xff]
        %v361 = vld [vmem:[%s1 + $0xa8] sm:$0xff]
        %v362 = vld [vmem:[%s1 + $0xb0] sm:$0xff]
        %v363 = vld [vmem:[%s1 + $0xb8] sm:$0xff]
        %v364 = vld [vmem:[%s1 + $0xc0] sm:$0xff]
        %v365 = vld [vmem:[%s1 + $0xc8] sm:$0xff]
        %v366 = vld [vmem:[%s1 + $0xd0] sm:$0xff]
        %v367 = vld [vmem:[%s1 + $0xd8] sm:$0xff]
        %v368 = vld [vmem:[%s1 + $0xe0] sm:$0xff]
        %v369 = vld [vmem:[%s1 + $0xe8] sm:$0xff]
        %v370 = vld [vmem:[%s1 + $0xf0] sm:$0xff]
        %v371 = vld [vmem:[%s1 + $0xf8] sm:$0xff]
        %v372 = vld [vmem:[%s1 + $0x100] sm:$0xff]
        %v373 = vld [vmem:[%s1 + $0x108] sm:$0xff]
        %v374 = vld [vmem:[%s1 + $0x110] sm:$0xff]
        %v375 = vld [vmem:[%s1 + $0x118] sm:$0xff]
        %v376 = vld [vmem:[%s1 + $0x120] sm:$0xff]
        %v377 = vld [vmem:[%s1 + $0x128] sm:$0xff]
        %v378 = vld [vmem:[%s1 + $0x130] sm:$0xff]
        %v379 = vld [vmem:[%s1 + $0x138] sm:$0xff]
        %v380 = vld [vmem:[%s1 + $0x140] sm:$0xff]
        %v381 = vld [vmem:[%s1 + $0x148] sm:$0xff]
        %v382 = vld [vmem:[%s1 + $0x150] sm:$0xff]
        %v383 = vld [vmem:[%s1 + $0x158] sm:$0xff]
        %v384 = vld [vmem:[%s1 + $0x160] sm:$0xff]
        %v385 = vld [vmem:[%s1 + $0x168] sm:$0xff]
        %v386 = vld [vmem:[%s1 + $0x170] sm:$0xff]
        %v387 = vld [vmem:[%s1 + $0x178] sm:$0xff]
        %v388 = vld [vmem:[%s1 + $0x180] sm:$0xff]
        %v389 = vld [vmem:[%s1 + $0x188] sm:$0xff]
        %v390 = vld [vmem:[%s1 + $0x190] sm:$0xff]
        %v391 = vld [vmem:[%s1 + $0x198] sm:$0xff]
        %v392 = vld [vmem:[%s1 + $0x1a0] sm:$0xff]
        %v393 = vld [vmem:[%s1 + $0x1a8] sm:$0xff]
        %v394 = vld [vmem:[%s1 + $0x1b0] sm:$0xff]
        %v395 = vld [vmem:[%s1 + $0x1b8] sm:$0xff]
        %v396 = vld [vmem:[%s1 + $0x1c0] sm:$0xff]
        %v397 = vld [vmem:[%s1 + $0x1c8] sm:$0xff]
        %v398 = vld [vmem:[%s1 + $0x1d0] sm:$0xff]
        %v399 = vld [vmem:[%s1 + $0x1d8] sm:$0xff]
        %v400 = vld [vmem:[%s1 + $0x1e0] sm:$0xff]
        %v401 = vld [vmem:[%s1 + $0x1e8] sm:$0xff]
        %v402 = vld [vmem:[%s1 + $0x1f0] sm:$0xff]
        %v403 = vld [vmem:[%s1 + $0x1f8] sm:$0xff]
        %v404 = vld [vmem:[%s1 + $0x200] sm:$0xff]
        %v405 = vld [vmem:[%s1 + $0x208] sm:$0xff]
        %v406 = vld [vmem:[%s1 + $0x210] sm:$0xff]
        %v407 = vld [vmem:[%s1 + $0x218] sm:$0xff]
        %v408 = vld [vmem:[%s1 + $0x220] sm:$0xff]
        %v409 = vld [vmem:[%s1 + $0x228] sm:$0xff]
        %v410 = vld [vmem:[%s1 + $0x230] sm:$0xff]
        %v411 = vld [vmem:[%s1 + $0x238] sm:$0xff]
        %v412 = vld [vmem:[%s1 + $0x240] sm:$0xff]
        %v413 = vld [vmem:[%s1 + $0x248] sm:$0xff]
        %v414 = vld [vmem:[%s1 + $0x250] sm:$0xff]
        %v415 = vld [vmem:[%s1 + $0x258] sm:$0xff]
        %v416 = vld [vmem:[%s1 + $0x260] sm:$0xff]
        %v417 = vld [vmem:[%s1 + $0x268] sm:$0xff]
        %v418 = vld [vmem:[%s1 + $0x270] sm:$0xff]
        %v419 = vld [vmem:[%s1 + $0x278] sm:$0xff]
        %v420 = vld [vmem:[%s1 + $0x280] sm:$0xff]
        %v421 = vld [vmem:[%s1 + $0x288] sm:$0xff]
        %v422 = vld [vmem:[%s1 + $0x290] sm:$0xff]
        %v423 = vld [vmem:[%s1 + $0x298] sm:$0xff]
        %v424 = vld [vmem:[%s1 + $0x2a0] sm:$0xff]
        %v425 = vld [vmem:[%s1 + $0x2a8] sm:$0xff]
        %v426 = vld [vmem:[%s1 + $0x2b0] sm:$0xff]
        %v427 = vld [vmem:[%s1 + $0x2b8] sm:$0xff]
        %v428 = vld [vmem:[%s1 + $0x2c0] sm:$0xff]
        %v429 = vld [vmem:[%s1 + $0x2c8] sm:$0xff]
        %v430 = vld [vmem:[%s1 + $0x2d0] sm:$0xff]
        %v431 = vld [vmem:[%s1 + $0x2d8] sm:$0xff]
        %v432 = vld [vmem:[%s1 + $0x2e0] sm:$0xff]
        %v433 = vld [vmem:[%s1 + $0x2e8] sm:$0xff]
        %v434 = vld [vmem:[%s1 + $0x2f0] sm:$0xff]
        %v435 = vld [vmem:[%s1 + $0x2f8] sm:$0xff]
        %v436 = vld [vmem:[%s1 + $0x300] sm:$0xff]
        %v437 = vld [vmem:[%s1 + $0x308] sm:$0xff]
        %v438 = vld [vmem:[%s2] sm:$0x1]
        %v440 = vlaneseq
        %v441 = vshrl.u32 %v440, 7
        %v442 = vsub.s32 0, %v441
        %v443 = vrot.slane %v438, %v442
        %vm445 = vcmask 130048
        %v447 = vsel %vm445, %v339, 0
        %449 = vmatprep.subr.mxu0 0.0
        %450 = vmatpush1.msra.mxu0 %v340
        %451 = vmatprep.subr.mxu0 0.0
        %452 = vmatpush1.msra.mxu0 %v341
        %453 = vmatprep.subr.mxu0 0.0
        %454 = vmatpush1.msra.mxu0 %v342
        %455 = vmatprep.subr.mxu0 0.0
        %456 = vmatpush1.msra.mxu0 %v343
        %457 = vmatprep.subr.mxu0 0.0
        %458 = vmatpush1.msra.mxu0 %v344
        %459 = vmatprep.subr.mxu0 0.0
        %460 = vmatpush1.msra.mxu0 %v345
        %461 = vmatprep.subr.mxu0 0.0
        %462 = vmatpush1.msra.mxu0 %v346
        %463 = vmatprep.subr.mxu0 0.0
        %464 = vmatpush1.msra.mxu0 %v347
        %465 = vmatprep.subr.mxu0 0.0
        %466 = vmatpush1.msra.mxu0 %v348
        %467 = vmatprep.subr.mxu0 0.0
        %468 = vmatpush1.msra.mxu0 %v349
        %469 = vmatprep.subr.mxu0 0.0
        %470 = vmatpush1.msra.mxu0 %v350
        %471 = vmatprep.subr.mxu0 0.0
        %472 = vmatpush1.msra.mxu0 %v351
        %473 = vmatprep.subr.mxu0 0.0
        %474 = vmatpush1.msra.mxu0 %v352
        %475 = vmatprep.subr.mxu0 0.0
        %476 = vmatpush1.msra.mxu0 %v353
        %477 = vmatprep.subr.mxu0 0.0
        %478 = vmatpush1.msra.mxu0 %v354
        %479 = vmatprep.subr.mxu0 0.0
        %480 = vmatpush1.msra.mxu0 %v355
        %481 = vmatprep.subr.mxu0 0.0
        %482 = vmatpush1.msra.mxu0 %v356
        %483 = vmatprep.subr.mxu0 0.0
        %484 = vmatpush1.msra.mxu0 %v357
        %485 = vmatprep.subr.mxu0 0.0
        %486 = vmatpush1.msra.mxu0 %v358
        %487 = vmatprep.subr.mxu0 0.0
        %488 = vmatpush1.msra.mxu0 %v359
        %489 = vmatprep.subr.mxu0 0.0
        %490 = vmatpush1.msra.mxu0 %v360
        %491 = vmatprep.subr.mxu0 0.0
        %492 = vmatpush1.msra.mxu0 %v361
        %493 = vmatprep.subr.mxu0 0.0
        %494 = vmatpush1.msra.mxu0 %v362
        %495 = vmatprep.subr.mxu0 0.0
        %496 = vmatpush1.msra.mxu0 %v363
        %497 = vmatprep.subr.mxu0 0.0
        %498 = vmatpush1.msra.mxu0 %v364
        %499 = vmatprep.subr.mxu0 0.0
        %500 = vmatpush1.msra.mxu0 %v365
        %501 = vmatprep.subr.mxu0 0.0
        %502 = vmatpush1.msra.mxu0 %v366
        %503 = vmatprep.subr.mxu0 0.0
        %504 = vmatpush1.msra.mxu0 %v367
        %505 = vmatprep.subr.mxu0 0.0
        %506 = vmatpush1.msra.mxu0 %v368
        %507 = vmatprep.subr.mxu0 0.0
        %508 = vmatpush1.msra.mxu0 %v369
        %509 = vmatprep.subr.mxu0 0.0
        %510 = vmatpush1.msra.mxu0 %v370
        %511 = vmatprep.subr.mxu0 0.0
        %512 = vmatpush1.msra.mxu0 %v371
        %513 = vmatprep.mubr.f32.mxu0 %v334
        %514 = vmatmul.mubr.f32.gmra.mrb[0].mxu0 %v333
        %v515 = vpop.f32.mrb[0].mxu0
        %v516 = vadd.f32 %v443, %v515
        %v517 = vpop.f32.mrb[0].mxu0
        %518 = vdwg.mxu0
        %519 = vmatprep.subr.mxu0 0.0
        %520 = vmatpush1.msra.mxu0 %v372
        %521 = vmatprep.subr.mxu0 0.0
        %522 = vmatpush1.msra.mxu0 %v373
        %523 = vmatprep.subr.mxu0 0.0
        %524 = vmatpush1.msra.mxu0 %v374
        %525 = vmatprep.subr.mxu0 0.0
        %526 = vmatpush1.msra.mxu0 %v375
        %527 = vmatprep.subr.mxu0 0.0
        %528 = vmatpush1.msra.mxu0 %v376
        %529 = vmatprep.subr.mxu0 0.0
        %530 = vmatpush1.msra.mxu0 %v377
        %531 = vmatprep.subr.mxu0 0.0
        %532 = vmatpush1.msra.mxu0 %v378
        %533 = vmatprep.subr.mxu0 0.0
        %534 = vmatpush1.msra.mxu0 %v379
        %535 = vmatprep.subr.mxu0 0.0
        %536 = vmatpush1.msra.mxu0 %v380
        %537 = vmatprep.subr.mxu0 0.0
        %538 = vmatpush1.msra.mxu0 %v381
        %539 = vmatprep.subr.mxu0 0.0
        %540 = vmatpush1.msra.mxu0 %v382
        %541 = vmatprep.subr.mxu0 0.0
        %542 = vmatpush1.msra.mxu0 %v383
        %543 = vmatprep.subr.mxu0 0.0
        %544 = vmatpush1.msra.mxu0 %v384
        %545 = vmatprep.subr.mxu0 0.0
        %546 = vmatpush1.msra.mxu0 %v385
        %547 = vmatprep.subr.mxu0 0.0
        %548 = vmatpush1.msra.mxu0 %v386
        %549 = vmatprep.subr.mxu0 0.0
        %550 = vmatpush1.msra.mxu0 %v387
        %551 = vmatprep.subr.mxu0 0.0
        %552 = vmatpush1.msra.mxu0 %v388
        %553 = vmatprep.subr.mxu0 0.0
        %554 = vmatpush1.msra.mxu0 %v389
        %555 = vmatprep.subr.mxu0 0.0
        %556 = vmatpush1.msra.mxu0 %v390
        %557 = vmatprep.subr.mxu0 0.0
        %558 = vmatpush1.msra.mxu0 %v391
        %559 = vmatprep.subr.mxu0 0.0
        %560 = vmatpush1.msra.mxu0 %v392
        %561 = vmatprep.subr.mxu0 0.0
        %562 = vmatpush1.msra.mxu0 %v393
        %563 = vmatprep.subr.mxu0 0.0
        %564 = vmatpush1.msra.mxu0 %v394
        %565 = vmatprep.subr.mxu0 0.0
        %566 = vmatpush1.msra.mxu0 %v395
        %567 = vmatprep.subr.mxu0 0.0
        %568 = vmatpush1.msra.mxu0 %v396
        %569 = vmatprep.subr.mxu0 0.0
        %570 = vmatpush1.msra.mxu0 %v397
        %571 = vmatprep.subr.mxu0 0.0
        %572 = vmatpush1.msra.mxu0 %v398
        %573 = vmatprep.subr.mxu0 0.0
        %574 = vmatpush1.msra.mxu0 %v399
        %575 = vmatprep.subr.mxu0 0.0
        %576 = vmatpush1.msra.mxu0 %v400
        %577 = vmatprep.subr.mxu0 0.0
        %578 = vmatpush1.msra.mxu0 %v401
        %579 = vmatprep.subr.mxu0 0.0
        %580 = vmatpush1.msra.mxu0 %v402
        %581 = vmatprep.subr.mxu0 0.0
        %582 = vmatpush1.msra.mxu0 %v403
        %583 = vmatprep.mubr.f32.mxu0 %v336
        %584 = vmatmul.mubr.f32.gmra.mrb[0].mxu0 %v335
        %v585 = vpop.f32.mrb[0].mxu0
        %v586 = vadd.f32 %v516, %v585
        %v587 = vpop.f32.mrb[0].mxu0
        %588 = vdwg.mxu0
        %589 = vmatprep.subr.mxu0 0.0
        %590 = vmatpush1.msra.mxu0 %v404
        %591 = vmatprep.subr.mxu0 0.0
        %592 = vmatpush1.msra.mxu0 %v405
        %593 = vmatprep.subr.mxu0 0.0
        %594 = vmatpush1.msra.mxu0 %v406
        %595 = vmatprep.subr.mxu0 0.0
        %596 = vmatpush1.msra.mxu0 %v407
        %597 = vmatprep.subr.mxu0 0.0
        %598 = vmatpush1.msra.mxu0 %v408
        %599 = vmatprep.subr.mxu0 0.0
        %600 = vmatpush1.msra.mxu0 %v409
        %601 = vmatprep.subr.mxu0 0.0
        %602 = vmatpush1.msra.mxu0 %v410
        %603 = vmatprep.subr.mxu0 0.0
        %604 = vmatpush1.msra.mxu0 %v411
        %605 = vmatprep.subr.mxu0 0.0
        %606 = vmatpush1.msra.mxu0 %v412
        %607 = vmatprep.subr.mxu0 0.0
        %608 = vmatpush1.msra.mxu0 %v413
        %609 = vmatprep.subr.mxu0 0.0
        %610 = vmatpush1.msra.mxu0 %v414
        %611 = vmatprep.subr.mxu0 0.0
        %612 = vmatpush1.msra.mxu0 %v415
        %613 = vmatprep.subr.mxu0 0.0
        %614 = vmatpush1.msra.mxu0 %v416
        %615 = vmatprep.subr.mxu0 0.0
        %616 = vmatpush1.msra.mxu0 %v417
        %617 = vmatprep.subr.mxu0 0.0
        %618 = vmatpush1.msra.mxu0 %v418
        %619 = vmatprep.subr.mxu0 0.0
        %620 = vmatpush1.msra.mxu0 %v419
        %621 = vmatprep.subr.mxu0 0.0
        %622 = vmatpush1.msra.mxu0 %v420
        %623 = vmatprep.subr.mxu0 0.0
        %624 = vmatpush1.msra.mxu0 %v421
        %625 = vmatprep.subr.mxu0 0.0
        %626 = vmatpush1.msra.mxu0 %v422
        %627 = vmatprep.subr.mxu0 0.0
        %628 = vmatpush1.msra.mxu0 %v423
        %629 = vmatprep.subr.mxu0 0.0
        %630 = vmatpush1.msra.mxu0 %v424
        %631 = vmatprep.subr.mxu0 0.0
        %632 = vmatpush1.msra.mxu0 %v425
        %633 = vmatprep.subr.mxu0 0.0
        %634 = vmatpush1.msra.mxu0 %v426
        %635 = vmatprep.subr.mxu0 0.0
        %636 = vmatpush1.msra.mxu0 %v427
        %637 = vmatprep.subr.mxu0 0.0
        %638 = vmatpush1.msra.mxu0 %v428
        %639 = vmatprep.subr.mxu0 0.0
        %640 = vmatpush1.msra.mxu0 %v429
        %641 = vmatprep.subr.mxu0 0.0
        %642 = vmatpush1.msra.mxu0 %v430
        %643 = vmatprep.subr.mxu0 0.0
        %644 = vmatpush1.msra.mxu0 %v431
        %645 = vmatprep.subr.mxu0 0.0
        %646 = vmatpush1.msra.mxu0 %v432
        %647 = vmatprep.subr.mxu0 0.0
        %648 = vmatpush1.msra.mxu0 %v433
        %649 = vmatprep.subr.mxu0 0.0
        %650 = vmatpush1.msra.mxu0 %v434
        %651 = vmatprep.subr.mxu0 0.0
        %652 = vmatpush1.msra.mxu0 %v435
        %653 = vmatprep.mubr.f32.mxu0 %v338
        %654 = vmatmul.mubr.f32.gmra.mrb[0].mxu0 %v337
        %v655 = vpop.f32.mrb[0].mxu0
        %v656 = vadd.f32 %v586, %v655
        %v657 = vpop.f32.mrb[0].mxu0
        %658 = vdwg.mxu0
        %659 = vmatprep.subr.mxu0 0.0
        %660 = vmatpush1.msra.mxu0 %v436
        %661 = vmatprep.subr.mxu0 0.0
        %662 = vmatpush1.msra.mxu0 %v437
        %663 = vmatprep.subr.mxu0 0.0
        %664 = vmatpush1.msra.mxu0 0.0
        %665 = vmatprep.subr.mxu0 0.0
        %666 = vmatpush1.msra.mxu0 0.0
        %667 = vmatprep.subr.mxu0 0.0
        %668 = vmatpush1.msra.mxu0 0.0
        %669 = vmatprep.subr.mxu0 0.0
        %670 = vmatpush1.msra.mxu0 0.0
        %671 = vmatprep.subr.mxu0 0.0
        %672 = vmatpush1.msra.mxu0 0.0
        %673 = vmatprep.subr.mxu0 0.0
        %674 = vmatpush1.msra.mxu0 0.0
        %675 = vmatprep.subr.mxu0 0.0
        %676 = vmatpush1.msra.mxu0 0.0
        %677 = vmatprep.subr.mxu0 0.0
        %678 = vmatpush1.msra.mxu0 0.0
        %679 = vmatprep.subr.mxu0 0.0
        %680 = vmatpush1.msra.mxu0 0.0
        %681 = vmatprep.subr.mxu0 0.0
        %682 = vmatpush1.msra.mxu0 0.0
        %683 = vmatprep.subr.mxu0 0.0
        %684 = vmatpush1.msra.mxu0 0.0
        %685 = vmatprep.subr.mxu0 0.0
        %686 = vmatpush1.msra.mxu0 0.0
        %687 = vmatprep.subr.mxu0 0.0
        %688 = vmatpush1.msra.mxu0 0.0
        %689 = vmatprep.subr.mxu0 0.0
        %690 = vmatpush1.msra.mxu0 0.0
        %691 = vmatprep.subr.mxu0 0.0
        %692 = vmatpush1.msra.mxu0 0.0
        %693 = vmatprep.subr.mxu0 0.0
        %694 = vmatpush1.msra.mxu0 0.0
        %695 = vmatprep.subr.mxu0 0.0
        %696 = vmatpush1.msra.mxu0 0.0
        %697 = vmatprep.subr.mxu0 0.0
        %698 = vmatpush1.msra.mxu0 0.0
        %699 = vmatprep.subr.mxu0 0.0
        %700 = vmatpush1.msra.mxu0 0.0
        %701 = vmatprep.subr.mxu0 0.0
        %702 = vmatpush1.msra.mxu0 0.0
        %703 = vmatprep.subr.mxu0 0.0
        %704 = vmatpush1.msra.mxu0 0.0
        %705 = vmatprep.subr.mxu0 0.0
        %706 = vmatpush1.msra.mxu0 0.0
        %707 = vmatprep.subr.mxu0 0.0
        %708 = vmatpush1.msra.mxu0 0.0
        %709 = vmatprep.subr.mxu0 0.0
        %710 = vmatpush1.msra.mxu0 0.0
        %711 = vmatprep.subr.mxu0 0.0
        %712 = vmatpush1.msra.mxu0 0.0
        %713 = vmatprep.subr.mxu0 0.0
        %714 = vmatpush1.msra.mxu0 0.0
        %715 = vmatprep.subr.mxu0 0.0
        %716 = vmatpush1.msra.mxu0 0.0
        %717 = vmatprep.subr.mxu0 0.0
        %718 = vmatpush1.msra.mxu0 0.0
        %719 = vmatprep.subr.mxu0 0.0
        %720 = vmatpush1.msra.mxu0 0.0
        %721 = vmatprep.subr.mxu0 0.0
        %722 = vmatpush1.msra.mxu0 0.0
        %723 = vmatprep.mubr.f32.mxu0 0.0
        %724 = vmatmul.mubr.f32.gmra.mrb[0].mxu0 %v447
        %v725 = vpop.f32.mrb[0].mxu0
        %v726 = vadd.f32 %v656, %v725
        %v727 = vpop.f32.mrb[0].mxu0
        %728 = vdwg.mxu0
        %vm729 = vcmp.gt.f32.partialorder %v726, 0.0
        %v730 = vmul.f32 %v726, 1.442695
        %v731 = vpow.pop %v730
        %v732 = vsub.f32 %v731, 1.0
        %v733 = vsel %vm729, %v726, %v732
        %734 = vadd.xlane.f32.xlu0 %v733
        %v735 = vpop.xlane.xlu0 %734
        %v736 = vmul.f32 %v735, 0.0078125
        %v737 = vsub.f32 %v733, %v736
        %v738 = vmul.f32 %v737, %v737
        %739 = vadd.xlane.f32.xlu0 %v738
        %v740 = vpop.xlane.xlu0 %739
        %v741 = vmul.f32 %v740, 0.0078125
        %v742 = vadd.f32 %v741, 1e-05
        %v743 = vrsqrt.pop %v742
        %v744 = vmul.f32 %v737, %v743
        %v746 = vlaneseq
        %v747 = vshrl.u32 %v746, 7
        %v748 = vsub.s32 0, %v747
        %v749 = vrot.slane %v331, %v748
        %v751 = vmul.f32 %v744, %v749
        %v753 = vlaneseq
        %v754 = vshrl.u32 %v753, 7
        %v755 = vsub.s32 0, %v754
        %v756 = vrot.slane %v332, %v755
        %v758 = vadd.f32 %v751, %v756
        %v759 = vld [vmem:[%s3] sm:$0xff]
        %v760 = vld [vmem:[%s3 + $0x8] sm:$0xff]
        %v761 = vld [vmem:[%s3 + $0x10] sm:$0xff]
        %v762 = vld [vmem:[%s3 + $0x18] sm:$0xff]
        %v763 = vld [vmem:[%s3 + $0x20] sm:$0xff]
        %v764 = vld [vmem:[%s3 + $0x28] sm:$0xff]
        %v765 = vld [vmem:[%s3 + $0x30] sm:$0xff]
        %v766 = vld [vmem:[%s3 + $0x38] sm:$0xff]
        %v767 = vld [vmem:[%s3 + $0x40] sm:$0xff]
        %v768 = vld [vmem:[%s3 + $0x48] sm:$0xff]
        %v769 = vld [vmem:[%s3 + $0x50] sm:$0xff]
        %v770 = vld [vmem:[%s3 + $0x58] sm:$0xff]
        %v771 = vld [vmem:[%s3 + $0x60] sm:$0xff]
        %v772 = vld [vmem:[%s3 + $0x68] sm:$0xff]
        %v773 = vld [vmem:[%s3 + $0x70] sm:$0xff]
        %v774 = vld [vmem:[%s3 + $0x78] sm:$0xff]
        %v775 = vld [vmem:[%s4] sm:$0x1]
        %v777 = vlaneseq
        %v778 = vshrl.u32 %v777, 7
        %v779 = vsub.s32 0, %v778
        %v780 = vrot.slane %v775, %v779
        %782 = vmatprep.subr.mxu0 0.0
        %783 = vmatpush1.msra.mxu0 %v759
        %784 = vmatprep.subr.mxu0 0.0
        %785 = vmatpush1.msra.mxu0 %v760
        %786 = vmatprep.subr.mxu0 0.0
        %787 = vmatpush1.msra.mxu0 %v761
        %788 = vmatprep.subr.mxu0 0.0
        %789 = vmatpush1.msra.mxu0 %v762
        %790 = vmatprep.subr.mxu0 0.0
        %791 = vmatpush1.msra.mxu0 %v763
        %792 = vmatprep.subr.mxu0 0.0
        %793 = vmatpush1.msra.mxu0 %v764
        %794 = vmatprep.subr.mxu0 0.0
        %795 = vmatpush1.msra.mxu0 %v765
        %796 = vmatprep.subr.mxu0 0.0
        %797 = vmatpush1.msra.mxu0 %v766
        %798 = vmatprep.subr.mxu0 0.0
        %799 = vmatpush1.msra.mxu0 %v767
        %800 = vmatprep.subr.mxu0 0.0
        %801 = vmatpush1.msra.mxu0 %v768
        %802 = vmatprep.subr.mxu0 0.0
        %803 = vmatpush1.msra.mxu0 %v769
        %804 = vmatprep.subr.mxu0 0.0
        %805 = vmatpush1.msra.mxu0 %v770
        %806 = vmatprep.subr.mxu0 0.0
        %807 = vmatpush1.msra.mxu0 %v771
        %808 = vmatprep.subr.mxu0 0.0
        %809 = vmatpush1.msra.mxu0 %v772
        %810 = vmatprep.subr.mxu0 0.0
        %811 = vmatpush1.msra.mxu0 %v773
        %812 = vmatprep.subr.mxu0 0.0
        %813 = vmatpush1.msra.mxu0 %v774
        %814 = vmatprep.subr.mxu0 0.0
        %815 = vmatpush1.msra.mxu0 0.0
        %816 = vmatprep.subr.mxu0 0.0
        %817 = vmatpush1.msra.mxu0 0.0
        %818 = vmatprep.subr.mxu0 0.0
        %819 = vmatpush1.msra.mxu0 0.0
        %820 = vmatprep.subr.mxu0 0.0
        %821 = vmatpush1.msra.mxu0 0.0
        %822 = vmatprep.subr.mxu0 0.0
        %823 = vmatpush1.msra.mxu0 0.0
        %824 = vmatprep.subr.mxu0 0.0
        %825 = vmatpush1.msra.mxu0 0.0
        %826 = vmatprep.subr.mxu0 0.0
        %827 = vmatpush1.msra.mxu0 0.0
        %828 = vmatprep.subr.mxu0 0.0
        %829 = vmatpush1.msra.mxu0 0.0
        %830 = vmatprep.subr.mxu0 0.0
        %831 = vmatpush1.msra.mxu0 0.0
        %832 = vmatprep.subr.mxu0 0.0
        %833 = vmatpush1.msra.mxu0 0.0
        %834 = vmatprep.subr.mxu0 0.0
        %835 = vmatpush1.msra.mxu0 0.0
        %836 = vmatprep.subr.mxu0 0.0
        %837 = vmatpush1.msra.mxu0 0.0
        %838 = vmatprep.subr.mxu0 0.0
        %839 = vmatpush1.msra.mxu0 0.0
        %840 = vmatprep.subr.mxu0 0.0
        %841 = vmatpush1.msra.mxu0 0.0
        %842 = vmatprep.subr.mxu0 0.0
        %843 = vmatpush1.msra.mxu0 0.0
        %844 = vmatprep.subr.mxu0 0.0
        %845 = vmatpush1.msra.mxu0 0.0
        %846 = vmatprep.mubr.f32.mxu0 0.0
        %847 = vmatmul.mubr.f32.gmra.mrb[0].mxu0 %v758
        %v848 = vpop.f32.mrb[0].mxu0
        %v849 = vadd.f32 %v780, %v848
        %v850 = vpop.f32.mrb[0].mxu0
        %851 = vdwg.mxu0
        %vm852 = vcmp.gt.f32.partialorder %v849, 0.0
        %v853 = vmul.f32 %v849, 1.442695
        %v854 = vpow.pop %v853
        %v855 = vsub.f32 %v854, 1.0
        %v856 = vsel %vm852, %v849, %v855
        %857 = vadd.xlane.f32.xlu0 %v856
        %v858 = vpop.xlane.xlu0 %857
        %v859 = vmul.f32 %v858, 0.0078125
        %v860 = vsub.f32 %v856, %v859
        %v861 = vmul.f32 %v860, %v860
        %862 = vadd.xlane.f32.xlu0 %v861
        %v863 = vpop.xlane.xlu0 %862
        %v864 = vmul.f32 %v863, 0.0078125
        %v865 = vadd.f32 %v864, 1e-05
        %v866 = vrsqrt.pop %v865
        %v867 = vmul.f32 %v860, %v866
        %v868 = vmul.f32 %v867, %v749
        %v869 = vadd.f32 %v868, %v756
        %s870 = scalar_lea.vmem %s3, 128
        %v871 = vld [vmem:[%s870] sm:$0xff]
        %v872 = vld [vmem:[%s870 + $0x8] sm:$0xff]
        %v873 = vld [vmem:[%s870 + $0x10] sm:$0xff]
        %v874 = vld [vmem:[%s870 + $0x18] sm:$0xff]
        %v875 = vld [vmem:[%s870 + $0x20] sm:$0xff]
        %v876 = vld [vmem:[%s870 + $0x28] sm:$0xff]
        %v877 = vld [vmem:[%s870 + $0x30] sm:$0xff]
        %v878 = vld [vmem:[%s870 + $0x38] sm:$0xff]
        %v879 = vld [vmem:[%s870 + $0x40] sm:$0xff]
        %v880 = vld [vmem:[%s870 + $0x48] sm:$0xff]
        %v881 = vld [vmem:[%s870 + $0x50] sm:$0xff]
        %v882 = vld [vmem:[%s870 + $0x58] sm:$0xff]
        %v883 = vld [vmem:[%s870 + $0x60] sm:$0xff]
        %v884 = vld [vmem:[%s870 + $0x68] sm:$0xff]
        %v885 = vld [vmem:[%s870 + $0x70] sm:$0xff]
        %v886 = vld [vmem:[%s870 + $0x78] sm:$0xff]
        %s887 = scalar_lea.vmem %s4, 1
        %v888 = vld [vmem:[%s887] sm:$0x1]
        %v890 = vlaneseq
        %v891 = vshrl.u32 %v890, 7
        %v892 = vsub.s32 0, %v891
        %v893 = vrot.slane %v888, %v892
        %895 = vmatprep.subr.mxu0 0.0
        %896 = vmatpush1.msra.mxu0 %v871
        %897 = vmatprep.subr.mxu0 0.0
        %898 = vmatpush1.msra.mxu0 %v872
        %899 = vmatprep.subr.mxu0 0.0
        %900 = vmatpush1.msra.mxu0 %v873
        %901 = vmatprep.subr.mxu0 0.0
        %902 = vmatpush1.msra.mxu0 %v874
        %903 = vmatprep.subr.mxu0 0.0
        %904 = vmatpush1.msra.mxu0 %v875
        %905 = vmatprep.subr.mxu0 0.0
        %906 = vmatpush1.msra.mxu0 %v876
        %907 = vmatprep.subr.mxu0 0.0
        %908 = vmatpush1.msra.mxu0 %v877
        %909 = vmatprep.subr.mxu0 0.0
        %910 = vmatpush1.msra.mxu0 %v878
        %911 = vmatprep.subr.mxu0 0.0
        %912 = vmatpush1.msra.mxu0 %v879
        %913 = vmatprep.subr.mxu0 0.0
        %914 = vmatpush1.msra.mxu0 %v880
        %915 = vmatprep.subr.mxu0 0.0
        %916 = vmatpush1.msra.mxu0 %v881
        %917 = vmatprep.subr.mxu0 0.0
        %918 = vmatpush1.msra.mxu0 %v882
        %919 = vmatprep.subr.mxu0 0.0
        %920 = vmatpush1.msra.mxu0 %v883
        %921 = vmatprep.subr.mxu0 0.0
        %922 = vmatpush1.msra.mxu0 %v884
        %923 = vmatprep.subr.mxu0 0.0
        %924 = vmatpush1.msra.mxu0 %v885
        %925 = vmatprep.subr.mxu0 0.0
        %926 = vmatpush1.msra.mxu0 %v886
        %927 = vmatprep.subr.mxu0 0.0
        %928 = vmatpush1.msra.mxu0 0.0
        %929 = vmatprep.subr.mxu0 0.0
        %930 = vmatpush1.msra.mxu0 0.0
        %931 = vmatprep.subr.mxu0 0.0
        %932 = vmatpush1.msra.mxu0 0.0
        %933 = vmatprep.subr.mxu0 0.0
        %934 = vmatpush1.msra.mxu0 0.0
        %935 = vmatprep.subr.mxu0 0.0
        %936 = vmatpush1.msra.mxu0 0.0
        %937 = vmatprep.subr.mxu0 0.0
        %938 = vmatpush1.msra.mxu0 0.0
        %939 = vmatprep.subr.mxu0 0.0
        %940 = vmatpush1.msra.mxu0 0.0
        %941 = vmatprep.subr.mxu0 0.0
        %942 = vmatpush1.msra.mxu0 0.0
        %943 = vmatprep.subr.mxu0 0.0
        %944 = vmatpush1.msra.mxu0 0.0
        %945 = vmatprep.subr.mxu0 0.0
        %946 = vmatpush1.msra.mxu0 0.0
        %947 = vmatprep.subr.mxu0 0.0
        %948 = vmatpush1.msra.mxu0 0.0
        %949 = vmatprep.subr.mxu0 0.0
        %950 = vmatpush1.msra.mxu0 0.0
        %951 = vmatprep.subr.mxu0 0.0
        %952 = vmatpush1.msra.mxu0 0.0
        %953 = vmatprep.subr.mxu0 0.0
        %954 = vmatpush1.msra.mxu0 0.0
        %955 = vmatprep.subr.mxu0 0.0
        %956 = vmatpush1.msra.mxu0 0.0
        %957 = vmatprep.subr.mxu0 0.0
        %958 = vmatpush1.msra.mxu0 0.0
        %959 = vmatprep.mubr.f32.mxu0 0.0
        %960 = vmatmul.mubr.f32.gmra.mrb[0].mxu0 %v869
        %v961 = vpop.f32.mrb[0].mxu0
        %v962 = vadd.f32 %v893, %v961
        %v963 = vpop.f32.mrb[0].mxu0
        %964 = vdwg.mxu0
        %vm965 = vcmp.gt.f32.partialorder %v962, 0.0
        %v966 = vmul.f32 %v962, 1.442695
        %v967 = vpow.pop %v966
        %v968 = vsub.f32 %v967, 1.0
        %v969 = vsel %vm965, %v962, %v968
        %970 = vadd.xlane.f32.xlu0 %v969
        %v971 = vpop.xlane.xlu0 %970
        %v972 = vmul.f32 %v971, 0.0078125
        %v973 = vsub.f32 %v969, %v972
        %v974 = vmul.f32 %v973, %v973
        %975 = vadd.xlane.f32.xlu0 %v974
        %v976 = vpop.xlane.xlu0 %975
        %v977 = vmul.f32 %v976, 0.0078125
        %v978 = vadd.f32 %v977, 1e-05
        %v979 = vrsqrt.pop %v978
        %v980 = vmul.f32 %v973, %v979
        %v981 = vmul.f32 %v980, %v749
        %v982 = vadd.f32 %v981, %v756
        %s983 = scalar_lea.vmem %s3, 256
        %v984 = vld [vmem:[%s983] sm:$0xff]
        %v985 = vld [vmem:[%s983 + $0x8] sm:$0xff]
        %v986 = vld [vmem:[%s983 + $0x10] sm:$0xff]
        %v987 = vld [vmem:[%s983 + $0x18] sm:$0xff]
        %v988 = vld [vmem:[%s983 + $0x20] sm:$0xff]
        %v989 = vld [vmem:[%s983 + $0x28] sm:$0xff]
        %v990 = vld [vmem:[%s983 + $0x30] sm:$0xff]
        %v991 = vld [vmem:[%s983 + $0x38] sm:$0xff]
        %v992 = vld [vmem:[%s983 + $0x40] sm:$0xff]
        %v993 = vld [vmem:[%s983 + $0x48] sm:$0xff]
        %v994 = vld [vmem:[%s983 + $0x50] sm:$0xff]
        %v995 = vld [vmem:[%s983 + $0x58] sm:$0xff]
        %v996 = vld [vmem:[%s983 + $0x60] sm:$0xff]
        %v997 = vld [vmem:[%s983 + $0x68] sm:$0xff]
        %v998 = vld [vmem:[%s983 + $0x70] sm:$0xff]
        %v999 = vld [vmem:[%s983 + $0x78] sm:$0xff]
        %s1000 = scalar_lea.vmem %s4, 2
        %v1001 = vld [vmem:[%s1000] sm:$0x1]
        %v1003 = vlaneseq
        %v1004 = vshrl.u32 %v1003, 7
        %v1005 = vsub.s32 0, %v1004
        %v1006 = vrot.slane %v1001, %v1005
        %1008 = vmatprep.subr.mxu0 0.0
        %1009 = vmatpush1.msra.mxu0 %v984
        %1010 = vmatprep.subr.mxu0 0.0
        %1011 = vmatpush1.msra.mxu0 %v985
        %1012 = vmatprep.subr.mxu0 0.0
        %1013 = vmatpush1.msra.mxu0 %v986
        %1014 = vmatprep.subr.mxu0 0.0
        %1015 = vmatpush1.msra.mxu0 %v987
        %1016 = vmatprep.subr.mxu0 0.0
        %1017 = vmatpush1.msra.mxu0 %v988
        %1018 = vmatprep.subr.mxu0 0.0
        %1019 = vmatpush1.msra.mxu0 %v989
        %1020 = vmatprep.subr.mxu0 0.0
        %1021 = vmatpush1.msra.mxu0 %v990
        %1022 = vmatprep.subr.mxu0 0.0
        %1023 = vmatpush1.msra.mxu0 %v991
        %1024 = vmatprep.subr.mxu0 0.0
        %1025 = vmatpush1.msra.mxu0 %v992
        %1026 = vmatprep.subr.mxu0 0.0
        %1027 = vmatpush1.msra.mxu0 %v993
        %1028 = vmatprep.subr.mxu0 0.0
        %1029 = vmatpush1.msra.mxu0 %v994
        %1030 = vmatprep.subr.mxu0 0.0
        %1031 = vmatpush1.msra.mxu0 %v995
        %1032 = vmatprep.subr.mxu0 0.0
        %1033 = vmatpush1.msra.mxu0 %v996
        %1034 = vmatprep.subr.mxu0 0.0
        %1035 = vmatpush1.msra.mxu0 %v997
        %1036 = vmatprep.subr.mxu0 0.0
        %1037 = vmatpush1.msra.mxu0 %v998
        %1038 = vmatprep.subr.mxu0 0.0
        %1039 = vmatpush1.msra.mxu0 %v999
        %1040 = vmatprep.subr.mxu0 0.0
        %1041 = vmatpush1.msra.mxu0 0.0
        %1042 = vmatprep.subr.mxu0 0.0
        %1043 = vmatpush1.msra.mxu0 0.0
        %1044 = vmatprep.subr.mxu0 0.0
        %1045 = vmatpush1.msra.mxu0 0.0
        %1046 = vmatprep.subr.mxu0 0.0
        %1047 = vmatpush1.msra.mxu0 0.0
        %1048 = vmatprep.subr.mxu0 0.0
        %1049 = vmatpush1.msra.mxu0 0.0
        %1050 = vmatprep.subr.mxu0 0.0
        %1051 = vmatpush1.msra.mxu0 0.0
        %1052 = vmatprep.subr.mxu0 0.0
        %1053 = vmatpush1.msra.mxu0 0.0
        %1054 = vmatprep.subr.mxu0 0.0
        %1055 = vmatpush1.msra.mxu0 0.0
        %1056 = vmatprep.subr.mxu0 0.0
        %1057 = vmatpush1.msra.mxu0 0.0
        %1058 = vmatprep.subr.mxu0 0.0
        %1059 = vmatpush1.msra.mxu0 0.0
        %1060 = vmatprep.subr.mxu0 0.0
        %1061 = vmatpush1.msra.mxu0 0.0
        %1062 = vmatprep.subr.mxu0 0.0
        %1063 = vmatpush1.msra.mxu0 0.0
        %1064 = vmatprep.subr.mxu0 0.0
        %1065 = vmatpush1.msra.mxu0 0.0
        %1066 = vmatprep.subr.mxu0 0.0
        %1067 = vmatpush1.msra.mxu0 0.0
        %1068 = vmatprep.subr.mxu0 0.0
        %1069 = vmatpush1.msra.mxu0 0.0
        %1070 = vmatprep.subr.mxu0 0.0
        %1071 = vmatpush1.msra.mxu0 0.0
        %1072 = vmatprep.mubr.f32.mxu0 0.0
        %1073 = vmatmul.mubr.f32.gmra.mrb[0].mxu0 %v982
        %v1074 = vpop.f32.mrb[0].mxu0
        %v1075 = vadd.f32 %v1006, %v1074
        %v1076 = vpop.f32.mrb[0].mxu0
        %1077 = vdwg.mxu0
        %vm1078 = vcmp.gt.f32.partialorder %v1075, 0.0
        %v1079 = vmul.f32 %v1075, 1.442695
        %v1080 = vpow.pop %v1079
        %v1081 = vsub.f32 %v1080, 1.0
        %v1082 = vsel %vm1078, %v1075, %v1081
        %1083 = vadd.xlane.f32.xlu0 %v1082
        %v1084 = vpop.xlane.xlu0 %1083
        %v1085 = vmul.f32 %v1084, 0.0078125
        %v1086 = vsub.f32 %v1082, %v1085
        %v1087 = vmul.f32 %v1086, %v1086
        %1088 = vadd.xlane.f32.xlu0 %v1087
        %v1089 = vpop.xlane.xlu0 %1088
        %v1090 = vmul.f32 %v1089, 0.0078125
        %v1091 = vadd.f32 %v1090, 1e-05
        %v1092 = vrsqrt.pop %v1091
        %v1093 = vmul.f32 %v1086, %v1092
        %v1094 = vmul.f32 %v1093, %v749
        %v1095 = vadd.f32 %v1094, %v756
        %s1096 = scalar_lea.vmem %s3, 384
        %v1097 = vld [vmem:[%s1096] sm:$0xff]
        %v1098 = vld [vmem:[%s1096 + $0x8] sm:$0xff]
        %v1099 = vld [vmem:[%s1096 + $0x10] sm:$0xff]
        %v1100 = vld [vmem:[%s1096 + $0x18] sm:$0xff]
        %v1101 = vld [vmem:[%s1096 + $0x20] sm:$0xff]
        %v1102 = vld [vmem:[%s1096 + $0x28] sm:$0xff]
        %v1103 = vld [vmem:[%s1096 + $0x30] sm:$0xff]
        %v1104 = vld [vmem:[%s1096 + $0x38] sm:$0xff]
        %v1105 = vld [vmem:[%s1096 + $0x40] sm:$0xff]
        %v1106 = vld [vmem:[%s1096 + $0x48] sm:$0xff]
        %v1107 = vld [vmem:[%s1096 + $0x50] sm:$0xff]
        %v1108 = vld [vmem:[%s1096 + $0x58] sm:$0xff]
        %v1109 = vld [vmem:[%s1096 + $0x60] sm:$0xff]
        %v1110 = vld [vmem:[%s1096 + $0x68] sm:$0xff]
        %v1111 = vld [vmem:[%s1096 + $0x70] sm:$0xff]
        %v1112 = vld [vmem:[%s1096 + $0x78] sm:$0xff]
        %s1113 = scalar_lea.vmem %s4, 3
        %v1114 = vld [vmem:[%s1113] sm:$0x1]
        %v1116 = vlaneseq
        %v1117 = vshrl.u32 %v1116, 7
        %v1118 = vsub.s32 0, %v1117
        %v1119 = vrot.slane %v1114, %v1118
        %1121 = vmatprep.subr.mxu0 0.0
        %1122 = vmatpush1.msra.mxu0 %v1097
        %1123 = vmatprep.subr.mxu0 0.0
        %1124 = vmatpush1.msra.mxu0 %v1098
        %1125 = vmatprep.subr.mxu0 0.0
        %1126 = vmatpush1.msra.mxu0 %v1099
        %1127 = vmatprep.subr.mxu0 0.0
        %1128 = vmatpush1.msra.mxu0 %v1100
        %1129 = vmatprep.subr.mxu0 0.0
        %1130 = vmatpush1.msra.mxu0 %v1101
        %1131 = vmatprep.subr.mxu0 0.0
        %1132 = vmatpush1.msra.mxu0 %v1102
        %1133 = vmatprep.subr.mxu0 0.0
        %1134 = vmatpush1.msra.mxu0 %v1103
        %1135 = vmatprep.subr.mxu0 0.0
        %1136 = vmatpush1.msra.mxu0 %v1104
        %1137 = vmatprep.subr.mxu0 0.0
        %1138 = vmatpush1.msra.mxu0 %v1105
        %1139 = vmatprep.subr.mxu0 0.0
        %1140 = vmatpush1.msra.mxu0 %v1106
        %1141 = vmatprep.subr.mxu0 0.0
        %1142 = vmatpush1.msra.mxu0 %v1107
        %1143 = vmatprep.subr.mxu0 0.0
        %1144 = vmatpush1.msra.mxu0 %v1108
        %1145 = vmatprep.subr.mxu0 0.0
        %1146 = vmatpush1.msra.mxu0 %v1109
        %1147 = vmatprep.subr.mxu0 0.0
        %1148 = vmatpush1.msra.mxu0 %v1110
        %1149 = vmatprep.subr.mxu0 0.0
        %1150 = vmatpush1.msra.mxu0 %v1111
        %1151 = vmatprep.subr.mxu0 0.0
        %1152 = vmatpush1.msra.mxu0 %v1112
        %1153 = vmatprep.subr.mxu0 0.0
        %1154 = vmatpush1.msra.mxu0 0.0
        %1155 = vmatprep.subr.mxu0 0.0
        %1156 = vmatpush1.msra.mxu0 0.0
        %1157 = vmatprep.subr.mxu0 0.0
        %1158 = vmatpush1.msra.mxu0 0.0
        %1159 = vmatprep.subr.mxu0 0.0
        %1160 = vmatpush1.msra.mxu0 0.0
        %1161 = vmatprep.subr.mxu0 0.0
        %1162 = vmatpush1.msra.mxu0 0.0
        %1163 = vmatprep.subr.mxu0 0.0
        %1164 = vmatpush1.msra.mxu0 0.0
        %1165 = vmatprep.subr.mxu0 0.0
        %1166 = vmatpush1.msra.mxu0 0.0
        %1167 = vmatprep.subr.mxu0 0.0
        %1168 = vmatpush1.msra.mxu0 0.0
        %1169 = vmatprep.subr.mxu0 0.0
        %1170 = vmatpush1.msra.mxu0 0.0
        %1171 = vmatprep.subr.mxu0 0.0
        %1172 = vmatpush1.msra.mxu0 0.0
        %1173 = vmatprep.subr.mxu0 0.0
        %1174 = vmatpush1.msra.mxu0 0.0
        %1175 = vmatprep.subr.mxu0 0.0
        %1176 = vmatpush1.msra.mxu0 0.0
        %1177 = vmatprep.subr.mxu0 0.0
        %1178 = vmatpush1.msra.mxu0 0.0
        %1179 = vmatprep.subr.mxu0 0.0
        %1180 = vmatpush1.msra.mxu0 0.0
        %1181 = vmatprep.subr.mxu0 0.0
        %1182 = vmatpush1.msra.mxu0 0.0
        %1183 = vmatprep.subr.mxu0 0.0
        %1184 = vmatpush1.msra.mxu0 0.0
        %1185 = vmatprep.mubr.f32.mxu0 0.0
        %1186 = vmatmul.mubr.f32.gmra.mrb[0].mxu0 %v1095
        %v1187 = vpop.f32.mrb[0].mxu0
        %v1188 = vadd.f32 %v1119, %v1187
        %v1189 = vpop.f32.mrb[0].mxu0
        %1190 = vdwg.mxu0
        %vm1191 = vcmp.gt.f32.partialorder %v1188, 0.0
        %v1192 = vmul.f32 %v1188, 1.442695
        %v1193 = vpow.pop %v1192
        %v1194 = vsub.f32 %v1193, 1.0
        %v1195 = vsel %vm1191, %v1188, %v1194
        %1196 = vadd.xlane.f32.xlu0 %v1195
        %v1197 = vpop.xlane.xlu0 %1196
        %v1198 = vmul.f32 %v1197, 0.0078125
        %v1199 = vsub.f32 %v1195, %v1198
        %v1200 = vmul.f32 %v1199, %v1199
        %1201 = vadd.xlane.f32.xlu0 %v1200
        %v1202 = vpop.xlane.xlu0 %1201
        %v1203 = vmul.f32 %v1202, 0.0078125
        %v1204 = vadd.f32 %v1203, 1e-05
        %v1205 = vrsqrt.pop %v1204
        %v1206 = vmul.f32 %v1199, %v1205
        %v1207 = vmul.f32 %v1206, %v749
        %v1208 = vadd.f32 %v1207, %v756
        %v1209 = vld [vmem:[%s5] sm:$0xff]
        %v1210 = vld [vmem:[%s5 + $0x8] sm:$0xff]
        %v1211 = vld [vmem:[%s5 + $0x10] sm:$0xff]
        %v1212 = vld [vmem:[%s5 + $0x18] sm:$0xff]
        %v1213 = vld [vmem:[%s5 + $0x20] sm:$0xff]
        %v1214 = vld [vmem:[%s5 + $0x28] sm:$0xff]
        %v1215 = vld [vmem:[%s5 + $0x30] sm:$0xff]
        %v1216 = vld [vmem:[%s5 + $0x38] sm:$0xff]
        %v1217 = vld [vmem:[%s5 + $0x40] sm:$0xff]
        %v1218 = vld [vmem:[%s5 + $0x48] sm:$0xff]
        %v1219 = vld [vmem:[%s5 + $0x50] sm:$0xff]
        %v1220 = vld [vmem:[%s5 + $0x58] sm:$0xff]
        %v1221 = vld [vmem:[%s5 + $0x60] sm:$0xff]
        %v1222 = vld [vmem:[%s5 + $0x68] sm:$0xff]
        %v1223 = vld [vmem:[%s5 + $0x70] sm:$0xff]
        %v1224 = vld [vmem:[%s5 + $0x78] sm:$0xff]
        %v1225 = vld [vmem:[%s5 + $0x80] sm:$0xff]
        %v1226 = vld [vmem:[%s5 + $0x88] sm:$0xff]
        %v1227 = vld [vmem:[%s5 + $0x90] sm:$0xff]
        %v1228 = vld [vmem:[%s5 + $0x98] sm:$0xff]
        %v1229 = vld [vmem:[%s5 + $0xa0] sm:$0xff]
        %v1230 = vld [vmem:[%s5 + $0xa8] sm:$0xff]
        %v1231 = vld [vmem:[%s5 + $0xb0] sm:$0xff]
        %v1232 = vld [vmem:[%s5 + $0xb8] sm:$0xff]
        %v1233 = vld [vmem:[%s5 + $0xc0] sm:$0xff]
        %v1234 = vld [vmem:[%s5 + $0xc8] sm:$0xff]
        %v1235 = vld [vmem:[%s5 + $0xd0] sm:$0xff]
        %v1236 = vld [vmem:[%s5 + $0xd8] sm:$0xff]
        %v1237 = vld [vmem:[%s5 + $0xe0] sm:$0xff]
        %v1238 = vld [vmem:[%s5 + $0xe8] sm:$0xff]
        %v1239 = vld [vmem:[%s5 + $0xf0] sm:$0xff]
        %v1240 = vld [vmem:[%s5 + $0xf8] sm:$0xff]
        %v1241 = vld [vmem:[%s5 + $0x100] sm:$0xff]
        %v1242 = vld [vmem:[%s5 + $0x108] sm:$0xff]
        %v1243 = vld [vmem:[%s5 + $0x110] sm:$0xff]
        %v1244 = vld [vmem:[%s5 + $0x118] sm:$0xff]
        %v1245 = vld [vmem:[%s5 + $0x120] sm:$0xff]
        %v1246 = vld [vmem:[%s5 + $0x128] sm:$0xff]
        %v1247 = vld [vmem:[%s5 + $0x130] sm:$0xff]
        %v1248 = vld [vmem:[%s5 + $0x138] sm:$0xff]
        %v1249 = vld [vmem:[%s5 + $0x140] sm:$0xff]
        %v1250 = vld [vmem:[%s5 + $0x148] sm:$0xff]
        %v1251 = vld [vmem:[%s5 + $0x150] sm:$0xff]
        %v1252 = vld [vmem:[%s5 + $0x158] sm:$0xff]
        %v1253 = vld [vmem:[%s5 + $0x160] sm:$0xff]
        %v1254 = vld [vmem:[%s5 + $0x168] sm:$0xff]
        %v1255 = vld [vmem:[%s5 + $0x170] sm:$0xff]
        %v1256 = vld [vmem:[%s5 + $0x178] sm:$0xff]
        %v1257 = vld [vmem:[%s5 + $0x180] sm:$0xff]
        %v1258 = vld [vmem:[%s5 + $0x188] sm:$0xff]
        %v1259 = vld [vmem:[%s5 + $0x190] sm:$0xff]
        %v1260 = vld [vmem:[%s5 + $0x198] sm:$0xff]
        %v1261 = vld [vmem:[%s5 + $0x1a0] sm:$0xff]
        %v1262 = vld [vmem:[%s5 + $0x1a8] sm:$0xff]
        %v1263 = vld [vmem:[%s5 + $0x1b0] sm:$0xff]
        %v1264 = vld [vmem:[%s5 + $0x1b8] sm:$0xff]
        %v1265 = vld [vmem:[%s5 + $0x1c0] sm:$0xff]
        %v1266 = vld [vmem:[%s5 + $0x1c8] sm:$0xff]
        %v1267 = vld [vmem:[%s5 + $0x1d0] sm:$0xff]
        %v1268 = vld [vmem:[%s5 + $0x1d8] sm:$0xff]
        %v1269 = vld [vmem:[%s5 + $0x1e0] sm:$0xff]
        %v1270 = vld [vmem:[%s5 + $0x1e8] sm:$0xff]
        %v1271 = vld [vmem:[%s5 + $0x1f0] sm:$0xff]
        %v1272 = vld [vmem:[%s5 + $0x1f8] sm:$0xff]
        %v1273 = vld [vmem:[%s5 + $0x200] sm:$0xff]
        %v1274 = vld [vmem:[%s5 + $0x208] sm:$0xff]
        %v1275 = vld [vmem:[%s5 + $0x210] sm:$0xff]
        %v1276 = vld [vmem:[%s5 + $0x218] sm:$0xff]
        %v1277 = vld [vmem:[%s5 + $0x220] sm:$0xff]
        %v1278 = vld [vmem:[%s5 + $0x228] sm:$0xff]
        %v1279 = vld [vmem:[%s5 + $0x230] sm:$0xff]
        %v1280 = vld [vmem:[%s5 + $0x238] sm:$0xff]
        %v1281 = vld [vmem:[%s5 + $0x240] sm:$0xff]
        %v1282 = vld [vmem:[%s5 + $0x248] sm:$0xff]
        %v1283 = vld [vmem:[%s5 + $0x250] sm:$0xff]
        %v1284 = vld [vmem:[%s5 + $0x258] sm:$0xff]
        %v1285 = vld [vmem:[%s5 + $0x260] sm:$0xff]
        %v1286 = vld [vmem:[%s5 + $0x268] sm:$0xff]
        %v1287 = vld [vmem:[%s5 + $0x270] sm:$0xff]
        %v1288 = vld [vmem:[%s5 + $0x278] sm:$0xff]
        %v1289 = vld [vmem:[%s5 + $0x280] sm:$0xff]
        %v1290 = vld [vmem:[%s5 + $0x288] sm:$0xff]
        %v1291 = vld [vmem:[%s5 + $0x290] sm:$0xff]
        %v1292 = vld [vmem:[%s5 + $0x298] sm:$0xff]
        %v1293 = vld [vmem:[%s5 + $0x2a0] sm:$0xff]
        %v1294 = vld [vmem:[%s5 + $0x2a8] sm:$0xff]
        %v1295 = vld [vmem:[%s5 + $0x2b0] sm:$0xff]
        %v1296 = vld [vmem:[%s5 + $0x2b8] sm:$0xff]
        %v1297 = vld [vmem:[%s5 + $0x2c0] sm:$0xff]
        %v1298 = vld [vmem:[%s5 + $0x2c8] sm:$0xff]
        %v1299 = vld [vmem:[%s5 + $0x2d0] sm:$0xff]
        %v1300 = vld [vmem:[%s5 + $0x2d8] sm:$0xff]
        %v1301 = vld [vmem:[%s5 + $0x2e0] sm:$0xff]
        %v1302 = vld [vmem:[%s5 + $0x2e8] sm:$0xff]
        %v1303 = vld [vmem:[%s5 + $0x2f0] sm:$0xff]
        %v1304 = vld [vmem:[%s5 + $0x2f8] sm:$0xff]
        %v1305 = vld [vmem:[%s5 + $0x300] sm:$0xff]
        %v1306 = vld [vmem:[%s5 + $0x308] sm:$0xff]
        %v1307 = vld [vmem:[%s5 + $0x310] sm:$0xff]
        %v1308 = vld [vmem:[%s5 + $0x318] sm:$0xff]
        %v1309 = vld [vmem:[%s5 + $0x320] sm:$0xff]
        %v1310 = vld [vmem:[%s5 + $0x328] sm:$0xff]
        %v1311 = vld [vmem:[%s5 + $0x330] sm:$0xff]
        %v1312 = vld [vmem:[%s5 + $0x338] sm:$0xff]
        %v1313 = vld [vmem:[%s5 + $0x340] sm:$0xff]
        %v1314 = vld [vmem:[%s5 + $0x348] sm:$0xff]
        %v1315 = vld [vmem:[%s5 + $0x350] sm:$0xff]
        %v1316 = vld [vmem:[%s5 + $0x358] sm:$0xff]
        %v1317 = vld [vmem:[%s5 + $0x360] sm:$0xff]
        %v1318 = vld [vmem:[%s5 + $0x368] sm:$0xff]
        %v1319 = vld [vmem:[%s5 + $0x370] sm:$0xff]
        %v1320 = vld [vmem:[%s5 + $0x378] sm:$0xff]
        %v1321 = vld [vmem:[%s6] sm:$0x7f]
        %v1323 = vlaneseq
        %v1324 = vshrl.u32 %v1323, 7
        %v1325 = vsub.s32 0, %v1324
        %v1326 = vrot.slane %v1321, %v1325
        %v1327 = vlaneseq
        %v1328 = vshrl.u32 %v1327, 7
        %v1329 = vsub.s32 1, %v1328
        %v1330 = vrot.slane %v1321, %v1329
        %v1331 = vlaneseq
        %v1332 = vshrl.u32 %v1331, 7
        %v1333 = vsub.s32 2, %v1332
        %v1334 = vrot.slane %v1321, %v1333
        %v1335 = vlaneseq
        %v1336 = vshrl.u32 %v1335, 7
        %v1337 = vsub.s32 3, %v1336
        %v1338 = vrot.slane %v1321, %v1337
        %v1339 = vlaneseq
        %v1340 = vshrl.u32 %v1339, 7
        %v1341 = vsub.s32 4, %v1340
        %v1342 = vrot.slane %v1321, %v1341
        %v1343 = vlaneseq
        %v1344 = vshrl.u32 %v1343, 7
        %v1345 = vsub.s32 5, %v1344
        %v1346 = vrot.slane %v1321, %v1345
        %v1347 = vlaneseq
        %v1348 = vshrl.u32 %v1347, 7
        %v1349 = vsub.s32 6, %v1348
        %v1350 = vrot.slane %v1321, %v1349
        %1358 = vmatprep.subr.mxu0 %v1210
        %1359 = vmatpush1.msra.mxu0 %v1209
        %1360 = vmatprep.subr.mxu0 %v1217
        %1361 = vmatpush1.msra.mxu0 %v1216
        %1362 = vmatprep.subr.mxu0 %v1224
        %1363 = vmatpush1.msra.mxu0 %v1223
        %1364 = vmatprep.subr.mxu0 %v1231
        %1365 = vmatpush1.msra.mxu0 %v1230
        %1366 = vmatprep.subr.mxu0 %v1238
        %1367 = vmatpush1.msra.mxu0 %v1237
        %1368 = vmatprep.subr.mxu0 %v1245
        %1369 = vmatpush1.msra.mxu0 %v1244
        %1370 = vmatprep.subr.mxu0 %v1252
        %1371 = vmatpush1.msra.mxu0 %v1251
        %1372 = vmatprep.subr.mxu0 %v1259
        %1373 = vmatpush1.msra.mxu0 %v1258
        %1374 = vmatprep.subr.mxu0 %v1266
        %1375 = vmatpush1.msra.mxu0 %v1265
        %1376 = vmatprep.subr.mxu0 %v1273
        %1377 = vmatpush1.msra.mxu0 %v1272
        %1378 = vmatprep.subr.mxu0 %v1280
        %1379 = vmatpush1.msra.mxu0 %v1279
        %1380 = vmatprep.subr.mxu0 %v1287
        %1381 = vmatpush1.msra.mxu0 %v1286
        %1382 = vmatprep.subr.mxu0 %v1294
        %1383 = vmatpush1.msra.mxu0 %v1293
        %1384 = vmatprep.subr.mxu0 %v1301
        %1385 = vmatpush1.msra.mxu0 %v1300
        %1386 = vmatprep.subr.mxu0 %v1308
        %1387 = vmatpush1.msra.mxu0 %v1307
        %1388 = vmatprep.subr.mxu0 %v1315
        %1389 = vmatpush1.msra.mxu0 %v1314
        %1390 = vmatprep.subr.mxu0 0.0
        %1391 = vmatpush1.msra.mxu0 0.0
        %1392 = vmatprep.subr.mxu0 0.0
        %1393 = vmatpush1.msra.mxu0 0.0
        %1394 = vmatprep.subr.mxu0 0.0
        %1395 = vmatpush1.msra.mxu0 0.0
        %1396 = vmatprep.subr.mxu0 0.0
        %1397 = vmatpush1.msra.mxu0 0.0
        %1398 = vmatprep.subr.mxu0 0.0
        %1399 = vmatpush1.msra.mxu0 0.0
        %1400 = vmatprep.subr.mxu0 0.0
        %1401 = vmatpush1.msra.mxu0 0.0
        %1402 = vmatprep.subr.mxu0 0.0
        %1403 = vmatpush1.msra.mxu0 0.0
        %1404 = vmatprep.subr.mxu0 0.0
        %1405 = vmatpush1.msra.mxu0 0.0
        %1406 = vmatprep.subr.mxu0 0.0
        %1407 = vmatpush1.msra.mxu0 0.0
        %1408 = vmatprep.subr.mxu0 0.0
        %1409 = vmatpush1.msra.mxu0 0.0
        %1410 = vmatprep.subr.mxu0 0.0
        %1411 = vmatpush1.msra.mxu0 0.0
        %1412 = vmatprep.subr.mxu0 0.0
        %1413 = vmatpush1.msra.mxu0 0.0
        %1414 = vmatprep.subr.mxu0 0.0
        %1415 = vmatpush1.msra.mxu0 0.0
        %1416 = vmatprep.subr.mxu0 0.0
        %1417 = vmatpush1.msra.mxu0 0.0
        %1418 = vmatprep.subr.mxu0 0.0
        %1419 = vmatpush1.msra.mxu0 0.0
        %1420 = vmatprep.subr.mxu0 0.0
        %1421 = vmatpush1.msra.mxu0 0.0
        %1422 = vmatprep.mubr.f32.mxu0 0.0
        %1423 = vmatmul.mubr.f32.gmra.mrb[0].mxu0 %v1208
        %v1424 = vpop.f32.mrb[0].mxu0
        %v1425 = vadd.f32 %v1326, %v1424
        %v1426 = vpop.f32.mrb[0].mxu0
        %v1427 = vadd.f32 %v1330, %v1426
        %1428 = vdwg.mxu0
        %1429 = vmatprep.subr.mxu0 %v1212
        %1430 = vmatpush1.msra.mxu0 %v1211
        %1431 = vmatprep.subr.mxu0 %v1219
        %1432 = vmatpush1.msra.mxu0 %v1218
        %1433 = vmatprep.subr.mxu0 %v1226
        %1434 = vmatpush1.msra.mxu0 %v1225
        %1435 = vmatprep.subr.mxu0 %v1233
        %1436 = vmatpush1.msra.mxu0 %v1232
        %1437 = vmatprep.subr.mxu0 %v1240
        %1438 = vmatpush1.msra.mxu0 %v1239
        %1439 = vmatprep.subr.mxu0 %v1247
        %1440 = vmatpush1.msra.mxu0 %v1246
        %1441 = vmatprep.subr.mxu0 %v1254
        %1442 = vmatpush1.msra.mxu0 %v1253
        %1443 = vmatprep.subr.mxu0 %v1261
        %1444 = vmatpush1.msra.mxu0 %v1260
        %1445 = vmatprep.subr.mxu0 %v1268
        %1446 = vmatpush1.msra.mxu0 %v1267
        %1447 = vmatprep.subr.mxu0 %v1275
        %1448 = vmatpush1.msra.mxu0 %v1274
        %1449 = vmatprep.subr.mxu0 %v1282
        %1450 = vmatpush1.msra.mxu0 %v1281
        %1451 = vmatprep.subr.mxu0 %v1289
        %1452 = vmatpush1.msra.mxu0 %v1288
        %1453 = vmatprep.subr.mxu0 %v1296
        %1454 = vmatpush1.msra.mxu0 %v1295
        %1455 = vmatprep.subr.mxu0 %v1303
        %1456 = vmatpush1.msra.mxu0 %v1302
        %1457 = vmatprep.subr.mxu0 %v1310
        %1458 = vmatpush1.msra.mxu0 %v1309
        %1459 = vmatprep.subr.mxu0 %v1317
        %1460 = vmatpush1.msra.mxu0 %v1316
        %1461 = vmatprep.subr.mxu0 0.0
        %1462 = vmatpush1.msra.mxu0 0.0
        %1463 = vmatprep.subr.mxu0 0.0
        %1464 = vmatpush1.msra.mxu0 0.0
        %1465 = vmatprep.subr.mxu0 0.0
        %1466 = vmatpush1.msra.mxu0 0.0
        %1467 = vmatprep.subr.mxu0 0.0
        %1468 = vmatpush1.msra.mxu0 0.0
        %1469 = vmatprep.subr.mxu0 0.0
        %1470 = vmatpush1.msra.mxu0 0.0
        %1471 = vmatprep.subr.mxu0 0.0
        %1472 = vmatpush1.msra.mxu0 0.0
        %1473 = vmatprep.subr.mxu0 0.0
        %1474 = vmatpush1.msra.mxu0 0.0
        %1475 = vmatprep.subr.mxu0 0.0
        %1476 = vmatpush1.msra.mxu0 0.0
        %1477 = vmatprep.subr.mxu0 0.0
        %1478 = vmatpush1.msra.mxu0 0.0
        %1479 = vmatprep.subr.mxu0 0.0
        %1480 = vmatpush1.msra.mxu0 0.0
        %1481 = vmatprep.subr.mxu0 0.0
        %1482 = vmatpush1.msra.mxu0 0.0
        %1483 = vmatprep.subr.mxu0 0.0
        %1484 = vmatpush1.msra.mxu0 0.0
        %1485 = vmatprep.subr.mxu0 0.0
        %1486 = vmatpush1.msra.mxu0 0.0
        %1487 = vmatprep.subr.mxu0 0.0
        %1488 = vmatpush1.msra.mxu0 0.0
        %1489 = vmatprep.subr.mxu0 0.0
        %1490 = vmatpush1.msra.mxu0 0.0
        %1491 = vmatprep.subr.mxu0 0.0
        %1492 = vmatpush1.msra.mxu0 0.0
        %1493 = vmatprep.mubr.f32.mxu0 0.0
        %1494 = vmatmul.mubr.f32.gmra.mrb[0].mxu0 %v1208
        %v1495 = vpop.f32.mrb[0].mxu0
        %v1496 = vadd.f32 %v1334, %v1495
        %v1497 = vpop.f32.mrb[0].mxu0
        %v1498 = vadd.f32 %v1338, %v1497
        %1499 = vdwg.mxu0
        %1500 = vmatprep.subr.mxu0 %v1214
        %1501 = vmatpush1.msra.mxu0 %v1213
        %1502 = vmatprep.subr.mxu0 %v1221
        %1503 = vmatpush1.msra.mxu0 %v1220
        %1504 = vmatprep.subr.mxu0 %v1228
        %1505 = vmatpush1.msra.mxu0 %v1227
        %1506 = vmatprep.subr.mxu0 %v1235
        %1507 = vmatpush1.msra.mxu0 %v1234
        %1508 = vmatprep.subr.mxu0 %v1242
        %1509 = vmatpush1.msra.mxu0 %v1241
        %1510 = vmatprep.subr.mxu0 %v1249
        %1511 = vmatpush1.msra.mxu0 %v1248
        %1512 = vmatprep.subr.mxu0 %v1256
        %1513 = vmatpush1.msra.mxu0 %v1255
        %1514 = vmatprep.subr.mxu0 %v1263
        %1515 = vmatpush1.msra.mxu0 %v1262
        %1516 = vmatprep.subr.mxu0 %v1270
        %1517 = vmatpush1.msra.mxu0 %v1269
        %1518 = vmatprep.subr.mxu0 %v1277
        %1519 = vmatpush1.msra.mxu0 %v1276
        %1520 = vmatprep.subr.mxu0 %v1284
        %1521 = vmatpush1.msra.mxu0 %v1283
        %1522 = vmatprep.subr.mxu0 %v1291
        %1523 = vmatpush1.msra.mxu0 %v1290
        %1524 = vmatprep.subr.mxu0 %v1298
        %1525 = vmatpush1.msra.mxu0 %v1297
        %1526 = vmatprep.subr.mxu0 %v1305
        %1527 = vmatpush1.msra.mxu0 %v1304
        %1528 = vmatprep.subr.mxu0 %v1312
        %1529 = vmatpush1.msra.mxu0 %v1311
        %1530 = vmatprep.subr.mxu0 %v1319
        %1531 = vmatpush1.msra.mxu0 %v1318
        %1532 = vmatprep.subr.mxu0 0.0
        %1533 = vmatpush1.msra.mxu0 0.0
        %1534 = vmatprep.subr.mxu0 0.0
        %1535 = vmatpush1.msra.mxu0 0.0
        %1536 = vmatprep.subr.mxu0 0.0
        %1537 = vmatpush1.msra.mxu0 0.0
        %1538 = vmatprep.subr.mxu0 0.0
        %1539 = vmatpush1.msra.mxu0 0.0
        %1540 = vmatprep.subr.mxu0 0.0
        %1541 = vmatpush1.msra.mxu0 0.0
        %1542 = vmatprep.subr.mxu0 0.0
        %1543 = vmatpush1.msra.mxu0 0.0
        %1544 = vmatprep.subr.mxu0 0.0
        %1545 = vmatpush1.msra.mxu0 0.0
        %1546 = vmatprep.subr.mxu0 0.0
        %1547 = vmatpush1.msra.mxu0 0.0
        %1548 = vmatprep.subr.mxu0 0.0
        %1549 = vmatpush1.msra.mxu0 0.0
        %1550 = vmatprep.subr.mxu0 0.0
        %1551 = vmatpush1.msra.mxu0 0.0
        %1552 = vmatprep.subr.mxu0 0.0
        %1553 = vmatpush1.msra.mxu0 0.0
        %1554 = vmatprep.subr.mxu0 0.0
        %1555 = vmatpush1.msra.mxu0 0.0
        %1556 = vmatprep.subr.mxu0 0.0
        %1557 = vmatpush1.msra.mxu0 0.0
        %1558 = vmatprep.subr.mxu0 0.0
        %1559 = vmatpush1.msra.mxu0 0.0
        %1560 = vmatprep.subr.mxu0 0.0
        %1561 = vmatpush1.msra.mxu0 0.0
        %1562 = vmatprep.subr.mxu0 0.0
        %1563 = vmatpush1.msra.mxu0 0.0
        %1564 = vmatprep.mubr.f32.mxu0 0.0
        %1565 = vmatmul.mubr.f32.gmra.mrb[0].mxu0 %v1208
        %v1566 = vpop.f32.mrb[0].mxu0
        %v1567 = vadd.f32 %v1342, %v1566
        %v1568 = vpop.f32.mrb[0].mxu0
        %v1569 = vadd.f32 %v1346, %v1568
        %1570 = vdwg.mxu0
        %1571 = vmatprep.subr.mxu0 0.0
        %1572 = vmatpush1.msra.mxu0 %v1215
        %1573 = vmatprep.subr.mxu0 0.0
        %1574 = vmatpush1.msra.mxu0 %v1222
        %1575 = vmatprep.subr.mxu0 0.0
        %1576 = vmatpush1.msra.mxu0 %v1229
        %1577 = vmatprep.subr.mxu0 0.0
        %1578 = vmatpush1.msra.mxu0 %v1236
        %1579 = vmatprep.subr.mxu0 0.0
        %1580 = vmatpush1.msra.mxu0 %v1243
        %1581 = vmatprep.subr.mxu0 0.0
        %1582 = vmatpush1.msra.mxu0 %v1250
        %1583 = vmatprep.subr.mxu0 0.0
        %1584 = vmatpush1.msra.mxu0 %v1257
        %1585 = vmatprep.subr.mxu0 0.0
        %1586 = vmatpush1.msra.mxu0 %v1264
        %1587 = vmatprep.subr.mxu0 0.0
        %1588 = vmatpush1.msra.mxu0 %v1271
        %1589 = vmatprep.subr.mxu0 0.0
        %1590 = vmatpush1.msra.mxu0 %v1278
        %1591 = vmatprep.subr.mxu0 0.0
        %1592 = vmatpush1.msra.mxu0 %v1285
        %1593 = vmatprep.subr.mxu0 0.0
        %1594 = vmatpush1.msra.mxu0 %v1292
        %1595 = vmatprep.subr.mxu0 0.0
        %1596 = vmatpush1.msra.mxu0 %v1299
        %1597 = vmatprep.subr.mxu0 0.0
        %1598 = vmatpush1.msra.mxu0 %v1306
        %1599 = vmatprep.subr.mxu0 0.0
        %1600 = vmatpush1.msra.mxu0 %v1313
        %1601 = vmatprep.subr.mxu0 0.0
        %1602 = vmatpush1.msra.mxu0 %v1320
        %1603 = vmatprep.subr.mxu0 0.0
        %1604 = vmatpush1.msra.mxu0 0.0
        %1605 = vmatprep.subr.mxu0 0.0
        %1606 = vmatpush1.msra.mxu0 0.0
        %1607 = vmatprep.subr.mxu0 0.0
        %1608 = vmatpush1.msra.mxu0 0.0
        %1609 = vmatprep.subr.mxu0 0.0
        %1610 = vmatpush1.msra.mxu0 0.0
        %1611 = vmatprep.subr.mxu0 0.0
        %1612 = vmatpush1.msra.mxu0 0.0
        %1613 = vmatprep.subr.mxu0 0.0
        %1614 = vmatpush1.msra.mxu0 0.0
        %1615 = vmatprep.subr.mxu0 0.0
        %1616 = vmatpush1.msra.mxu0 0.0
        %1617 = vmatprep.subr.mxu0 0.0
        %1618 = vmatpush1.msra.mxu0 0.0
        %1619 = vmatprep.subr.mxu0 0.0
        %1620 = vmatpush1.msra.mxu0 0.0
        %1621 = vmatprep.subr.mxu0 0.0
        %1622 = vmatpush1.msra.mxu0 0.0
        %1623 = vmatprep.subr.mxu0 0.0
        %1624 = vmatpush1.msra.mxu0 0.0
        %1625 = vmatprep.subr.mxu0 0.0
        %1626 = vmatpush1.msra.mxu0 0.0
        %1627 = vmatprep.subr.mxu0 0.0
        %1628 = vmatpush1.msra.mxu0 0.0
        %1629 = vmatprep.subr.mxu0 0.0
        %1630 = vmatpush1.msra.mxu0 0.0
        %1631 = vmatprep.subr.mxu0 0.0
        %1632 = vmatpush1.msra.mxu0 0.0
        %1633 = vmatprep.subr.mxu0 0.0
        %1634 = vmatpush1.msra.mxu0 0.0
        %1635 = vmatprep.mubr.f32.mxu0 0.0
        %1636 = vmatmul.mubr.f32.gmra.mrb[0].mxu0 %v1208
        %v1637 = vpop.f32.mrb[0].mxu0
        %v1638 = vadd.f32 %v1350, %v1637
        %v1639 = vpop.f32.mrb[0].mxu0
        %1640 = vdwg.mxu0
        %1641 = vst [vmem:[%s325] sm:$0xff] %v1425
        %1642 = vst [vmem:[%s325 + $0x8] sm:$0xff] %v1427
        %1643 = vst [vmem:[%s325 + $0x10] sm:$0xff] %v1496
        %1644 = vst [vmem:[%s325 + $0x18] sm:$0xff] %v1498
        %1645 = vst [vmem:[%s325 + $0x20] sm:$0xff] %v1567
        %1646 = vst [vmem:[%s325 + $0x28] sm:$0xff] %v1569
        %1647 = vst.msk [vmem:[%s325 + $0x30] sm:$0xff] %vm445, %v1638
        %s1648 = sand.u32 %s225, 1
        %s1649 = scalar_lea.sflag [#allocation3], %s1648
        %s1650 = sand.u32 %s225, 1
        %s1651 = smul.addr %s1650, 56
        %s1652 = scalar_lea.vmem [#allocation2], %s1651
        // Predicated region
        $region57: #{_forward.1} parent=55 // pred_check
          %p1653 = pneg %p235
        $region58: #{_forward.1} parent=55 // pred_check_branch
          %1655 = sbr.rel (%p1653) target = $region60
        $region59: #{_forward.1} parent=55 // pred_region
          %s1657 = ssub.s32 896, 896
          %1658 = vsyncadd %s1649, %s1657
          %s1659 = smul.addr %s23, 7
          %s1660 = smul.addr %s1659, 128
          %s1661 = scalar_lea.hbm %s9, %s1660
          %s1663 = sshll.u32 %s1652, 4
          %s1664 = int_to_ptr.vmem [resolvable:$true] %s1663
          %1666 = dma.vmem_to_hbm [thread:$0]  %s1664, 896, %s1661, %s1649
        $region60: #{_forward.1} parent=55 // pred_fallthru
          _
      $region56: #{_forward.1} parent=5 // pred_fallthru
        _
      %p1667 = scmp.le.s32.totalorder 2, %s18
      // Predicated region
      $region61: #{_forward.1} parent=5 // pred_check
        %p1668 = pneg %p1667
      $region62: #{_forward.1} parent=5 // pred_check_branch
        %1670 = sbr.rel (%p1668) target = $region64
      $region63: #{_forward.1} parent=5 // pred_region
        %s1671 = ssub.s32 %s18, 2
        // Predicated region
        $region65: #{_forward.1} parent=63 // pred_check
          %p1672 = pneg %p241
        $region66: #{_forward.1} parent=63 // pred_check_branch
          %1674 = sbr.rel (%p1672) target = $region68
        $region67: #{_forward.1} parent=63 // pred_region
          %s1675 = sand.u32 %s226, 1
          %s1676 = scalar_lea.sflag [#allocation3], %s1675
          %s1677 = sand.u32 %s226, 1
          %s1678 = smul.addr %s1677, 56
          %s1679 = scalar_lea.vmem [#allocation2], %s1678
          %1680 = dma.done %s1676, 896
        $region68: #{_forward.1} parent=63 // pred_fallthru
          _
      $region64: #{_forward.1} parent=5 // pred_fallthru
        _
    $region6: #{_forward.1} parent=1 // loop_footer
      %s22 = sadd.s32 1, %s18
    $region7: #{_forward.1} parent=1 // loop_footer_branch
      %17 = sbr.rel target = $region3
    $region8: #{_forward.1} parent=1 // loop_exit
      _
    %1681 = vsyncpa [#allocation3], 1
    %s1682 = scalar_lea.sflag [#allocation3], 1
    %1683 = vsyncpa %s1682, 1

</llo_original>
